<compile_context>
chip_gen: v6e
topology: v6e:2x2x1
jax: 0.10.0
libtpu: 0.0.40
codegen_flags: <defaults>
</compile_context>

<pallas_src>
import jax
import jax.numpy as jnp
from jax import lax
from jax.experimental import pallas as pl
from jax.experimental.pallas import tpu as pltpu

# ---- hyperparameters (module hparams, small synthetic sizes) ----
E = 32        # embedding_dim
H = 16        # hid_size
T = 5         # tagset_size
L = 8         # sequence length (max_len)
K = 5         # Conv1d kernel_size
LOUT = L - K + 1
LN_EPS = 1e-5
VOCAB = 100

B_BLK = 8     # sentences per grid step (full f32 sublane fill)
AUG_W = E + 2 # [sequence | e1 mask lane | e2 mask lane]
OUT_W = 128   # packed output lanes: [concat_e | conv_pool | logits | pad]

# ---- packed parameter buffer layout (rows of a (R_TOTAL, 128) f32 matrix) ----
R_WIH   = 0                   # LSTM W_ih (fwd|bwd gate-interleaved)     2E rows x 8H lanes
R_WHH   = R_WIH + 2 * E       # LSTM W_hh block-diagonal                 2H rows x 8H lanes
R_CONVA = R_WHH + 2 * H       # Conv1d kernels 0..3 lane-concatenated    E rows x 4E lanes
R_MIX   = R_CONVA + E         # dense_w | conv k4 | att_projection       E rows x 128 lanes
R_PROJ  = R_MIX + E           # projection | hidden2tag (split)          2E rows
R_VEC   = R_PROJ + 2 * E      # bias / vector rows
R_TOTAL = R_VEC + 8           # = 232 (multiple of 8)

MIX_DENSE = 0                 # dense weight        (E, E)         lanes 0:E
MIX_CONV4 = E                 # conv kernel 4       (E, E)         lanes E:2E
MIX_ATTPJ = 2 * E             # att_projection      (2H, 2E)       lanes 2E:4E
PROJ_TAG2 = 2 * E             # hidden2tag rows for att_out (2E,T) lanes 2E:2E+T
PROJ_TAG1 = 2 * E + 8         # hidden2tag rows for global_h (E,T) lanes 2E+8:2E+8+T


def sentence_re_kernel(aug_ref, params_ref, out_ref, hist_ref):
    f32 = jnp.float32
    Bb = B_BLK

    aug = aug_ref[...]                         # (L, Bb, E+2), time-major
    seq_tm = aug[:, :, 0:E]                    # (L, Bb, E)
    e1_tm = aug[:, :, E:E + 1]                 # (L, Bb, 1)
    e2_tm = aug[:, :, E + 1:E + 2]

    # ----- static slices of the packed parameter buffer -----
    wih1 = params_ref[R_WIH:R_WIH + E, :]                                   # rows for e1*seq
    wih2 = params_ref[R_WIH + E:R_WIH + 2 * E, :]                           # rows for e2*seq
    whh = params_ref[R_WHH:R_WHH + 2 * H, :]                                # block-diagonal
    conv_wa = params_ref[R_CONVA:R_CONVA + E, :]                            # conv kernels 0..3
    dense_w = params_ref[R_MIX:R_MIX + E, MIX_DENSE:MIX_DENSE + E]
    conv_wb = params_ref[R_MIX:R_MIX + E, MIX_CONV4:MIX_CONV4 + E]          # conv kernel 4
    attproj_w = params_ref[R_MIX:R_MIX + 2 * H, MIX_ATTPJ:MIX_ATTPJ + 2 * E]
    proj_w1 = params_ref[R_PROJ:R_PROJ + E, 0:2 * E]                        # rows for e1_avg
    proj_w2 = params_ref[R_PROJ + E:R_PROJ + 2 * E, 0:2 * E]                # rows for e2_avg
    tag_w2 = params_ref[R_PROJ:R_PROJ + 2 * E, PROJ_TAG2:PROJ_TAG2 + T]     # rows for att_out
    tag_w1 = params_ref[R_PROJ:R_PROJ + E, PROJ_TAG1:PROJ_TAG1 + T]         # rows for global_h

    vecs = params_ref[R_VEC:R_VEC + 8, :]
    dense_b = vecs[0:1, 0:E]
    conv_b = vecs[0:1, E:2 * E]
    tag_b = vecs[0:1, 2 * E:2 * E + T]
    proj_b = vecs[1:2, 0:2 * E]
    attproj_b = vecs[1:2, 2 * E:4 * E]
    att_w = vecs[2:3, 0:2 * H]
    lstm_b = vecs[3:4, 0:8 * H]                # interleaved b_ih + b_hh, both dirs
    ln_g = vecs[4:5, 0:3 * E]
    ln_b = vecs[5:6, 0:3 * E]

    # ---------- entity_average + dense + projection ----------
    m1_tm = e1_tm * seq_tm                     # masked sequences (reused by the LSTM)
    m2_tm = e2_tm * seq_tm
    sum1 = jnp.sum(m1_tm, axis=0)              # (Bb, E)
    sum2 = jnp.sum(m2_tm, axis=0)
    # count of nonzero mask entries (matches torch); max(.,1) only guards the
    # degenerate all-zero mask (incl. batch-padding rows) where torch would NaN.
    cnt1 = jnp.maximum(jnp.sum(jnp.where(e1_tm != 0.0, 1.0, 0.0), axis=0), 1.0)   # (Bb, 1)
    cnt2 = jnp.maximum(jnp.sum(jnp.where(e2_tm != 0.0, 1.0, 0.0), axis=0), 1.0)
    avg12 = jnp.concatenate([sum1 / cnt1, sum2 / cnt2], axis=0)            # (2Bb, E)
    ent_avg = jnp.tanh(jnp.dot(avg12, dense_w, preferred_element_type=f32) + dense_b)
    e1_avg = ent_avg[0:Bb]
    e2_avg = ent_avg[Bb:2 * Bb]
    concat_e = jnp.maximum(
        jnp.dot(e1_avg, proj_w1, preferred_element_type=f32)
        + jnp.dot(e2_avg, proj_w2, preferred_element_type=f32) + proj_b, 0.0)      # (Bb, 2E)

    # ---------- bidirectional LSTM ----------
    # Input projection hoisted out of the recurrence (time-major rows).
    x1 = m1_tm.reshape(L * Bb, E)
    x2 = m2_tm.reshape(L * Bb, E)
    gates_x = (jnp.dot(x1, wih1, preferred_element_type=f32)
               + jnp.dot(x2, wih2, preferred_element_type=f32) + lstm_b)   # (L*Bb, 8H=128)

    # Hoisted time-reverse + direction select (off the recurrence critical path):
    # gate columns are interleaved [i_f i_b | f_f f_b | g_f g_b | o_f o_b].
    gates_rev = jnp.concatenate(
        [gates_x[(L - 1 - s) * Bb:(L - s) * Bb, :] for s in range(L)], axis=0)
    lane = lax.broadcasted_iota(jnp.int32, (1, 8 * H), 1)
    is_fwd_lane = (lane % (2 * H)) < H
    is_g_lane = (lane >= 4 * H) & (lane < 6 * H)
    gxs = jnp.where(is_fwd_lane, gates_x, gates_rev)                       # (L*Bb, 128)

    h_cat = jnp.zeros((Bb, 2 * H), f32)        # [h_fwd | h_bwd]
    c_cat = jnp.zeros((Bb, 2 * H), f32)
    for s in range(L):                         # static unroll (L = 8)
        gates = gxs[s * Bb:(s + 1) * Bb, :] + jnp.dot(h_cat, whh,
                                                      preferred_element_type=f32)
        # one sigmoid + one tanh over the full 128-lane vreg, lane-select the g-gate
        act = jnp.where(is_g_lane, jnp.tanh(gates), jax.nn.sigmoid(gates))
        i_g = act[:, 0:2 * H]
        f_g = act[:, 2 * H:4 * H]
        g_g = act[:, 4 * H:6 * H]
        o_g = act[:, 6 * H:8 * H]
        c_cat = f_g * c_cat + i_g * g_g
        h_cat = o_g * jnp.tanh(c_cat)
        hist_ref[s * Bb:(s + 1) * Bb, :] = h_cat      # tiny VMEM history slab

    # ---------- attention (whole-slab ops over the LSTM history) ----------
    h_all = hist_ref[...]                                                   # (L*Bb, 2H)
    h_rev = jnp.concatenate(
        [h_all[(L - 1 - s) * Bb:(L - s) * Bb, :] for s in range(L)], axis=0)
    half = lax.broadcasted_iota(jnp.int32, (1, 2 * H), 1) < H
    rnn_flat = jnp.where(half, h_all, h_rev)           # time-aligned [h_fwd(t) | h_bwd(t)]
    rnn_tm = rnn_flat.reshape(L, Bb, 2 * H)

    scores = jnp.sum(jnp.tanh(rnn_flat) * att_w, axis=-1,
                     keepdims=True).reshape(L, Bb, 1)                       # (L, Bb, 1)
    s_max = jnp.max(scores, axis=0, keepdims=True)
    e_s = jnp.exp(scores - s_max)
    a = e_s / jnp.sum(e_s, axis=0, keepdims=True)                          # softmax over time
    att_vec = jnp.sum(a * rnn_tm, axis=0)                                  # (Bb, 2H)
    att_t = jnp.tanh(att_vec)
    att_out = jnp.tanh(jnp.dot(att_t, attproj_w, preferred_element_type=f32)
                       + attproj_b)                                         # (Bb, 2E)

    # ---------- Conv1d(k=5): fused into 2 MXU ops + shifted adds ----------
    seq_flat = seq_tm.reshape(L * Bb, E)
    p_a = jnp.dot(seq_flat, conv_wa, preferred_element_type=f32).reshape(L, Bb, 4 * E)
    p_b = jnp.dot(seq_flat, conv_wb, preferred_element_type=f32).reshape(L, Bb, E)
    conv = (p_a[0:LOUT, :, 0:E]
            + p_a[1:1 + LOUT, :, E:2 * E]
            + p_a[2:2 + LOUT, :, 2 * E:3 * E]
            + p_a[3:3 + LOUT, :, 3 * E:4 * E]
            + p_b[K - 1:K - 1 + LOUT, :, :])                               # (LOUT, Bb, E)
    conv = jnp.tanh(conv + conv_b)
    conv_pool = jnp.mean(conv, axis=0)                                      # (Bb, E)

    # ---------- global average pooling ----------
    global_h = jnp.mean(seq_tm, axis=0)                                     # (Bb, E)

    # ---------- LayerNorm(3E) over [global_h | att_out] with split weights ----------
    inv3e = 1.0 / (3 * E)
    mu = (jnp.sum(global_h, axis=-1, keepdims=True)
          + jnp.sum(att_out, axis=-1, keepdims=True)) * inv3e
    ex2 = (jnp.sum(global_h * global_h, axis=-1, keepdims=True)
           + jnp.sum(att_out * att_out, axis=-1, keepdims=True)) * inv3e
    inv_std = lax.rsqrt(ex2 - mu * mu + LN_EPS)
    n1 = (global_h - mu) * inv_std * ln_g[:, 0:E] + ln_b[:, 0:E]
    n2 = (att_out - mu) * inv_std * ln_g[:, E:3 * E] + ln_b[:, E:3 * E]
    # dropout before hidden2tag is identity at inference
    logits = (jnp.dot(n1, tag_w1, preferred_element_type=f32)
              + jnp.dot(n2, tag_w2, preferred_element_type=f32) + tag_b)    # (Bb, T)

    # ---------- single lane-dense packed output ----------
    pad = jnp.zeros((Bb, OUT_W - (3 * E + T)), f32)
    out_ref[...] = jnp.concatenate([concat_e, conv_pool, logits, pad], axis=-1)


def sentence_re_forward(sequence_output, e1_mask, e2_mask, packed_params):
    """sequence_output: (B, L, E); e1_mask/e2_mask: (B, L); packed_params: (R_TOTAL, 128)."""
    Bt = sequence_output.shape[0]
    nb = pl.cdiv(Bt, B_BLK)
    Bp = nb * B_BLK
    pad_b = Bp - Bt

    # time-major activation slab: [sequence | e1 | e2] (the only transpose, done once
    # in plain JAX; keeps every per-timestep slice inside the kernel contiguous).
    seq_tm = jnp.transpose(sequence_output.astype(jnp.float32), (1, 0, 2))   # (L, Bt, E)
    e1t = e1_mask.astype(jnp.float32).T[:, :, None]
    e2t = e2_mask.astype(jnp.float32).T[:, :, None]
    aug = jnp.concatenate([seq_tm, e1t, e2t], axis=-1)                       # (L, Bt, E+2)
    if pad_b:
        aug = jnp.pad(aug, ((0, 0), (0, pad_b), (0, 0)))

    out = pl.pallas_call(
        sentence_re_kernel,
        out_shape=jax.ShapeDtypeStruct((Bp, OUT_W), jnp.float32),
        grid_spec=pltpu.PrefetchScalarGridSpec(
            num_scalar_prefetch=0,
            grid=(nb,),
            in_specs=[
                pl.BlockSpec((L, B_BLK, AUG_W), lambda i: (0, i, 0)),
                pl.BlockSpec((R_TOTAL, 128), lambda i: (0, 0)),   # params stay resident
            ],
            out_specs=pl.BlockSpec((B_BLK, OUT_W), lambda i: (i, 0)),
            scratch_shapes=[pltpu.VMEM((L * B_BLK, 2 * H), jnp.float32)],
        ),
        compiler_params=pltpu.CompilerParams(
            dimension_semantics=("parallel",)),
    )(aug, packed_params)

    out = out[0:Bt]
    concat_e = out[:, 0:2 * E]
    conv_pool = out[:, 2 * E:3 * E]
    logits = out[:, 3 * E:3 * E + T]
    return logits, concat_e, conv_pool


def init_params(key):
    """Weights in kernel layout ((in, out) matrices, LSTM gate order [i f g o])."""
    ks = jax.random.split(key, 20)

    def rnd(k, shape, scale=0.05):
        return (scale * jax.random.normal(k, shape)).astype(jnp.float32)

    dense_w = rnd(ks[0], (E, E))
    dense_b = rnd(ks[1], (1, E))
    proj_w = rnd(ks[2], (2 * E, 2 * E))
    proj_b = rnd(ks[3], (1, 2 * E))
    att_w = rnd(ks[4], (1, 2 * H), 1.0)          # nn.Parameter(randn(2H, 1)) transposed
    wih_f = rnd(ks[5], (2 * E, 4 * H))
    whh_f = rnd(ks[6], (H, 4 * H))
    b_f = rnd(ks[7], (1, 4 * H))                 # b_ih + b_hh (forward)
    wih_b = rnd(ks[8], (2 * E, 4 * H))
    whh_b = rnd(ks[9], (H, 4 * H))
    b_b = rnd(ks[10], (1, 4 * H))                # b_ih + b_hh (backward)
    attproj_w = rnd(ks[11], (2 * H, 2 * E))
    attproj_b = rnd(ks[12], (1, 2 * E))
    conv_w = rnd(ks[13], (K, E, E))              # (kernel, in_ch, out_ch)
    conv_b = rnd(ks[14], (1, E))
    ln_g = jnp.ones((1, 3 * E), jnp.float32)
    ln_b = jnp.zeros((1, 3 * E), jnp.float32)
    tag_w = rnd(ks[15], (3 * E, T))
    tag_b = rnd(ks[16], (1, T))
    return [dense_w, dense_b, proj_w, proj_b, att_w,
            wih_f, whh_f, b_f, wih_b, whh_b, b_b,
            attproj_w, attproj_b, conv_w, conv_b,
            ln_g, ln_b, tag_w, tag_b]


def pack_params(p):
    """Pack all weights into one dense (R_TOTAL=232, 128) f32 buffer (single DMA)."""
    (dense_w, dense_b, proj_w, proj_b, att_w,
     wih_f, whh_f, b_f, wih_b, whh_b, b_b,
     attproj_w, attproj_b, conv_w, conv_b,
     ln_g, ln_b, tag_w, tag_b) = p

    def interleave_cols(wf, wb):   # (R, 4H), (R, 4H) -> (R, 8H) gate-interleaved cols
        r = wf.shape[0]
        return jnp.stack([wf.reshape(r, 4, H), wb.reshape(r, 4, H)], axis=2).reshape(r, 8 * H)

    wih_packed = interleave_cols(wih_f, wih_b)                               # (2E, 8H)
    zH = jnp.zeros((H, 4 * H), jnp.float32)
    whh_bd = jnp.concatenate([interleave_cols(whh_f, zH),                    # h_fwd rows
                              interleave_cols(zH, whh_b)], axis=0)           # h_bwd rows
    b_packed = interleave_cols(b_f, b_b)                                     # (1, 8H)

    P = jnp.zeros((R_TOTAL, 128), jnp.float32)
    P = P.at[R_WIH:R_WIH + 2 * E, 0:8 * H].set(wih_packed)
    P = P.at[R_WHH:R_WHH + 2 * H, 0:8 * H].set(whh_bd)
    conv_a = jnp.concatenate([conv_w[k] for k in range(K - 1)], axis=1)      # (E, 4E)
    P = P.at[R_CONVA:R_CONVA + E, 0:4 * E].set(conv_a)
    P = P.at[R_MIX:R_MIX + E, MIX_DENSE:MIX_DENSE + E].set(dense_w)
    P = P.at[R_MIX:R_MIX + E, MIX_CONV4:MIX_CONV4 + E].set(conv_w[K - 1])
    P = P.at[R_MIX:R_MIX + 2 * H, MIX_ATTPJ:MIX_ATTPJ + 2 * E].set(attproj_w)
    P = P.at[R_PROJ:R_PROJ + 2 * E, 0:2 * E].set(proj_w)
    P = P.at[R_PROJ:R_PROJ + 2 * E, PROJ_TAG2:PROJ_TAG2 + T].set(tag_w[E:3 * E])
    P = P.at[R_PROJ:R_PROJ + E, PROJ_TAG1:PROJ_TAG1 + T].set(tag_w[0:E])

    vec = jnp.zeros((8, 128), jnp.float32)
    vec = vec.at[0, 0:E].set(dense_b.reshape(-1))
    vec = vec.at[0, E:2 * E].set(conv_b.reshape(-1))
    vec = vec.at[0, 2 * E:2 * E + T].set(tag_b.reshape(-1))
    vec = vec.at[1, 0:2 * E].set(proj_b.reshape(-1))
    vec = vec.at[1, 2 * E:4 * E].set(attproj_b.reshape(-1))
    vec = vec.at[2, 0:2 * H].set(att_w.reshape(-1))
    vec = vec.at[3, 0:8 * H].set(b_packed.reshape(-1))
    vec = vec.at[4, 0:3 * E].set(ln_g.reshape(-1))
    vec = vec.at[5, 0:3 * E].set(ln_b.reshape(-1))
    P = P.at[R_VEC:R_VEC + 8, :].set(vec)
    return P


if __name__ == "__main__":
    key = jax.random.PRNGKey(0)
    k_tok, k_emb1, k_emb2, k_params = jax.random.split(key, 4)

    B = 2
    token_ids = jax.random.randint(k_tok, (B, L), 0, VOCAB)
    token_type_ids = jnp.zeros((B, L), jnp.int32)
    attention_mask = jnp.ones((B, L), jnp.float32)
    e1_mask = jnp.zeros((B, L), jnp.float32).at[:, 1:3].set(1.0)
    e2_mask = jnp.zeros((B, L), jnp.float32).at[:, 4:6].set(1.0)

    # TODO(synk): BertModel.from_pretrained has no Pallas equivalent; stand-in encoder is
    # a deterministic token + token-type embedding lookup masked by attention_mask (plain JAX glue).
    tok_emb = 0.1 * jax.random.normal(k_emb1, (VOCAB, E), jnp.float32)
    type_emb = 0.1 * jax.random.normal(k_emb2, (2, E), jnp.float32)
    sequence_output = (tok_emb[token_ids] + type_emb[token_type_ids]) * attention_mask[..., None]

    packed = pack_params(init_params(k_params))
    logits, concat_e, conv_pool = sentence_re_forward(sequence_output, e1_mask, e2_mask, packed)
    jax.block_until_ready(logits)

    assert logits.shape == (B, T)
    assert concat_e.shape == (B, 2 * E)
    assert conv_pool.shape == (B, E)
    assert bool(jnp.all(jnp.isfinite(logits)))
    assert bool(jnp.all(jnp.isfinite(concat_e)))
    assert bool(jnp.all(jnp.isfinite(conv_pool)))
    print("KERNEL_OK")
</pallas_src>

<mosaic_0001>
module attributes {stable_mosaic.version = 11 : i64} {
  func.func @sentence_re_kernel(%arg0: i32, %arg1: memref<8x8x34xf32, #tpu.memory_space<vmem>>, %arg2: memref<232x128xf32, #tpu.memory_space<vmem>>, %arg3: memref<8x128xf32, #tpu.memory_space<vmem>>, %arg4: memref<64x32xf32, #tpu.memory_space<vmem>>) attributes {dimension_semantics = [#tpu.dimension_semantics<parallel>], iteration_bounds = array<i64: 1>, scalar_prefetch = 0 : i64, scratch_operands = 1 : i64, tpu.core_type = #tpu.core_type<tc>, window_params = [{transform_indices = @transform_0, window_bounds = array<i64: 8, 8, 34>}, {pipeline_mode = #tpu.pipeline_mode<synchronous>, transform_indices = @transform_1, window_bounds = array<i64: 232, 128>}, {transform_indices = @transform_2, window_bounds = array<i64: 8, 128>}]} {
    %c0 = arith.constant 0 : index
    %c0_0 = arith.constant 0 : index
    %c0_1 = arith.constant 0 : index
    %0 = vector.load %arg1[%c0, %c0_0, %c0_1] : memref<8x8x34xf32, #tpu.memory_space<vmem>>, vector<8x8x34xf32>
    %1 = vector.extract_strided_slice %0 {offsets = [0, 0, 0], sizes = [8, 8, 32], strides = [1, 1, 1]} : vector<8x8x34xf32> to vector<8x8x32xf32>
    %2 = vector.extract_strided_slice %0 {offsets = [0, 0, 32], sizes = [8, 8, 1], strides = [1, 1, 1]} : vector<8x8x34xf32> to vector<8x8x1xf32>
    %3 = vector.extract_strided_slice %0 {offsets = [0, 0, 33], sizes = [8, 8, 1], strides = [1, 1, 1]} : vector<8x8x34xf32> to vector<8x8x1xf32>
    %c0_2 = arith.constant 0 : index
    %c0_3 = arith.constant 0 : index
    %4 = vector.load %arg2[%c0_2, %c0_3] : memref<232x128xf32, #tpu.memory_space<vmem>>, vector<32x128xf32>
    %c32 = arith.constant 32 : index
    %c0_4 = arith.constant 0 : index
    %5 = vector.load %arg2[%c32, %c0_4] : memref<232x128xf32, #tpu.memory_space<vmem>>, vector<32x128xf32>
    %c64 = arith.constant 64 : index
    %c0_5 = arith.constant 0 : index
    %6 = vector.load %arg2[%c64, %c0_5] : memref<232x128xf32, #tpu.memory_space<vmem>>, vector<32x128xf32>
    %c96 = arith.constant 96 : index
    %c0_6 = arith.constant 0 : index
    %7 = vector.load %arg2[%c96, %c0_6] : memref<232x128xf32, #tpu.memory_space<vmem>>, vector<32x128xf32>
    %c128 = arith.constant 128 : index
    %c0_7 = arith.constant 0 : index
    %8 = vector.load %arg2[%c128, %c0_7] : memref<232x128xf32, #tpu.memory_space<vmem>>, vector<32x32xf32>
    %c128_8 = arith.constant 128 : index
    %c32_9 = arith.constant 32 : index
    %9 = vector.load %arg2[%c128_8, %c32_9] : memref<232x128xf32, #tpu.memory_space<vmem>>, vector<32x32xf32>
    %c128_10 = arith.constant 128 : index
    %c64_11 = arith.constant 64 : index
    %10 = vector.load %arg2[%c128_10, %c64_11] : memref<232x128xf32, #tpu.memory_space<vmem>>, vector<32x64xf32>
    %c160 = arith.constant 160 : index
    %c0_12 = arith.constant 0 : index
    %11 = vector.load %arg2[%c160, %c0_12] : memref<232x128xf32, #tpu.memory_space<vmem>>, vector<32x64xf32>
    %c192 = arith.constant 192 : index
    %c0_13 = arith.constant 0 : index
    %12 = vector.load %arg2[%c192, %c0_13] : memref<232x128xf32, #tpu.memory_space<vmem>>, vector<32x64xf32>
    %c160_14 = arith.constant 160 : index
    %c64_15 = arith.constant 64 : index
    %13 = vector.load %arg2[%c160_14, %c64_15] : memref<232x128xf32, #tpu.memory_space<vmem>>, vector<64x5xf32>
    %c160_16 = arith.constant 160 : index
    %c72 = arith.constant 72 : index
    %14 = vector.load %arg2[%c160_16, %c72] : memref<232x128xf32, #tpu.memory_space<vmem>>, vector<32x5xf32>
    %c224 = arith.constant 224 : index
    %c0_17 = arith.constant 0 : index
    %15 = vector.load %arg2[%c224, %c0_17] : memref<232x128xf32, #tpu.memory_space<vmem>>, vector<8x128xf32>
    %16 = vector.extract_strided_slice %15 {offsets = [0, 0], sizes = [1, 32], strides = [1, 1]} : vector<8x128xf32> to vector<1x32xf32>
    %17 = vector.extract_strided_slice %15 {offsets = [0, 32], sizes = [1, 32], strides = [1, 1]} : vector<8x128xf32> to vector<1x32xf32>
    %18 = vector.extract_strided_slice %15 {offsets = [0, 64], sizes = [1, 5], strides = [1, 1]} : vector<8x128xf32> to vector<1x5xf32>
    %19 = vector.extract_strided_slice %15 {offsets = [1, 0], sizes = [1, 64], strides = [1, 1]} : vector<8x128xf32> to vector<1x64xf32>
    %20 = vector.extract_strided_slice %15 {offsets = [1, 64], sizes = [1, 64], strides = [1, 1]} : vector<8x128xf32> to vector<1x64xf32>
    %21 = vector.extract_strided_slice %15 {offsets = [2, 0], sizes = [1, 32], strides = [1, 1]} : vector<8x128xf32> to vector<1x32xf32>
    %22 = vector.extract_strided_slice %15 {offsets = [3, 0], sizes = [1, 128], strides = [1, 1]} : vector<8x128xf32> to vector<1x128xf32>
    %23 = vector.extract_strided_slice %15 {offsets = [4, 0], sizes = [1, 96], strides = [1, 1]} : vector<8x128xf32> to vector<1x96xf32>
    %24 = vector.extract_strided_slice %15 {offsets = [5, 0], sizes = [1, 96], strides = [1, 1]} : vector<8x128xf32> to vector<1x96xf32>
    %25 = vector.broadcast %2 : vector<8x8x1xf32> to vector<8x8x32xf32>
    %26 = arith.mulf %25, %1 : vector<8x8x32xf32>
    %27 = vector.broadcast %3 : vector<8x8x1xf32> to vector<8x8x32xf32>
    %28 = arith.mulf %27, %1 : vector<8x8x32xf32>
    %cst = arith.constant dense<0.000000e+00> : vector<8x32xf32>
    %29 = vector.multi_reduction <add>, %26, %cst [0] : vector<8x8x32xf32> to vector<8x32xf32>
    %cst_18 = arith.constant dense<0.000000e+00> : vector<8x32xf32>
    %30 = vector.multi_reduction <add>, %28, %cst_18 [0] : vector<8x8x32xf32> to vector<8x32xf32>
    %cst_19 = arith.constant 0.000000e+00 : f32
    %31 = vector.broadcast %cst_19 : f32 to vector<8x8x1xf32>
    %32 = arith.cmpf one, %2, %31 : vector<8x8x1xf32>
    %cst_20 = arith.constant 1.000000e+00 : f32
    %cst_21 = arith.constant 0.000000e+00 : f32
    %33 = vector.broadcast %cst_20 : f32 to vector<8x8x1xf32>
    %34 = vector.broadcast %cst_21 : f32 to vector<8x8x1xf32>
    %35 = arith.select %32, %33, %34 : vector<8x8x1xi1>, vector<8x8x1xf32>
    %cst_22 = arith.constant dense<0.000000e+00> : vector<8x1xf32>
    %36 = vector.multi_reduction <add>, %35, %cst_22 [0] : vector<8x8x1xf32> to vector<8x1xf32>
    %cst_23 = arith.constant 1.000000e+00 : f32
    %37 = vector.broadcast %cst_23 : f32 to vector<8x1xf32>
    %38 = arith.maximumf %36, %37 : vector<8x1xf32>
    %cst_24 = arith.constant 0.000000e+00 : f32
    %39 = vector.broadcast %cst_24 : f32 to vector<8x8x1xf32>
    %40 = arith.cmpf one, %3, %39 : vector<8x8x1xf32>
    %cst_25 = arith.constant 1.000000e+00 : f32
    %cst_26 = arith.constant 0.000000e+00 : f32
    %41 = vector.broadcast %cst_25 : f32 to vector<8x8x1xf32>
    %42 = vector.broadcast %cst_26 : f32 to vector<8x8x1xf32>
    %43 = arith.select %40, %41, %42 : vector<8x8x1xi1>, vector<8x8x1xf32>
    %cst_27 = arith.constant dense<0.000000e+00> : vector<8x1xf32>
    %44 = vector.multi_reduction <add>, %43, %cst_27 [0] : vector<8x8x1xf32> to vector<8x1xf32>
    %cst_28 = arith.constant 1.000000e+00 : f32
    %45 = vector.broadcast %cst_28 : f32 to vector<8x1xf32>
    %46 = arith.maximumf %44, %45 : vector<8x1xf32>
    %47 = vector.broadcast %38 : vector<8x1xf32> to vector<8x32xf32>
    %48 = arith.divf %29, %47 : vector<8x32xf32>
    %49 = vector.broadcast %46 : vector<8x1xf32> to vector<8x32xf32>
    %50 = arith.divf %30, %49 : vector<8x32xf32>
    %51 = tpu.concatenate %48, %50 in 0 : vector<8x32xf32>, vector<8x32xf32> -> vector<16x32xf32>
    %cst_29 = arith.constant dense<0.000000e+00> : vector<16x32xf32>
    %52 = tpu.matmul %51, %8, %cst_29 {dimension_numbers = #tpu.dot_dimension_numbers<[1], [0], [0], [1], [0, 0, 1, 1], [], []>} : vector<16x32xf32>, vector<32x32xf32>, vector<16x32xf32> -> vector<16x32xf32>
    %53 = vector.broadcast %16 : vector<1x32xf32> to vector<16x32xf32>
    %54 = arith.addf %52, %53 : vector<16x32xf32>
    %55 = math.tanh %54 : vector<16x32xf32>
    %56 = vector.extract_strided_slice %55 {offsets = [0, 0], sizes = [8, 32], strides = [1, 1]} : vector<16x32xf32> to vector<8x32xf32>
    %57 = vector.extract_strided_slice %55 {offsets = [8, 0], sizes = [8, 32], strides = [1, 1]} : vector<16x32xf32> to vector<8x32xf32>
    %cst_30 = arith.constant dense<0.000000e+00> : vector<8x64xf32>
    %58 = tpu.matmul %56, %11, %cst_30 {dimension_numbers = #tpu.dot_dimension_numbers<[1], [0], [0], [1], [0, 0, 1, 1], [], []>} : vector<8x32xf32>, vector<32x64xf32>, vector<8x64xf32> -> vector<8x64xf32>
    %cst_31 = arith.constant dense<0.000000e+00> : vector<8x64xf32>
    %59 = tpu.matmul %57, %12, %cst_31 {dimension_numbers = #tpu.dot_dimension_numbers<[1], [0], [0], [1], [0, 0, 1, 1], [], []>} : vector<8x32xf32>, vector<32x64xf32>, vector<8x64xf32> -> vector<8x64xf32>
    %60 = arith.addf %58, %59 : vector<8x64xf32>
    %61 = vector.broadcast %19 : vector<1x64xf32> to vector<8x64xf32>
    %62 = arith.addf %60, %61 : vector<8x64xf32>
    %cst_32 = arith.constant 0.000000e+00 : f32
    %63 = vector.broadcast %cst_32 : f32 to vector<8x64xf32>
    %64 = arith.maximumf %62, %63 : vector<8x64xf32>
    %65 = vector.shape_cast %26 : vector<8x8x32xf32> to vector<64x32xf32>
    %66 = vector.shape_cast %28 : vector<8x8x32xf32> to vector<64x32xf32>
    %cst_33 = arith.constant dense<0.000000e+00> : vector<64x128xf32>
    %67 = tpu.matmul %65, %4, %cst_33 {dimension_numbers = #tpu.dot_dimension_numbers<[1], [0], [0], [1], [0, 0, 1, 1], [], []>} : vector<64x32xf32>, vector<32x128xf32>, vector<64x128xf32> -> vector<64x128xf32>
    %cst_34 = arith.constant dense<0.000000e+00> : vector<64x128xf32>
    %68 = tpu.matmul %66, %5, %cst_34 {dimension_numbers = #tpu.dot_dimension_numbers<[1], [0], [0], [1], [0, 0, 1, 1], [], []>} : vector<64x32xf32>, vector<32x128xf32>, vector<64x128xf32> -> vector<64x128xf32>
    %69 = arith.addf %67, %68 : vector<64x128xf32>
    %70 = vector.broadcast %22 : vector<1x128xf32> to vector<64x128xf32>
    %71 = arith.addf %69, %70 : vector<64x128xf32>
    %72 = vector.extract_strided_slice %71 {offsets = [56, 0], sizes = [8, 128], strides = [1, 1]} : vector<64x128xf32> to vector<8x128xf32>
    %73 = vector.extract_strided_slice %71 {offsets = [48, 0], sizes = [8, 128], strides = [1, 1]} : vector<64x128xf32> to vector<8x128xf32>
    %74 = vector.extract_strided_slice %71 {offsets = [40, 0], sizes = [8, 128], strides = [1, 1]} : vector<64x128xf32> to vector<8x128xf32>
    %75 = vector.extract_strided_slice %71 {offsets = [32, 0], sizes = [8, 128], strides = [1, 1]} : vector<64x128xf32> to vector<8x128xf32>
    %76 = vector.extract_strided_slice %71 {offsets = [24, 0], sizes = [8, 128], strides = [1, 1]} : vector<64x128xf32> to vector<8x128xf32>
    %77 = vector.extract_strided_slice %71 {offsets = [16, 0], sizes = [8, 128], strides = [1, 1]} : vector<64x128xf32> to vector<8x128xf32>
    %78 = vector.extract_strided_slice %71 {offsets = [8, 0], sizes = [8, 128], strides = [1, 1]} : vector<64x128xf32> to vector<8x128xf32>
    %79 = vector.extract_strided_slice %71 {offsets = [0, 0], sizes = [8, 128], strides = [1, 1]} : vector<64x128xf32> to vector<8x128xf32>
    %80 = tpu.concatenate %72, %73, %74, %75, %76, %77, %78, %79 in 0 : vector<8x128xf32>, vector<8x128xf32>, vector<8x128xf32>, vector<8x128xf32>, vector<8x128xf32>, vector<8x128xf32>, vector<8x128xf32>, vector<8x128xf32> -> vector<64x128xf32>
    %81 = tpu.iota {dimensions = array<i32: 1>} : vector<1x128xi32>
    %c32_i32 = arith.constant 32 : i32
    %c0_i32 = arith.constant 0 : i32
    %82 = arith.cmpi eq, %c32_i32, %c0_i32 : i32
    %c1_i32 = arith.constant 1 : i32
    %83 = arith.select %82, %c1_i32, %c32_i32 : i32
    %84 = vector.broadcast %83 : i32 to vector<1x128xi32>
    %85 = arith.remsi %81, %84 : vector<1x128xi32>
    %c0_i32_35 = arith.constant 0 : i32
    %86 = vector.broadcast %c0_i32_35 : i32 to vector<1x128xi32>
    %87 = arith.cmpi ne, %85, %86 : vector<1x128xi32>
    %c0_i32_36 = arith.constant 0 : i32
    %88 = vector.broadcast %c0_i32_36 : i32 to vector<1x128xi32>
    %89 = arith.cmpi slt, %85, %88 : vector<1x128xi32>
    %c0_i32_37 = arith.constant 0 : i32
    %90 = arith.cmpi slt, %83, %c0_i32_37 : i32
    %91 = vector.broadcast %90 : i1 to vector<1x128xi1>
    %92 = vector.broadcast %91 : vector<1x128xi1> to vector<1x128xi1>
    %93 = arith.xori %89, %92 : vector<1x128xi1>
    %94 = arith.andi %93, %87 : vector<1x128xi1>
    %95 = vector.broadcast %83 : i32 to vector<1x128xi32>
    %96 = arith.addi %85, %95 : vector<1x128xi32>
    %97 = arith.select %94, %96, %85 : vector<1x128xi1>, vector<1x128xi32>
    %c16_i32 = arith.constant 16 : i32
    %98 = vector.broadcast %c16_i32 : i32 to vector<1x128xi32>
    %99 = arith.cmpi slt, %97, %98 : vector<1x128xi32>
    %c64_i32 = arith.constant 64 : i32
    %100 = vector.broadcast %c64_i32 : i32 to vector<1x128xi32>
    %101 = arith.cmpi sge, %81, %100 : vector<1x128xi32>
    %c96_i32 = arith.constant 96 : i32
    %102 = vector.broadcast %c96_i32 : i32 to vector<1x128xi32>
    %103 = arith.cmpi slt, %81, %102 : vector<1x128xi32>
    %104 = arith.andi %101, %103 : vector<1x128xi1>
    %105 = vector.shape_cast %99 : vector<1x128xi1> to vector<1x128xi1>
    %106 = vector.broadcast %105 : vector<1x128xi1> to vector<64x128xi1>
    %107 = arith.select %106, %71, %80 : vector<64x128xi1>, vector<64x128xf32>
    %cst_38 = arith.constant 0.000000e+00 : f32
    %108 = vector.broadcast %cst_38 : f32 to vector<8x32xf32>
    %cst_39 = arith.constant 0.000000e+00 : f32
    %109 = vector.broadcast %cst_39 : f32 to vector<8x32xf32>
    %110 = vector.extract_strided_slice %107 {offsets = [0, 0], sizes = [8, 128], strides = [1, 1]} : vector<64x128xf32> to vector<8x128xf32>
    %cst_40 = arith.constant dense<0.000000e+00> : vector<8x128xf32>
    %111 = tpu.matmul %108, %6, %cst_40 {dimension_numbers = #tpu.dot_dimension_numbers<[1], [0], [0], [1], [0, 0, 1, 1], [], []>} : vector<8x32xf32>, vector<32x128xf32>, vector<8x128xf32> -> vector<8x128xf32>
    %112 = arith.addf %110, %111 : vector<8x128xf32>
    %113 = math.tanh %112 : vector<8x128xf32>
    %114 = arith.negf %112 : vector<8x128xf32>
    %115 = math.exp %114 : vector<8x128xf32>
    %cst_41 = arith.constant 1.000000e+00 : f32
    %116 = vector.broadcast %cst_41 : f32 to vector<8x128xf32>
    %117 = arith.addf %116, %115 : vector<8x128xf32>
    %118 = arith.divf %116, %117 : vector<8x128xf32>
    %119 = vector.shape_cast %104 : vector<1x128xi1> to vector<1x128xi1>
    %120 = vector.broadcast %119 : vector<1x128xi1> to vector<8x128xi1>
    %121 = arith.select %120, %113, %118 : vector<8x128xi1>, vector<8x128xf32>
    %122 = vector.extract_strided_slice %121 {offsets = [0, 0], sizes = [8, 32], strides = [1, 1]} : vector<8x128xf32> to vector<8x32xf32>
    %123 = vector.extract_strided_slice %121 {offsets = [0, 32], sizes = [8, 32], strides = [1, 1]} : vector<8x128xf32> to vector<8x32xf32>
    %124 = vector.extract_strided_slice %121 {offsets = [0, 64], sizes = [8, 32], strides = [1, 1]} : vector<8x128xf32> to vector<8x32xf32>
    %125 = vector.extract_strided_slice %121 {offsets = [0, 96], sizes = [8, 32], strides = [1, 1]} : vector<8x128xf32> to vector<8x32xf32>
    %126 = arith.mulf %123, %109 : vector<8x32xf32>
    %127 = arith.mulf %122, %124 : vector<8x32xf32>
    %128 = arith.addf %126, %127 : vector<8x32xf32>
    %129 = math.tanh %128 : vector<8x32xf32>
    %130 = arith.mulf %125, %129 : vector<8x32xf32>
    %c0_42 = arith.constant 0 : index
    %c0_43 = arith.constant 0 : index
    %131 = vector.load %arg4[%c0_42, %c0_43] : memref<64x32xf32, #tpu.memory_space<vmem>>, vector<8x32xf32>
    tpu.vector_store %arg4[%c0_42, %c0_43], %130 {strides = array<i32>} : memref<64x32xf32, #tpu.memory_space<vmem>>, vector<8x32xf32>,
    %132 = vector.extract_strided_slice %107 {offsets = [8, 0], sizes = [8, 128], strides = [1, 1]} : vector<64x128xf32> to vector<8x128xf32>
    %cst_44 = arith.constant dense<0.000000e+00> : vector<8x128xf32>
    %133 = tpu.matmul %130, %6, %cst_44 {dimension_numbers = #tpu.dot_dimension_numbers<[1], [0], [0], [1], [0, 0, 1, 1], [], []>} : vector<8x32xf32>, vector<32x128xf32>, vector<8x128xf32> -> vector<8x128xf32>
    %134 = arith.addf %132, %133 : vector<8x128xf32>
    %135 = math.tanh %134 : vector<8x128xf32>
    %136 = arith.negf %134 : vector<8x128xf32>
    %137 = math.exp %136 : vector<8x128xf32>
    %cst_45 = arith.constant 1.000000e+00 : f32
    %138 = vector.broadcast %cst_45 : f32 to vector<8x128xf32>
    %139 = arith.addf %138, %137 : vector<8x128xf32>
    %140 = arith.divf %138, %139 : vector<8x128xf32>
    %141 = vector.shape_cast %104 : vector<1x128xi1> to vector<1x128xi1>
    %142 = vector.broadcast %141 : vector<1x128xi1> to vector<8x128xi1>
    %143 = arith.select %142, %135, %140 : vector<8x128xi1>, vector<8x128xf32>
    %144 = vector.extract_strided_slice %143 {offsets = [0, 0], sizes = [8, 32], strides = [1, 1]} : vector<8x128xf32> to vector<8x32xf32>
    %145 = vector.extract_strided_slice %143 {offsets = [0, 32], sizes = [8, 32], strides = [1, 1]} : vector<8x128xf32> to vector<8x32xf32>
    %146 = vector.extract_strided_slice %143 {offsets = [0, 64], sizes = [8, 32], strides = [1, 1]} : vector<8x128xf32> to vector<8x32xf32>
    %147 = vector.extract_strided_slice %143 {offsets = [0, 96], sizes = [8, 32], strides = [1, 1]} : vector<8x128xf32> to vector<8x32xf32>
    %148 = arith.mulf %145, %128 : vector<8x32xf32>
    %149 = arith.mulf %144, %146 : vector<8x32xf32>
    %150 = arith.addf %148, %149 : vector<8x32xf32>
    %151 = math.tanh %150 : vector<8x32xf32>
    %152 = arith.mulf %147, %151 : vector<8x32xf32>
    %c8 = arith.constant 8 : index
    %c0_46 = arith.constant 0 : index
    %153 = vector.load %arg4[%c8, %c0_46] : memref<64x32xf32, #tpu.memory_space<vmem>>, vector<8x32xf32>
    tpu.vector_store %arg4[%c8, %c0_46], %152 {strides = array<i32>} : memref<64x32xf32, #tpu.memory_space<vmem>>, vector<8x32xf32>,
    %154 = vector.extract_strided_slice %107 {offsets = [16, 0], sizes = [8, 128], strides = [1, 1]} : vector<64x128xf32> to vector<8x128xf32>
    %cst_47 = arith.constant dense<0.000000e+00> : vector<8x128xf32>
    %155 = tpu.matmul %152, %6, %cst_47 {dimension_numbers = #tpu.dot_dimension_numbers<[1], [0], [0], [1], [0, 0, 1, 1], [], []>} : vector<8x32xf32>, vector<32x128xf32>, vector<8x128xf32> -> vector<8x128xf32>
    %156 = arith.addf %154, %155 : vector<8x128xf32>
    %157 = math.tanh %156 : vector<8x128xf32>
    %158 = arith.negf %156 : vector<8x128xf32>
    %159 = math.exp %158 : vector<8x128xf32>
    %cst_48 = arith.constant 1.000000e+00 : f32
    %160 = vector.broadcast %cst_48 : f32 to vector<8x128xf32>
    %161 = arith.addf %160, %159 : vector<8x128xf32>
    %162 = arith.divf %160, %161 : vector<8x128xf32>
    %163 = vector.shape_cast %104 : vector<1x128xi1> to vector<1x128xi1>
    %164 = vector.broadcast %163 : vector<1x128xi1> to vector<8x128xi1>
    %165 = arith.select %164, %157, %162 : vector<8x128xi1>, vector<8x128xf32>
    %166 = vector.extract_strided_slice %165 {offsets = [0, 0], sizes = [8, 32], strides = [1, 1]} : vector<8x128xf32> to vector<8x32xf32>
    %167 = vector.extract_strided_slice %165 {offsets = [0, 32], sizes = [8, 32], strides = [1, 1]} : vector<8x128xf32> to vector<8x32xf32>
    %168 = vector.extract_strided_slice %165 {offsets = [0, 64], sizes = [8, 32], strides = [1, 1]} : vector<8x128xf32> to vector<8x32xf32>
    %169 = vector.extract_strided_slice %165 {offsets = [0, 96], sizes = [8, 32], strides = [1, 1]} : vector<8x128xf32> to vector<8x32xf32>
    %170 = arith.mulf %167, %150 : vector<8x32xf32>
    %171 = arith.mulf %166, %168 : vector<8x32xf32>
    %172 = arith.addf %170, %171 : vector<8x32xf32>
    %173 = math.tanh %172 : vector<8x32xf32>
    %174 = arith.mulf %169, %173 : vector<8x32xf32>
    %c16 = arith.constant 16 : index
    %c0_49 = arith.constant 0 : index
    %175 = vector.load %arg4[%c16, %c0_49] : memref<64x32xf32, #tpu.memory_space<vmem>>, vector<8x32xf32>
    tpu.vector_store %arg4[%c16, %c0_49], %174 {strides = array<i32>} : memref<64x32xf32, #tpu.memory_space<vmem>>, vector<8x32xf32>,
    %176 = vector.extract_strided_slice %107 {offsets = [24, 0], sizes = [8, 128], strides = [1, 1]} : vector<64x128xf32> to vector<8x128xf32>
    %cst_50 = arith.constant dense<0.000000e+00> : vector<8x128xf32>
    %177 = tpu.matmul %174, %6, %cst_50 {dimension_numbers = #tpu.dot_dimension_numbers<[1], [0], [0], [1], [0, 0, 1, 1], [], []>} : vector<8x32xf32>, vector<32x128xf32>, vector<8x128xf32> -> vector<8x128xf32>
    %178 = arith.addf %176, %177 : vector<8x128xf32>
    %179 = math.tanh %178 : vector<8x128xf32>
    %180 = arith.negf %178 : vector<8x128xf32>
    %181 = math.exp %180 : vector<8x128xf32>
    %cst_51 = arith.constant 1.000000e+00 : f32
    %182 = vector.broadcast %cst_51 : f32 to vector<8x128xf32>
    %183 = arith.addf %182, %181 : vector<8x128xf32>
    %184 = arith.divf %182, %183 : vector<8x128xf32>
    %185 = vector.shape_cast %104 : vector<1x128xi1> to vector<1x128xi1>
    %186 = vector.broadcast %185 : vector<1x128xi1> to vector<8x128xi1>
    %187 = arith.select %186, %179, %184 : vector<8x128xi1>, vector<8x128xf32>
    %188 = vector.extract_strided_slice %187 {offsets = [0, 0], sizes = [8, 32], strides = [1, 1]} : vector<8x128xf32> to vector<8x32xf32>
    %189 = vector.extract_strided_slice %187 {offsets = [0, 32], sizes = [8, 32], strides = [1, 1]} : vector<8x128xf32> to vector<8x32xf32>
    %190 = vector.extract_strided_slice %187 {offsets = [0, 64], sizes = [8, 32], strides = [1, 1]} : vector<8x128xf32> to vector<8x32xf32>
    %191 = vector.extract_strided_slice %187 {offsets = [0, 96], sizes = [8, 32], strides = [1, 1]} : vector<8x128xf32> to vector<8x32xf32>
    %192 = arith.mulf %189, %172 : vector<8x32xf32>
    %193 = arith.mulf %188, %190 : vector<8x32xf32>
    %194 = arith.addf %192, %193 : vector<8x32xf32>
    %195 = math.tanh %194 : vector<8x32xf32>
    %196 = arith.mulf %191, %195 : vector<8x32xf32>
    %c24 = arith.constant 24 : index
    %c0_52 = arith.constant 0 : index
    %197 = vector.load %arg4[%c24, %c0_52] : memref<64x32xf32, #tpu.memory_space<vmem>>, vector<8x32xf32>
    tpu.vector_store %arg4[%c24, %c0_52], %196 {strides = array<i32>} : memref<64x32xf32, #tpu.memory_space<vmem>>, vector<8x32xf32>,
    %198 = vector.extract_strided_slice %107 {offsets = [32, 0], sizes = [8, 128], strides = [1, 1]} : vector<64x128xf32> to vector<8x128xf32>
    %cst_53 = arith.constant dense<0.000000e+00> : vector<8x128xf32>
    %199 = tpu.matmul %196, %6, %cst_53 {dimension_numbers = #tpu.dot_dimension_numbers<[1], [0], [0], [1], [0, 0, 1, 1], [], []>} : vector<8x32xf32>, vector<32x128xf32>, vector<8x128xf32> -> vector<8x128xf32>
    %200 = arith.addf %198, %199 : vector<8x128xf32>
    %201 = math.tanh %200 : vector<8x128xf32>
    %202 = arith.negf %200 : vector<8x128xf32>
    %203 = math.exp %202 : vector<8x128xf32>
    %cst_54 = arith.constant 1.000000e+00 : f32
    %204 = vector.broadcast %cst_54 : f32 to vector<8x128xf32>
    %205 = arith.addf %204, %203 : vector<8x128xf32>
    %206 = arith.divf %204, %205 : vector<8x128xf32>
    %207 = vector.shape_cast %104 : vector<1x128xi1> to vector<1x128xi1>
    %208 = vector.broadcast %207 : vector<1x128xi1> to vector<8x128xi1>
    %209 = arith.select %208, %201, %206 : vector<8x128xi1>, vector<8x128xf32>
    %210 = vector.extract_strided_slice %209 {offsets = [0, 0], sizes = [8, 32], strides = [1, 1]} : vector<8x128xf32> to vector<8x32xf32>
    %211 = vector.extract_strided_slice %209 {offsets = [0, 32], sizes = [8, 32], strides = [1, 1]} : vector<8x128xf32> to vector<8x32xf32>
    %212 = vector.extract_strided_slice %209 {offsets = [0, 64], sizes = [8, 32], strides = [1, 1]} : vector<8x128xf32> to vector<8x32xf32>
    %213 = vector.extract_strided_slice %209 {offsets = [0, 96], sizes = [8, 32], strides = [1, 1]} : vector<8x128xf32> to vector<8x32xf32>
    %214 = arith.mulf %211, %194 : vector<8x32xf32>
    %215 = arith.mulf %210, %212 : vector<8x32xf32>
    %216 = arith.addf %214, %215 : vector<8x32xf32>
    %217 = math.tanh %216 : vector<8x32xf32>
    %218 = arith.mulf %213, %217 : vector<8x32xf32>
    %c32_55 = arith.constant 32 : index
    %c0_56 = arith.constant 0 : index
    %219 = vector.load %arg4[%c32_55, %c0_56] : memref<64x32xf32, #tpu.memory_space<vmem>>, vector<8x32xf32>
    tpu.vector_store %arg4[%c32_55, %c0_56], %218 {strides = array<i32>} : memref<64x32xf32, #tpu.memory_space<vmem>>, vector<8x32xf32>,
    %220 = vector.extract_strided_slice %107 {offsets = [40, 0], sizes = [8, 128], strides = [1, 1]} : vector<64x128xf32> to vector<8x128xf32>
    %cst_57 = arith.constant dense<0.000000e+00> : vector<8x128xf32>
    %221 = tpu.matmul %218, %6, %cst_57 {dimension_numbers = #tpu.dot_dimension_numbers<[1], [0], [0], [1], [0, 0, 1, 1], [], []>} : vector<8x32xf32>, vector<32x128xf32>, vector<8x128xf32> -> vector<8x128xf32>
    %222 = arith.addf %220, %221 : vector<8x128xf32>
    %223 = math.tanh %222 : vector<8x128xf32>
    %224 = arith.negf %222 : vector<8x128xf32>
    %225 = math.exp %224 : vector<8x128xf32>
    %cst_58 = arith.constant 1.000000e+00 : f32
    %226 = vector.broadcast %cst_58 : f32 to vector<8x128xf32>
    %227 = arith.addf %226, %225 : vector<8x128xf32>
    %228 = arith.divf %226, %227 : vector<8x128xf32>
    %229 = vector.shape_cast %104 : vector<1x128xi1> to vector<1x128xi1>
    %230 = vector.broadcast %229 : vector<1x128xi1> to vector<8x128xi1>
    %231 = arith.select %230, %223, %228 : vector<8x128xi1>, vector<8x128xf32>
    %232 = vector.extract_strided_slice %231 {offsets = [0, 0], sizes = [8, 32], strides = [1, 1]} : vector<8x128xf32> to vector<8x32xf32>
    %233 = vector.extract_strided_slice %231 {offsets = [0, 32], sizes = [8, 32], strides = [1, 1]} : vector<8x128xf32> to vector<8x32xf32>
    %234 = vector.extract_strided_slice %231 {offsets = [0, 64], sizes = [8, 32], strides = [1, 1]} : vector<8x128xf32> to vector<8x32xf32>
    %235 = vector.extract_strided_slice %231 {offsets = [0, 96], sizes = [8, 32], strides = [1, 1]} : vector<8x128xf32> to vector<8x32xf32>
    %236 = arith.mulf %233, %216 : vector<8x32xf32>
    %237 = arith.mulf %232, %234 : vector<8x32xf32>
    %238 = arith.addf %236, %237 : vector<8x32xf32>
    %239 = math.tanh %238 : vector<8x32xf32>
    %240 = arith.mulf %235, %239 : vector<8x32xf32>
    %c40 = arith.constant 40 : index
    %c0_59 = arith.constant 0 : index
    %241 = vector.load %arg4[%c40, %c0_59] : memref<64x32xf32, #tpu.memory_space<vmem>>, vector<8x32xf32>
    tpu.vector_store %arg4[%c40, %c0_59], %240 {strides = array<i32>} : memref<64x32xf32, #tpu.memory_space<vmem>>, vector<8x32xf32>,
    %242 = vector.extract_strided_slice %107 {offsets = [48, 0], sizes = [8, 128], strides = [1, 1]} : vector<64x128xf32> to vector<8x128xf32>
    %cst_60 = arith.constant dense<0.000000e+00> : vector<8x128xf32>
    %243 = tpu.matmul %240, %6, %cst_60 {dimension_numbers = #tpu.dot_dimension_numbers<[1], [0], [0], [1], [0, 0, 1, 1], [], []>} : vector<8x32xf32>, vector<32x128xf32>, vector<8x128xf32> -> vector<8x128xf32>
    %244 = arith.addf %242, %243 : vector<8x128xf32>
    %245 = math.tanh %244 : vector<8x128xf32>
    %246 = arith.negf %244 : vector<8x128xf32>
    %247 = math.exp %246 : vector<8x128xf32>
    %cst_61 = arith.constant 1.000000e+00 : f32
    %248 = vector.broadcast %cst_61 : f32 to vector<8x128xf32>
    %249 = arith.addf %248, %247 : vector<8x128xf32>
    %250 = arith.divf %248, %249 : vector<8x128xf32>
    %251 = vector.shape_cast %104 : vector<1x128xi1> to vector<1x128xi1>
    %252 = vector.broadcast %251 : vector<1x128xi1> to vector<8x128xi1>
    %253 = arith.select %252, %245, %250 : vector<8x128xi1>, vector<8x128xf32>
    %254 = vector.extract_strided_slice %253 {offsets = [0, 0], sizes = [8, 32], strides = [1, 1]} : vector<8x128xf32> to vector<8x32xf32>
    %255 = vector.extract_strided_slice %253 {offsets = [0, 32], sizes = [8, 32], strides = [1, 1]} : vector<8x128xf32> to vector<8x32xf32>
    %256 = vector.extract_strided_slice %253 {offsets = [0, 64], sizes = [8, 32], strides = [1, 1]} : vector<8x128xf32> to vector<8x32xf32>
    %257 = vector.extract_strided_slice %253 {offsets = [0, 96], sizes = [8, 32], strides = [1, 1]} : vector<8x128xf32> to vector<8x32xf32>
    %258 = arith.mulf %255, %238 : vector<8x32xf32>
    %259 = arith.mulf %254, %256 : vector<8x32xf32>
    %260 = arith.addf %258, %259 : vector<8x32xf32>
    %261 = math.tanh %260 : vector<8x32xf32>
    %262 = arith.mulf %257, %261 : vector<8x32xf32>
    %c48 = arith.constant 48 : index
    %c0_62 = arith.constant 0 : index
    %263 = vector.load %arg4[%c48, %c0_62] : memref<64x32xf32, #tpu.memory_space<vmem>>, vector<8x32xf32>
    tpu.vector_store %arg4[%c48, %c0_62], %262 {strides = array<i32>} : memref<64x32xf32, #tpu.memory_space<vmem>>, vector<8x32xf32>,
    %264 = vector.extract_strided_slice %107 {offsets = [56, 0], sizes = [8, 128], strides = [1, 1]} : vector<64x128xf32> to vector<8x128xf32>
    %cst_63 = arith.constant dense<0.000000e+00> : vector<8x128xf32>
    %265 = tpu.matmul %262, %6, %cst_63 {dimension_numbers = #tpu.dot_dimension_numbers<[1], [0], [0], [1], [0, 0, 1, 1], [], []>} : vector<8x32xf32>, vector<32x128xf32>, vector<8x128xf32> -> vector<8x128xf32>
    %266 = arith.addf %264, %265 : vector<8x128xf32>
    %267 = math.tanh %266 : vector<8x128xf32>
    %268 = arith.negf %266 : vector<8x128xf32>
    %269 = math.exp %268 : vector<8x128xf32>
    %cst_64 = arith.constant 1.000000e+00 : f32
    %270 = vector.broadcast %cst_64 : f32 to vector<8x128xf32>
    %271 = arith.addf %270, %269 : vector<8x128xf32>
    %272 = arith.divf %270, %271 : vector<8x128xf32>
    %273 = vector.shape_cast %104 : vector<1x128xi1> to vector<1x128xi1>
    %274 = vector.broadcast %273 : vector<1x128xi1> to vector<8x128xi1>
    %275 = arith.select %274, %267, %272 : vector<8x128xi1>, vector<8x128xf32>
    %276 = vector.extract_strided_slice %275 {offsets = [0, 0], sizes = [8, 32], strides = [1, 1]} : vector<8x128xf32> to vector<8x32xf32>
    %277 = vector.extract_strided_slice %275 {offsets = [0, 32], sizes = [8, 32], strides = [1, 1]} : vector<8x128xf32> to vector<8x32xf32>
    %278 = vector.extract_strided_slice %275 {offsets = [0, 64], sizes = [8, 32], strides = [1, 1]} : vector<8x128xf32> to vector<8x32xf32>
    %279 = vector.extract_strided_slice %275 {offsets = [0, 96], sizes = [8, 32], strides = [1, 1]} : vector<8x128xf32> to vector<8x32xf32>
    %280 = arith.mulf %277, %260 : vector<8x32xf32>
    %281 = arith.mulf %276, %278 : vector<8x32xf32>
    %282 = arith.addf %280, %281 : vector<8x32xf32>
    %283 = math.tanh %282 : vector<8x32xf32>
    %284 = arith.mulf %279, %283 : vector<8x32xf32>
    %c56 = arith.constant 56 : index
    %c0_65 = arith.constant 0 : index
    %285 = vector.load %arg4[%c56, %c0_65] : memref<64x32xf32, #tpu.memory_space<vmem>>, vector<8x32xf32>
    tpu.vector_store %arg4[%c56, %c0_65], %284 {strides = array<i32>} : memref<64x32xf32, #tpu.memory_space<vmem>>, vector<8x32xf32>,
    %c0_66 = arith.constant 0 : index
    %c0_67 = arith.constant 0 : index
    %286 = vector.load %arg4[%c0_66, %c0_67] : memref<64x32xf32, #tpu.memory_space<vmem>>, vector<64x32xf32>
    %287 = vector.extract_strided_slice %286 {offsets = [56, 0], sizes = [8, 32], strides = [1, 1]} : vector<64x32xf32> to vector<8x32xf32>
    %288 = vector.extract_strided_slice %286 {offsets = [48, 0], sizes = [8, 32], strides = [1, 1]} : vector<64x32xf32> to vector<8x32xf32>
    %289 = vector.extract_strided_slice %286 {offsets = [40, 0], sizes = [8, 32], strides = [1, 1]} : vector<64x32xf32> to vector<8x32xf32>
    %290 = vector.extract_strided_slice %286 {offsets = [32, 0], sizes = [8, 32], strides = [1, 1]} : vector<64x32xf32> to vector<8x32xf32>
    %291 = vector.extract_strided_slice %286 {offsets = [24, 0], sizes = [8, 32], strides = [1, 1]} : vector<64x32xf32> to vector<8x32xf32>
    %292 = vector.extract_strided_slice %286 {offsets = [16, 0], sizes = [8, 32], strides = [1, 1]} : vector<64x32xf32> to vector<8x32xf32>
    %293 = vector.extract_strided_slice %286 {offsets = [8, 0], sizes = [8, 32], strides = [1, 1]} : vector<64x32xf32> to vector<8x32xf32>
    %294 = vector.extract_strided_slice %286 {offsets = [0, 0], sizes = [8, 32], strides = [1, 1]} : vector<64x32xf32> to vector<8x32xf32>
    %295 = tpu.concatenate %287, %288, %289, %290, %291, %292, %293, %294 in 0 : vector<8x32xf32>, vector<8x32xf32>, vector<8x32xf32>, vector<8x32xf32>, vector<8x32xf32>, vector<8x32xf32>, vector<8x32xf32>, vector<8x32xf32> -> vector<64x32xf32>
    %296 = tpu.iota {dimensions = array<i32: 1>} : vector<1x32xi32>
    %c16_i32_68 = arith.constant 16 : i32
    %297 = vector.broadcast %c16_i32_68 : i32 to vector<1x32xi32>
    %298 = arith.cmpi slt, %296, %297 : vector<1x32xi32>
    %299 = vector.shape_cast %298 : vector<1x32xi1> to vector<1x32xi1>
    %300 = vector.broadcast %299 : vector<1x32xi1> to vector<64x32xi1>
    %301 = arith.select %300, %286, %295 : vector<64x32xi1>, vector<64x32xf32>
    %302 = vector.shape_cast %301 : vector<64x32xf32> to vector<8x8x32xf32>
    %303 = math.tanh %301 : vector<64x32xf32>
    %304 = vector.broadcast %21 : vector<1x32xf32> to vector<64x32xf32>
    %305 = arith.mulf %303, %304 : vector<64x32xf32>
    %cst_69 = arith.constant dense<0.000000e+00> : vector<64xf32>
    %306 = vector.multi_reduction <add>, %305, %cst_69 [1] : vector<64x32xf32> to vector<64xf32>
    %307 = vector.shape_cast %306 : vector<64xf32> to vector<64x1xf32>
    %308 = vector.shape_cast %307 : vector<64x1xf32> to vector<8x8x1xf32>
    %cst_70 = arith.constant dense<0xFF800000> : vector<8x1xf32>
    %309 = vector.multi_reduction <maximumf>, %308, %cst_70 [0] : vector<8x8x1xf32> to vector<8x1xf32>
    %310 = vector.shape_cast %309 : vector<8x1xf32> to vector<1x8x1xf32>
    %311 = vector.broadcast %310 : vector<1x8x1xf32> to vector<8x8x1xf32>
    %312 = arith.subf %308, %311 : vector<8x8x1xf32>
    %313 = math.exp %312 : vector<8x8x1xf32>
    %cst_71 = arith.constant dense<0.000000e+00> : vector<8x1xf32>
    %314 = vector.multi_reduction <add>, %313, %cst_71 [0] : vector<8x8x1xf32> to vector<8x1xf32>
    %315 = vector.shape_cast %314 : vector<8x1xf32> to vector<1x8x1xf32>
    %316 = vector.broadcast %315 : vector<1x8x1xf32> to vector<8x8x1xf32>
    %317 = arith.divf %313, %316 : vector<8x8x1xf32>
    %318 = vector.broadcast %317 : vector<8x8x1xf32> to vector<8x8x32xf32>
    %319 = arith.mulf %318, %302 : vector<8x8x32xf32>
    %cst_72 = arith.constant dense<0.000000e+00> : vector<8x32xf32>
    %320 = vector.multi_reduction <add>, %319, %cst_72 [0] : vector<8x8x32xf32> to vector<8x32xf32>
    %321 = math.tanh %320 : vector<8x32xf32>
    %cst_73 = arith.constant dense<0.000000e+00> : vector<8x64xf32>
    %322 = tpu.matmul %321, %10, %cst_73 {dimension_numbers = #tpu.dot_dimension_numbers<[1], [0], [0], [1], [0, 0, 1, 1], [], []>} : vector<8x32xf32>, vector<32x64xf32>, vector<8x64xf32> -> vector<8x64xf32>
    %323 = vector.broadcast %20 : vector<1x64xf32> to vector<8x64xf32>
    %324 = arith.addf %322, %323 : vector<8x64xf32>
    %325 = math.tanh %324 : vector<8x64xf32>
    %326 = vector.shape_cast %1 : vector<8x8x32xf32> to vector<64x32xf32>
    %cst_74 = arith.constant dense<0.000000e+00> : vector<64x128xf32>
    %327 = tpu.matmul %326, %7, %cst_74 {dimension_numbers = #tpu.dot_dimension_numbers<[1], [0], [0], [1], [0, 0, 1, 1], [], []>} : vector<64x32xf32>, vector<32x128xf32>, vector<64x128xf32> -> vector<64x128xf32>
    %328 = vector.shape_cast %327 : vector<64x128xf32> to vector<8x8x128xf32>
    %cst_75 = arith.constant dense<0.000000e+00> : vector<64x32xf32>
    %329 = tpu.matmul %326, %9, %cst_75 {dimension_numbers = #tpu.dot_dimension_numbers<[1], [0], [0], [1], [0, 0, 1, 1], [], []>} : vector<64x32xf32>, vector<32x32xf32>, vector<64x32xf32> -> vector<64x32xf32>
    %330 = vector.shape_cast %329 : vector<64x32xf32> to vector<8x8x32xf32>
    %331 = vector.extract_strided_slice %328 {offsets = [0, 0, 0], sizes = [4, 8, 32], strides = [1, 1, 1]} : vector<8x8x128xf32> to vector<4x8x32xf32>
    %332 = vector.extract_strided_slice %328 {offsets = [1, 0, 32], sizes = [4, 8, 32], strides = [1, 1, 1]} : vector<8x8x128xf32> to vector<4x8x32xf32>
    %333 = arith.addf %331, %332 : vector<4x8x32xf32>
    %334 = vector.extract_strided_slice %328 {offsets = [2, 0, 64], sizes = [4, 8, 32], strides = [1, 1, 1]} : vector<8x8x128xf32> to vector<4x8x32xf32>
    %335 = arith.addf %333, %334 : vector<4x8x32xf32>
    %336 = vector.extract_strided_slice %328 {offsets = [3, 0, 96], sizes = [4, 8, 32], strides = [1, 1, 1]} : vector<8x8x128xf32> to vector<4x8x32xf32>
    %337 = arith.addf %335, %336 : vector<4x8x32xf32>
    %338 = vector.extract_strided_slice %330 {offsets = [4, 0, 0], sizes = [4, 8, 32], strides = [1, 1, 1]} : vector<8x8x32xf32> to vector<4x8x32xf32>
    %339 = arith.addf %337, %338 : vector<4x8x32xf32>
    %340 = vector.shape_cast %17 : vector<1x32xf32> to vector<1x1x32xf32>
    %341 = vector.broadcast %340 : vector<1x1x32xf32> to vector<4x8x32xf32>
    %342 = arith.addf %339, %341 : vector<4x8x32xf32>
    %343 = math.tanh %342 : vector<4x8x32xf32>
    %cst_76 = arith.constant dense<0.000000e+00> : vector<8x32xf32>
    %344 = vector.multi_reduction <add>, %343, %cst_76 [0] : vector<4x8x32xf32> to vector<8x32xf32>
    %cst_77 = arith.constant 4.000000e+00 : f32
    %345 = vector.broadcast %cst_77 : f32 to vector<8x32xf32>
    %346 = arith.divf %344, %345 : vector<8x32xf32>
    %cst_78 = arith.constant dense<0.000000e+00> : vector<8x32xf32>
    %347 = vector.multi_reduction <add>, %1, %cst_78 [0] : vector<8x8x32xf32> to vector<8x32xf32>
    %cst_79 = arith.constant 8.000000e+00 : f32
    %348 = vector.broadcast %cst_79 : f32 to vector<8x32xf32>
    %349 = arith.divf %347, %348 : vector<8x32xf32>
    %cst_80 = arith.constant dense<0.000000e+00> : vector<8xf32>
    %350 = vector.multi_reduction <add>, %349, %cst_80 [1] : vector<8x32xf32> to vector<8xf32>
    %351 = vector.shape_cast %350 : vector<8xf32> to vector<8x1xf32>
    %cst_81 = arith.constant dense<0.000000e+00> : vector<8xf32>
    %352 = vector.multi_reduction <add>, %325, %cst_81 [1] : vector<8x64xf32> to vector<8xf32>
    %353 = vector.shape_cast %352 : vector<8xf32> to vector<8x1xf32>
    %354 = arith.addf %351, %353 : vector<8x1xf32>
    %cst_82 = arith.constant 0.010416667 : f32
    %355 = vector.broadcast %cst_82 : f32 to vector<8x1xf32>
    %356 = arith.mulf %354, %355 : vector<8x1xf32>
    %357 = arith.mulf %349, %349 : vector<8x32xf32>
    %cst_83 = arith.constant dense<0.000000e+00> : vector<8xf32>
    %358 = vector.multi_reduction <add>, %357, %cst_83 [1] : vector<8x32xf32> to vector<8xf32>
    %359 = vector.shape_cast %358 : vector<8xf32> to vector<8x1xf32>
    %360 = arith.mulf %325, %325 : vector<8x64xf32>
    %cst_84 = arith.constant dense<0.000000e+00> : vector<8xf32>
    %361 = vector.multi_reduction <add>, %360, %cst_84 [1] : vector<8x64xf32> to vector<8xf32>
    %362 = vector.shape_cast %361 : vector<8xf32> to vector<8x1xf32>
    %363 = arith.addf %359, %362 : vector<8x1xf32>
    %cst_85 = arith.constant 0.010416667 : f32
    %364 = vector.broadcast %cst_85 : f32 to vector<8x1xf32>
    %365 = arith.mulf %363, %364 : vector<8x1xf32>
    %366 = arith.mulf %356, %356 : vector<8x1xf32>
    %367 = arith.subf %365, %366 : vector<8x1xf32>
    %cst_86 = arith.constant 9.99999974E-6 : f32
    %368 = vector.broadcast %cst_86 : f32 to vector<8x1xf32>
    %369 = arith.addf %367, %368 : vector<8x1xf32>
    %370 = math.rsqrt %369 : vector<8x1xf32>
    %371 = vector.broadcast %356 : vector<8x1xf32> to vector<8x32xf32>
    %372 = arith.subf %349, %371 : vector<8x32xf32>
    %373 = vector.broadcast %370 : vector<8x1xf32> to vector<8x32xf32>
    %374 = arith.mulf %372, %373 : vector<8x32xf32>
    %375 = vector.extract_strided_slice %23 {offsets = [0, 0], sizes = [1, 32], strides = [1, 1]} : vector<1x96xf32> to vector<1x32xf32>
    %376 = vector.broadcast %375 : vector<1x32xf32> to vector<8x32xf32>
    %377 = arith.mulf %374, %376 : vector<8x32xf32>
    %378 = vector.extract_strided_slice %24 {offsets = [0, 0], sizes = [1, 32], strides = [1, 1]} : vector<1x96xf32> to vector<1x32xf32>
    %379 = vector.broadcast %378 : vector<1x32xf32> to vector<8x32xf32>
    %380 = arith.addf %377, %379 : vector<8x32xf32>
    %381 = vector.broadcast %356 : vector<8x1xf32> to vector<8x64xf32>
    %382 = arith.subf %325, %381 : vector<8x64xf32>
    %383 = vector.broadcast %370 : vector<8x1xf32> to vector<8x64xf32>
    %384 = arith.mulf %382, %383 : vector<8x64xf32>
    %385 = vector.extract_strided_slice %23 {offsets = [0, 32], sizes = [1, 64], strides = [1, 1]} : vector<1x96xf32> to vector<1x64xf32>
    %386 = vector.broadcast %385 : vector<1x64xf32> to vector<8x64xf32>
    %387 = arith.mulf %384, %386 : vector<8x64xf32>
    %388 = vector.extract_strided_slice %24 {offsets = [0, 32], sizes = [1, 64], strides = [1, 1]} : vector<1x96xf32> to vector<1x64xf32>
    %389 = vector.broadcast %388 : vector<1x64xf32> to vector<8x64xf32>
    %390 = arith.addf %387, %389 : vector<8x64xf32>
    %cst_87 = arith.constant dense<0.000000e+00> : vector<8x5xf32>
    %391 = tpu.matmul %380, %14, %cst_87 {dimension_numbers = #tpu.dot_dimension_numbers<[1], [0], [0], [1], [0, 0, 1, 1], [], []>} : vector<8x32xf32>, vector<32x5xf32>, vector<8x5xf32> -> vector<8x5xf32>
    %cst_88 = arith.constant dense<0.000000e+00> : vector<8x5xf32>
    %392 = tpu.matmul %390, %13, %cst_88 {dimension_numbers = #tpu.dot_dimension_numbers<[1], [0], [0], [1], [0, 0, 1, 1], [], []>} : vector<8x64xf32>, vector<64x5xf32>, vector<8x5xf32> -> vector<8x5xf32>
    %393 = arith.addf %391, %392 : vector<8x5xf32>
    %394 = vector.broadcast %18 : vector<1x5xf32> to vector<8x5xf32>
    %395 = arith.addf %393, %394 : vector<8x5xf32>
    %cst_89 = arith.constant 0.000000e+00 : f32
    %396 = vector.broadcast %cst_89 : f32 to vector<8x27xf32>
    %397 = tpu.concatenate %64, %346, %395, %396 in 1 : vector<8x64xf32>, vector<8x32xf32>, vector<8x5xf32>, vector<8x27xf32> -> vector<8x128xf32>
    %c0_90 = arith.constant 0 : index
    %c0_91 = arith.constant 0 : index
    %398 = vector.load %arg3[%c0_90, %c0_91] : memref<8x128xf32, #tpu.memory_space<vmem>>, vector<8x128xf32>
    tpu.vector_store %arg3[%c0_90, %c0_91], %397 {strides = array<i32>} : memref<8x128xf32, #tpu.memory_space<vmem>>, vector<8x128xf32>,
    return
  }
  func.func @transform_0(%arg0: i32) -> (i32, i32, i32) {
    %c0_i32 = arith.constant 0 : i32
    %c0_i32_0 = arith.constant 0 : i32
    %c0_i32_1 = arith.constant 0 : i32
    return %c0_i32, %arg0, %c0_i32_0 : i32, i32, i32
  }
  func.func @transform_1(%arg0: i32) -> (i32, i32) {
    %c0_i32 = arith.constant 0 : i32
    %c0_i32_0 = arith.constant 0 : i32
    %c0_i32_1 = arith.constant 0 : i32
    return %c0_i32, %c0_i32_0 : i32, i32
  }
  func.func @transform_2(%arg0: i32) -> (i32, i32) {
    %c0_i32 = arith.constant 0 : i32
    %c0_i32_0 = arith.constant 0 : i32
    return %arg0, %c0_i32 : i32, i32
  }
}

</mosaic_0001>

<llo_original>
// kernel: tpu_custom_call.1
$region0: #{tpu_custom_call.1}
  #allocation0 [shape = 'u32[]', space=smem, size = 0x4, offset = 0x4, fixed_abs, tag = 'smem constant byte address 0x4 - core index']
  #allocation1 [shape = 'u32[144,128]{1,0:T(1,128)}', space=vmem, size = 0x12000, scoped, tag = 'internal scratch']
  #allocation2 [shape = 'f32[64,32]{1,0:T(8,128)}', space=vmem, size = 0x8000, scoped, tag = 'scratch operand']
  %s0 = inlined_call_operand.hbm [shape: f32[8,8,34], index: 0, kind: input, shape index: {}]
  %s1 = inlined_call_operand.hbm [shape: f32[232,128], index: 1, kind: input, shape index: {}]
  %s2 = inlined_call_operand.hbm [shape: f32[8,128], index: 2, kind: output, shape index: {}]
  %s3 = sld [smem:[#allocation0]]
  $region26: #{tpu_custom_call.1} parent=0
    _
  %s5 = ssub.s32 1, %s3
  %s6 = scalar_select 0, %s5, %s3
  $region1: #{tpu_custom_call.1} parent=0
    #allocation3 [shape = 'u8[32768]{0}', space=vmem, size = 0x8000, scoped, tag = 'input window, operand 0, single buffered']
    #allocation4 [shape = 's32[1]{0}', space=sflag, size = 0x4, scoped, tag = 'scoped memory for tpu_custom_call.1']
    #allocation5 [shape = 's32[1]{0}', space=sflag, size = 0x4, scoped, tag = 'scoped memory for tpu_custom_call.1']
    #allocation6 [shape = 'u8[118784]{0}', space=vmem, size = 0x1d000, scoped, tag = 'input window, operand 1, single buffered']
    #allocation7 [shape = 's32[1]{0}', space=sflag, size = 0x4, scoped, tag = 'scoped memory for tpu_custom_call.1']
    #allocation8 [shape = 'u8[4096]{0}', space=vmem, size = 0x1000, scoped, tag = 'output window, operand 0, single buffered']
    %7 = vsyncpa [#allocation4], 0
    %8 = vsyncpa [#allocation7], 0
    %9 = vsyncpa [#allocation5], 0
    // Predicated region
    $region2: #{tpu_custom_call.1} parent=1 // pred_check
      _
    $region3: #{tpu_custom_call.1} parent=1 // pred_check_branch
      %11 = sbr.rel (0) target = $region5
    $region4: #{tpu_custom_call.1} parent=1 // pred_region
      %s13 = ssub.s32 1024, 1024
      %14 = vsyncadd [#allocation4], %s13
      %s15 = sshll.u32 [#allocation3], 4
      %s16 = int_to_ptr.vmem [resolvable:$true] %s15
      %21 = dma.hbm_to_vmem [thread:$0]  %s0, 1024, %s16, [#allocation4], 128, 128, 8
    $region5: #{tpu_custom_call.1} parent=1 // pred_fallthru
      _
    // Predicated region
    $region6: #{tpu_custom_call.1} parent=1 // pred_check
      _
    $region7: #{tpu_custom_call.1} parent=1 // pred_check_branch
      %23 = sbr.rel (0) target = $region9
    $region8: #{tpu_custom_call.1} parent=1 // pred_region
      %s25 = ssub.s32 3712, 3712
      %26 = vsyncadd [#allocation7], %s25
      %s27 = sshll.u32 [#allocation6], 4
      %s28 = int_to_ptr.vmem [resolvable:$true] %s27
      %33 = dma.hbm_to_vmem [thread:$0]  %s1, 3712, %s28, [#allocation7], 128, 128, 8
    $region9: #{tpu_custom_call.1} parent=1 // pred_fallthru
      _
    // Predicated region
    $region10: #{tpu_custom_call.1} parent=1 // pred_check
      _
    $region11: #{tpu_custom_call.1} parent=1 // pred_check_branch
      %35 = sbr.rel (0) target = $region13
    $region12: #{tpu_custom_call.1} parent=1 // pred_region
      %36 = dma.done [#allocation4], 1024
    $region13: #{tpu_custom_call.1} parent=1 // pred_fallthru
      _
    // Predicated region
    $region14: #{tpu_custom_call.1} parent=1 // pred_check
      _
    $region15: #{tpu_custom_call.1} parent=1 // pred_check_branch
      %38 = sbr.rel (0) target = $region17
    $region16: #{tpu_custom_call.1} parent=1 // pred_region
      %39 = dma.done [#allocation7], 3712
    $region17: #{tpu_custom_call.1} parent=1 // pred_fallthru
      _
    %v40 = vld [vmem:[#allocation3] sm:$0xff]
    %v41 = vld [vmem:[#allocation3 + $0x8] sm:$0xff]
    %v42 = vld [vmem:[#allocation3 + $0x10] sm:$0xff]
    %v43 = vld [vmem:[#allocation3 + $0x18] sm:$0xff]
    %v44 = vld [vmem:[#allocation3 + $0x20] sm:$0xff]
    %v45 = vld [vmem:[#allocation3 + $0x28] sm:$0xff]
    %v46 = vld [vmem:[#allocation3 + $0x30] sm:$0xff]
    %v47 = vld [vmem:[#allocation3 + $0x38] sm:$0xff]
    %v48 = vld [vmem:[#allocation6] sm:$0xff]
    %v49 = vld [vmem:[#allocation6 + $0x8] sm:$0xff]
    %v50 = vld [vmem:[#allocation6 + $0x10] sm:$0xff]
    %v51 = vld [vmem:[#allocation6 + $0x18] sm:$0xff]
    %v52 = vld [vmem:[#allocation6 + $0x20] sm:$0xff]
    %v53 = vld [vmem:[#allocation6 + $0x28] sm:$0xff]
    %v54 = vld [vmem:[#allocation6 + $0x30] sm:$0xff]
    %v55 = vld [vmem:[#allocation6 + $0x38] sm:$0xff]
    %v56 = vld [vmem:[#allocation6 + $0x40] sm:$0xff]
    %v57 = vld [vmem:[#allocation6 + $0x48] sm:$0xff]
    %v58 = vld [vmem:[#allocation6 + $0x50] sm:$0xff]
    %v59 = vld [vmem:[#allocation6 + $0x58] sm:$0xff]
    %v60 = vld [vmem:[#allocation6 + $0x60] sm:$0xff]
    %v61 = vld [vmem:[#allocation6 + $0x68] sm:$0xff]
    %v62 = vld [vmem:[#allocation6 + $0x70] sm:$0xff]
    %v63 = vld [vmem:[#allocation6 + $0x78] sm:$0xff]
    %v64 = vld [vmem:[#allocation6 + $0x80] sm:$0xff]
    %v65 = vld [vmem:[#allocation6 + $0x88] sm:$0xff]
    %v66 = vld [vmem:[#allocation6 + $0x90] sm:$0xff]
    %v67 = vld [vmem:[#allocation6 + $0x98] sm:$0xff]
    %v68 = vld [vmem:[#allocation6 + $0xa0] sm:$0xff]
    %v69 = vld [vmem:[#allocation6 + $0xa8] sm:$0xff]
    %v70 = vld [vmem:[#allocation6 + $0xb0] sm:$0xff]
    %v71 = vld [vmem:[#allocation6 + $0xb8] sm:$0xff]
    %v72 = vld [vmem:[#allocation6 + $0xc0] sm:$0xff]
    %v73 = vld [vmem:[#allocation6 + $0xc8] sm:$0xff]
    %v74 = vld [vmem:[#allocation6 + $0xd0] sm:$0xff]
    %v75 = vld [vmem:[#allocation6 + $0xd8] sm:$0xff]
    %v76 = vld [vmem:[#allocation6 + $0xe0] sm:$0xff]
    %78 = vset.pattern.permute.xlu0 32
    %79 = vperm.xlu0 %78, %v40
    %v80 = vpop.permute.xlu0 %79
    %83 = vset.pattern.permute.xlu0 32
    %84 = vperm.xlu0 %83, %v41
    %v85 = vpop.permute.xlu0 %84
    %88 = vset.pattern.permute.xlu0 32
    %89 = vperm.xlu0 %88, %v42
    %v90 = vpop.permute.xlu0 %89
    %93 = vset.pattern.permute.xlu0 32
    %94 = vperm.xlu0 %93, %v43
    %v95 = vpop.permute.xlu0 %94
    %98 = vset.pattern.permute.xlu0 32
    %99 = vperm.xlu0 %98, %v44
    %v100 = vpop.permute.xlu0 %99
    %103 = vset.pattern.permute.xlu0 32
    %104 = vperm.xlu0 %103, %v45
    %v105 = vpop.permute.xlu0 %104
    %108 = vset.pattern.permute.xlu0 32
    %109 = vperm.xlu0 %108, %v46
    %v110 = vpop.permute.xlu0 %109
    %113 = vset.pattern.permute.xlu0 32
    %114 = vperm.xlu0 %113, %v47
    %v115 = vpop.permute.xlu0 %114
    %v117 = vmul.f32 %v80, %v40
    %v118 = vmul.f32 %v85, %v41
    %v119 = vmul.f32 %v90, %v42
    %v120 = vmul.f32 %v95, %v43
    %v121 = vmul.f32 %v100, %v44
    %v122 = vmul.f32 %v105, %v45
    %v123 = vmul.f32 %v110, %v46
    %v124 = vmul.f32 %v115, %v47
    %125 = vset.pattern.permute.xlu0 33
    %126 = vperm.xlu0 %125, %v40
    %v127 = vpop.permute.xlu0 %126
    %129 = vset.pattern.permute.xlu0 33
    %130 = vperm.xlu0 %129, %v41
    %v131 = vpop.permute.xlu0 %130
    %133 = vset.pattern.permute.xlu0 33
    %134 = vperm.xlu0 %133, %v42
    %v135 = vpop.permute.xlu0 %134
    %137 = vset.pattern.permute.xlu0 33
    %138 = vperm.xlu0 %137, %v43
    %v139 = vpop.permute.xlu0 %138
    %141 = vset.pattern.permute.xlu0 33
    %142 = vperm.xlu0 %141, %v44
    %v143 = vpop.permute.xlu0 %142
    %145 = vset.pattern.permute.xlu0 33
    %146 = vperm.xlu0 %145, %v45
    %v147 = vpop.permute.xlu0 %146
    %149 = vset.pattern.permute.xlu0 33
    %150 = vperm.xlu0 %149, %v46
    %v151 = vpop.permute.xlu0 %150
    %153 = vset.pattern.permute.xlu0 33
    %154 = vperm.xlu0 %153, %v47
    %v155 = vpop.permute.xlu0 %154
    %v157 = vmul.f32 %v127, %v40
    %v158 = vmul.f32 %v131, %v41
    %v159 = vmul.f32 %v135, %v42
    %v160 = vmul.f32 %v139, %v43
    %v161 = vmul.f32 %v143, %v44
    %v162 = vmul.f32 %v147, %v45
    %v163 = vmul.f32 %v151, %v46
    %v164 = vmul.f32 %v155, %v47
    %vm165 = vcmask 261120
    %v166 = vsel %vm165, %v117, 0.0
    %v167 = vsel %vm165, %v118, 0.0
    %v168 = vadd.f32 %v166, %v167
    %v169 = vsel %vm165, %v119, 0.0
    %v170 = vadd.f32 %v168, %v169
    %v171 = vsel %vm165, %v120, 0.0
    %v172 = vadd.f32 %v170, %v171
    %v173 = vsel %vm165, %v121, 0.0
    %v174 = vadd.f32 %v172, %v173
    %v175 = vsel %vm165, %v122, 0.0
    %v176 = vadd.f32 %v174, %v175
    %v177 = vsel %vm165, %v123, 0.0
    %v178 = vadd.f32 %v176, %v177
    %v179 = vsel %vm165, %v124, 0.0
    %v180 = vadd.f32 %v178, %v179
    %v181 = vsel %vm165, %v157, 0.0
    %v182 = vsel %vm165, %v158, 0.0
    %v183 = vadd.f32 %v181, %v182
    %v184 = vsel %vm165, %v159, 0.0
    %v185 = vadd.f32 %v183, %v184
    %v186 = vsel %vm165, %v160, 0.0
    %v187 = vadd.f32 %v185, %v186
    %v188 = vsel %vm165, %v161, 0.0
    %v189 = vadd.f32 %v187, %v188
    %v190 = vsel %vm165, %v162, 0.0
    %v191 = vadd.f32 %v189, %v190
    %v192 = vsel %vm165, %v163, 0.0
    %v193 = vadd.f32 %v191, %v192
    %v194 = vsel %vm165, %v164, 0.0
    %v195 = vadd.f32 %v193, %v194
    %vm196 = vcmp.ne.f32.partialorder %v40, 0.0
    %vm197 = vcmp.ne.f32.partialorder %v41, 0.0
    %vm198 = vcmp.ne.f32.partialorder %v42, 0.0
    %vm199 = vcmp.ne.f32.partialorder %v43, 0.0
    %vm200 = vcmp.ne.f32.partialorder %v44, 0.0
    %vm201 = vcmp.ne.f32.partialorder %v45, 0.0
    %vm202 = vcmp.ne.f32.partialorder %v46, 0.0
    %vm203 = vcmp.ne.f32.partialorder %v47, 0.0
    %v204 = vsel %vm196, 1.0, 0.0
    %v205 = vsel %vm197, 1.0, 0.0
    %v206 = vsel %vm198, 1.0, 0.0
    %v207 = vsel %vm199, 1.0, 0.0
    %v208 = vsel %vm200, 1.0, 0.0
    %v209 = vsel %vm201, 1.0, 0.0
    %v210 = vsel %vm202, 1.0, 0.0
    %v211 = vsel %vm203, 1.0, 0.0
    %vm212 = vcmask 269568
    %v213 = vsel %vm212, %v204, 0.0
    %v214 = vsel %vm212, %v205, 0.0
    %v215 = vadd.f32 %v213, %v214
    %v216 = vsel %vm212, %v206, 0.0
    %v217 = vadd.f32 %v215, %v216
    %v218 = vsel %vm212, %v207, 0.0
    %v219 = vadd.f32 %v217, %v218
    %v220 = vsel %vm212, %v208, 0.0
    %v221 = vadd.f32 %v219, %v220
    %v222 = vsel %vm212, %v209, 0.0
    %v223 = vadd.f32 %v221, %v222
    %v224 = vsel %vm212, %v210, 0.0
    %v225 = vadd.f32 %v223, %v224
    %v226 = vsel %vm212, %v211, 0.0
    %v227 = vadd.f32 %v225, %v226
    %v228 = vmax.f32 %v227, 1.0
    %vm229 = vcmask 277768
    %v230 = vsel %vm229, %v204, 0.0
    %v231 = vsel %vm229, %v205, 0.0
    %v232 = vadd.f32 %v230, %v231
    %v233 = vsel %vm229, %v206, 0.0
    %v234 = vadd.f32 %v232, %v233
    %v235 = vsel %vm229, %v207, 0.0
    %v236 = vadd.f32 %v234, %v235
    %v237 = vsel %vm229, %v208, 0.0
    %v238 = vadd.f32 %v236, %v237
    %v239 = vsel %vm229, %v209, 0.0
    %v240 = vadd.f32 %v238, %v239
    %v241 = vsel %vm229, %v210, 0.0
    %v242 = vadd.f32 %v240, %v241
    %v243 = vsel %vm229, %v211, 0.0
    %v244 = vadd.f32 %v242, %v243
    %v245 = vmax.f32 %v244, 1.0
    %247 = vset.pattern.permute.xlu0 32
    %248 = vperm.xlu0 %247, %v228
    %v249 = vpop.permute.xlu0 %248
    %v251 = vrcp.pop %v249
    %v252 = vmul.f32 %v180, %v251
    %254 = vset.pattern.permute.xlu0 33
    %255 = vperm.xlu0 %254, %v245
    %v256 = vpop.permute.xlu0 %255
    %v258 = vrcp.pop %v256
    %v259 = vmul.f32 %v195, %v258
    %v260 = vlaneseq
    %v261 = vshrl.u32 %v260, 7
    %v262 = vsub.s32 0, %v261
    %v263 = vrot.slane %v76, %v262
    %v265 = vsel %vm165, %v252, 0
    %v268 = vsel %vm165, %v259, 0
    %270 = vmatprep.subr.mxu0 0.0
    %271 = vmatpush1.msra.mxu0 0.0
    %272 = vmatprep.subr.mxu0 0.0
    %273 = vmatpush1.msra.mxu0 0.0
    %274 = vmatprep.subr.mxu0 0.0
    %275 = vmatpush1.msra.mxu0 0.0
    %276 = vmatprep.subr.mxu0 0.0
    %277 = vmatpush1.msra.mxu0 0.0
    %278 = vmatprep.subr.mxu0 0.0
    %279 = vmatpush1.msra.mxu0 0.0
    %280 = vmatprep.subr.mxu0 0.0
    %281 = vmatpush1.msra.mxu0 0.0
    %282 = vmatprep.subr.mxu0 0.0
    %283 = vmatpush1.msra.mxu0 0.0
    %284 = vmatprep.subr.mxu0 0.0
    %285 = vmatpush1.msra.mxu0 0.0
    %286 = vmatprep.subr.mxu0 0.0
    %287 = vmatpush1.msra.mxu0 0.0
    %288 = vmatprep.subr.mxu0 0.0
    %289 = vmatpush1.msra.mxu0 0.0
    %290 = vmatprep.subr.mxu0 0.0
    %291 = vmatpush1.msra.mxu0 0.0
    %292 = vmatprep.subr.mxu0 0.0
    %293 = vmatpush1.msra.mxu0 0.0
    %294 = vmatprep.subr.mxu0 0.0
    %295 = vmatpush1.msra.mxu0 %v67
    %296 = vmatprep.subr.mxu0 0.0
    %297 = vmatpush1.msra.mxu0 %v66
    %298 = vmatprep.subr.mxu0 0.0
    %299 = vmatpush1.msra.mxu0 %v65
    %300 = vmatprep.subr.mxu0 0.0
    %301 = vmatpush1.msra.mxu0 %v64
    %302 = vmatprep.subr.mxu0 0.0
    %303 = vmatpush2.msra.mxu0 0.0
    %304 = vmatprep.subr.mxu0 0.0
    %305 = vmatpush2.msra.mxu0 0.0
    %306 = vmatprep.subr.mxu0 0.0
    %307 = vmatpush2.msra.mxu0 0.0
    %308 = vmatprep.subr.mxu0 0.0
    %309 = vmatpush2.msra.mxu0 0.0
    %310 = vmatprep.subr.mxu0 0.0
    %311 = vmatpush2.msra.mxu0 0.0
    %312 = vmatprep.subr.mxu0 0.0
    %313 = vmatpush2.msra.mxu0 0.0
    %314 = vmatprep.subr.mxu0 0.0
    %315 = vmatpush2.msra.mxu0 0.0
    %316 = vmatprep.subr.mxu0 0.0
    %317 = vmatpush2.msra.mxu0 0.0
    %318 = vmatprep.subr.mxu0 0.0
    %319 = vmatpush2.msra.mxu0 0.0
    %320 = vmatprep.subr.mxu0 0.0
    %321 = vmatpush2.msra.mxu0 0.0
    %322 = vmatprep.subr.mxu0 0.0
    %323 = vmatpush2.msra.mxu0 0.0
    %324 = vmatprep.subr.mxu0 0.0
    %325 = vmatpush2.msra.mxu0 0.0
    %326 = vmatprep.subr.mxu0 0.0
    %327 = vmatpush2.msra.mxu0 0.0
    %328 = vmatprep.subr.mxu0 0.0
    %329 = vmatpush2.msra.mxu0 0.0
    %330 = vmatprep.subr.mxu0 0.0
    %331 = vmatpush2.msra.mxu0 0.0
    %332 = vmatprep.subr.mxu0 0.0
    %333 = vmatpush2.msra.mxu0 0.0
    %334 = vmatprep.mubr.f32.mxu0 0.0
    %335 = vmatmul.mubr.f32.gmra.mxu0 %v265
    %v336 = vpop.f32.mrf.mxu0
    %v337 = vadd.f32 %v263, %v336
    %v338 = vpop.f32.mrf.mxu0
    %339 = vmatprep.mubr.f32.mxu0 0.0
    %340 = vmatmul.mubr.f32.gmra.mxu0 %v268
    %v341 = vpop.f32.mrf.mxu0
    %v342 = vadd.f32 %v263, %v341
    %v343 = vpop.f32.mrf.mxu0
    %344 = vdwg.mxu0
    %v345 = vtanh.pop %v337
    %v346 = vtanh.pop %v342
    %v348 = vsel %vm165, %v346, 0
    %350 = vmatprep.subr.mxu0 0.0
    %351 = vmatpush1.msra.mxu0 0.0
    %352 = vmatprep.subr.mxu0 0.0
    %353 = vmatpush1.msra.mxu0 0.0
    %354 = vmatprep.subr.mxu0 0.0
    %355 = vmatpush1.msra.mxu0 0.0
    %356 = vmatprep.subr.mxu0 0.0
    %357 = vmatpush1.msra.mxu0 0.0
    %358 = vmatprep.subr.mxu0 0.0
    %359 = vmatpush1.msra.mxu0 0.0
    %360 = vmatprep.subr.mxu0 0.0
    %361 = vmatpush1.msra.mxu0 0.0
    %362 = vmatprep.subr.mxu0 0.0
    %363 = vmatpush1.msra.mxu0 0.0
    %364 = vmatprep.subr.mxu0 0.0
    %365 = vmatpush1.msra.mxu0 0.0
    %366 = vmatprep.subr.mxu0 0.0
    %367 = vmatpush1.msra.mxu0 0.0
    %368 = vmatprep.subr.mxu0 0.0
    %369 = vmatpush1.msra.mxu0 0.0
    %370 = vmatprep.subr.mxu0 0.0
    %371 = vmatpush1.msra.mxu0 0.0
    %372 = vmatprep.subr.mxu0 0.0
    %373 = vmatpush1.msra.mxu0 0.0
    %374 = vmatprep.subr.mxu0 0.0
    %375 = vmatpush1.msra.mxu0 %v75
    %376 = vmatprep.subr.mxu0 0.0
    %377 = vmatpush1.msra.mxu0 %v74
    %378 = vmatprep.subr.mxu0 0.0
    %379 = vmatpush1.msra.mxu0 %v73
    %380 = vmatprep.subr.mxu0 0.0
    %381 = vmatpush1.msra.mxu0 %v72
    %382 = vmatprep.subr.mxu0 0.0
    %383 = vmatpush2.msra.mxu0 0.0
    %384 = vmatprep.subr.mxu0 0.0
    %385 = vmatpush2.msra.mxu0 0.0
    %386 = vmatprep.subr.mxu0 0.0
    %387 = vmatpush2.msra.mxu0 0.0
    %388 = vmatprep.subr.mxu0 0.0
    %389 = vmatpush2.msra.mxu0 0.0
    %390 = vmatprep.subr.mxu0 0.0
    %391 = vmatpush2.msra.mxu0 0.0
    %392 = vmatprep.subr.mxu0 0.0
    %393 = vmatpush2.msra.mxu0 0.0
    %394 = vmatprep.subr.mxu0 0.0
    %395 = vmatpush2.msra.mxu0 0.0
    %396 = vmatprep.subr.mxu0 0.0
    %397 = vmatpush2.msra.mxu0 0.0
    %398 = vmatprep.subr.mxu0 0.0
    %399 = vmatpush2.msra.mxu0 0.0
    %400 = vmatprep.subr.mxu0 0.0
    %401 = vmatpush2.msra.mxu0 0.0
    %402 = vmatprep.subr.mxu0 0.0
    %403 = vmatpush2.msra.mxu0 0.0
    %404 = vmatprep.subr.mxu0 0.0
    %405 = vmatpush2.msra.mxu0 0.0
    %406 = vmatprep.subr.mxu0 0.0
    %407 = vmatpush2.msra.mxu0 0.0
    %408 = vmatprep.subr.mxu0 0.0
    %409 = vmatpush2.msra.mxu0 0.0
    %410 = vmatprep.subr.mxu0 0.0
    %411 = vmatpush2.msra.mxu0 0.0
    %412 = vmatprep.subr.mxu0 0.0
    %413 = vmatpush2.msra.mxu0 0.0
    %414 = vmatprep.mubr.f32.mxu0 0.0
    %415 = vmatmul.mubr.f32.gmra.mxu0 %v348
    %v416 = vpop.f32.mrf.mxu0
    %v417 = vadd.f32 0.0, %v416
    %v418 = vpop.f32.mrf.mxu0
    %419 = vdwg.mxu0
    %v421 = vsel %vm165, %v345, 0
    %423 = vmatprep.subr.mxu0 0.0
    %424 = vmatpush1.msra.mxu0 0.0
    %425 = vmatprep.subr.mxu0 0.0
    %426 = vmatpush1.msra.mxu0 0.0
    %427 = vmatprep.subr.mxu0 0.0
    %428 = vmatpush1.msra.mxu0 0.0
    %429 = vmatprep.subr.mxu0 0.0
    %430 = vmatpush1.msra.mxu0 0.0
    %431 = vmatprep.subr.mxu0 0.0
    %432 = vmatpush1.msra.mxu0 0.0
    %433 = vmatprep.subr.mxu0 0.0
    %434 = vmatpush1.msra.mxu0 0.0
    %435 = vmatprep.subr.mxu0 0.0
    %436 = vmatpush1.msra.mxu0 0.0
    %437 = vmatprep.subr.mxu0 0.0
    %438 = vmatpush1.msra.mxu0 0.0
    %439 = vmatprep.subr.mxu0 0.0
    %440 = vmatpush1.msra.mxu0 0.0
    %441 = vmatprep.subr.mxu0 0.0
    %442 = vmatpush1.msra.mxu0 0.0
    %443 = vmatprep.subr.mxu0 0.0
    %444 = vmatpush1.msra.mxu0 0.0
    %445 = vmatprep.subr.mxu0 0.0
    %446 = vmatpush1.msra.mxu0 0.0
    %447 = vmatprep.subr.mxu0 0.0
    %448 = vmatpush1.msra.mxu0 %v71
    %449 = vmatprep.subr.mxu0 0.0
    %450 = vmatpush1.msra.mxu0 %v70
    %451 = vmatprep.subr.mxu0 0.0
    %452 = vmatpush1.msra.mxu0 %v69
    %453 = vmatprep.subr.mxu0 0.0
    %454 = vmatpush1.msra.mxu0 %v68
    %455 = vmatprep.subr.mxu0 0.0
    %456 = vmatpush2.msra.mxu0 0.0
    %457 = vmatprep.subr.mxu0 0.0
    %458 = vmatpush2.msra.mxu0 0.0
    %459 = vmatprep.subr.mxu0 0.0
    %460 = vmatpush2.msra.mxu0 0.0
    %461 = vmatprep.subr.mxu0 0.0
    %462 = vmatpush2.msra.mxu0 0.0
    %463 = vmatprep.subr.mxu0 0.0
    %464 = vmatpush2.msra.mxu0 0.0
    %465 = vmatprep.subr.mxu0 0.0
    %466 = vmatpush2.msra.mxu0 0.0
    %467 = vmatprep.subr.mxu0 0.0
    %468 = vmatpush2.msra.mxu0 0.0
    %469 = vmatprep.subr.mxu0 0.0
    %470 = vmatpush2.msra.mxu0 0.0
    %471 = vmatprep.subr.mxu0 0.0
    %472 = vmatpush2.msra.mxu0 0.0
    %473 = vmatprep.subr.mxu0 0.0
    %474 = vmatpush2.msra.mxu0 0.0
    %475 = vmatprep.subr.mxu0 0.0
    %476 = vmatpush2.msra.mxu0 0.0
    %477 = vmatprep.subr.mxu0 0.0
    %478 = vmatpush2.msra.mxu0 0.0
    %479 = vmatprep.subr.mxu0 0.0
    %480 = vmatpush2.msra.mxu0 0.0
    %481 = vmatprep.subr.mxu0 0.0
    %482 = vmatpush2.msra.mxu0 0.0
    %483 = vmatprep.subr.mxu0 0.0
    %484 = vmatpush2.msra.mxu0 0.0
    %485 = vmatprep.subr.mxu0 0.0
    %486 = vmatpush2.msra.mxu0 0.0
    %487 = vmatprep.mubr.f32.mxu0 0.0
    %488 = vmatmul.mubr.f32.gmra.mxu0 %v421
    %v489 = vpop.f32.mrf.mxu0
    %v490 = vadd.f32 %v417, %v489
    %v491 = vpop.f32.mrf.mxu0
    %492 = vdwg.mxu0
    %v493 = vlaneseq
    %v494 = vshrl.u32 %v493, 7
    %v495 = vsub.s32 1, %v494
    %v496 = vrot.slane %v76, %v495
    %v497 = vadd.f32 %v490, %v496
    %v498 = vmax.f32 %v497, 0.0
    %v500 = vsel %vm165, %v157, 0
    %v503 = vsel %vm165, %v158, 0
    %v506 = vsel %vm165, %v159, 0
    %v509 = vsel %vm165, %v160, 0
    %v512 = vsel %vm165, %v161, 0
    %v515 = vsel %vm165, %v162, 0
    %v518 = vsel %vm165, %v163, 0
    %v521 = vsel %vm165, %v164, 0
    %523 = vmatprep.subr.mxu0 0.0
    %524 = vmatpush1.msra.mxu0 0.0
    %525 = vmatprep.subr.mxu0 0.0
    %526 = vmatpush1.msra.mxu0 0.0
    %527 = vmatprep.subr.mxu0 0.0
    %528 = vmatpush1.msra.mxu0 0.0
    %529 = vmatprep.subr.mxu0 0.0
    %530 = vmatpush1.msra.mxu0 0.0
    %531 = vmatprep.subr.mxu0 0.0
    %532 = vmatpush1.msra.mxu0 0.0
    %533 = vmatprep.subr.mxu0 0.0
    %534 = vmatpush1.msra.mxu0 0.0
    %535 = vmatprep.subr.mxu0 0.0
    %536 = vmatpush1.msra.mxu0 0.0
    %537 = vmatprep.subr.mxu0 0.0
    %538 = vmatpush1.msra.mxu0 0.0
    %539 = vmatprep.subr.mxu0 0.0
    %540 = vmatpush1.msra.mxu0 0.0
    %541 = vmatprep.subr.mxu0 0.0
    %542 = vmatpush1.msra.mxu0 0.0
    %543 = vmatprep.subr.mxu0 0.0
    %544 = vmatpush1.msra.mxu0 0.0
    %545 = vmatprep.subr.mxu0 0.0
    %546 = vmatpush1.msra.mxu0 0.0
    %547 = vmatprep.subr.mxu0 0.0
    %548 = vmatpush1.msra.mxu0 %v55
    %549 = vmatprep.subr.mxu0 0.0
    %550 = vmatpush1.msra.mxu0 %v54
    %551 = vmatprep.subr.mxu0 0.0
    %552 = vmatpush1.msra.mxu0 %v53
    %553 = vmatprep.subr.mxu0 0.0
    %554 = vmatpush1.msra.mxu0 %v52
    %555 = vmatprep.subr.mxu0 0.0
    %556 = vmatpush2.msra.mxu0 0.0
    %557 = vmatprep.subr.mxu0 0.0
    %558 = vmatpush2.msra.mxu0 0.0
    %559 = vmatprep.subr.mxu0 0.0
    %560 = vmatpush2.msra.mxu0 0.0
    %561 = vmatprep.subr.mxu0 0.0
    %562 = vmatpush2.msra.mxu0 0.0
    %563 = vmatprep.subr.mxu0 0.0
    %564 = vmatpush2.msra.mxu0 0.0
    %565 = vmatprep.subr.mxu0 0.0
    %566 = vmatpush2.msra.mxu0 0.0
    %567 = vmatprep.subr.mxu0 0.0
    %568 = vmatpush2.msra.mxu0 0.0
    %569 = vmatprep.subr.mxu0 0.0
    %570 = vmatpush2.msra.mxu0 0.0
    %571 = vmatprep.subr.mxu0 0.0
    %572 = vmatpush2.msra.mxu0 0.0
    %573 = vmatprep.subr.mxu0 0.0
    %574 = vmatpush2.msra.mxu0 0.0
    %575 = vmatprep.subr.mxu0 0.0
    %576 = vmatpush2.msra.mxu0 0.0
    %577 = vmatprep.subr.mxu0 0.0
    %578 = vmatpush2.msra.mxu0 0.0
    %579 = vmatprep.subr.mxu0 0.0
    %580 = vmatpush2.msra.mxu0 0.0
    %581 = vmatprep.subr.mxu0 0.0
    %582 = vmatpush2.msra.mxu0 0.0
    %583 = vmatprep.subr.mxu0 0.0
    %584 = vmatpush2.msra.mxu0 0.0
    %585 = vmatprep.subr.mxu0 0.0
    %586 = vmatpush2.msra.mxu0 0.0
    %587 = vmatprep.mubr.f32.mxu0 0.0
    %588 = vmatmul.mubr.f32.gmra.mxu0 %v500
    %v589 = vpop.f32.mrf.mxu0
    %v590 = vadd.f32 0.0, %v589
    %v591 = vpop.f32.mrf.mxu0
    %592 = vmatprep.mubr.f32.mxu0 0.0
    %593 = vmatmul.mubr.f32.gmra.mxu0 %v503
    %v594 = vpop.f32.mrf.mxu0
    %v595 = vadd.f32 0.0, %v594
    %v596 = vpop.f32.mrf.mxu0
    %597 = vmatprep.mubr.f32.mxu0 0.0
    %598 = vmatmul.mubr.f32.gmra.mxu0 %v506
    %v599 = vpop.f32.mrf.mxu0
    %v600 = vadd.f32 0.0, %v599
    %v601 = vpop.f32.mrf.mxu0
    %602 = vmatprep.mubr.f32.mxu0 0.0
    %603 = vmatmul.mubr.f32.gmra.mxu0 %v509
    %v604 = vpop.f32.mrf.mxu0
    %v605 = vadd.f32 0.0, %v604
    %v606 = vpop.f32.mrf.mxu0
    %607 = vmatprep.mubr.f32.mxu0 0.0
    %608 = vmatmul.mubr.f32.gmra.mxu0 %v512
    %v609 = vpop.f32.mrf.mxu0
    %v610 = vadd.f32 0.0, %v609
    %v611 = vpop.f32.mrf.mxu0
    %612 = vmatprep.mubr.f32.mxu0 0.0
    %613 = vmatmul.mubr.f32.gmra.mxu0 %v515
    %v614 = vpop.f32.mrf.mxu0
    %v615 = vadd.f32 0.0, %v614
    %v616 = vpop.f32.mrf.mxu0
    %617 = vmatprep.mubr.f32.mxu0 0.0
    %618 = vmatmul.mubr.f32.gmra.mxu0 %v518
    %v619 = vpop.f32.mrf.mxu0
    %v620 = vadd.f32 0.0, %v619
    %v621 = vpop.f32.mrf.mxu0
    %622 = vmatprep.mubr.f32.mxu0 0.0
    %623 = vmatmul.mubr.f32.gmra.mxu0 %v521
    %v624 = vpop.f32.mrf.mxu0
    %v625 = vadd.f32 0.0, %v624
    %v626 = vpop.f32.mrf.mxu0
    %627 = vdwg.mxu0
    %v629 = vsel %vm165, %v117, 0
    %v632 = vsel %vm165, %v118, 0
    %v635 = vsel %vm165, %v119, 0
    %v638 = vsel %vm165, %v120, 0
    %v641 = vsel %vm165, %v121, 0
    %v644 = vsel %vm165, %v122, 0
    %v647 = vsel %vm165, %v123, 0
    %v650 = vsel %vm165, %v124, 0
    %652 = vmatprep.subr.mxu0 0.0
    %653 = vmatpush1.msra.mxu0 0.0
    %654 = vmatprep.subr.mxu0 0.0
    %655 = vmatpush1.msra.mxu0 0.0
    %656 = vmatprep.subr.mxu0 0.0
    %657 = vmatpush1.msra.mxu0 0.0
    %658 = vmatprep.subr.mxu0 0.0
    %659 = vmatpush1.msra.mxu0 0.0
    %660 = vmatprep.subr.mxu0 0.0
    %661 = vmatpush1.msra.mxu0 0.0
    %662 = vmatprep.subr.mxu0 0.0
    %663 = vmatpush1.msra.mxu0 0.0
    %664 = vmatprep.subr.mxu0 0.0
    %665 = vmatpush1.msra.mxu0 0.0
    %666 = vmatprep.subr.mxu0 0.0
    %667 = vmatpush1.msra.mxu0 0.0
    %668 = vmatprep.subr.mxu0 0.0
    %669 = vmatpush1.msra.mxu0 0.0
    %670 = vmatprep.subr.mxu0 0.0
    %671 = vmatpush1.msra.mxu0 0.0
    %672 = vmatprep.subr.mxu0 0.0
    %673 = vmatpush1.msra.mxu0 0.0
    %674 = vmatprep.subr.mxu0 0.0
    %675 = vmatpush1.msra.mxu0 0.0
    %676 = vmatprep.subr.mxu0 0.0
    %677 = vmatpush1.msra.mxu0 %v51
    %678 = vmatprep.subr.mxu0 0.0
    %679 = vmatpush1.msra.mxu0 %v50
    %680 = vmatprep.subr.mxu0 0.0
    %681 = vmatpush1.msra.mxu0 %v49
    %682 = vmatprep.subr.mxu0 0.0
    %683 = vmatpush1.msra.mxu0 %v48
    %684 = vmatprep.subr.mxu0 0.0
    %685 = vmatpush2.msra.mxu0 0.0
    %686 = vmatprep.subr.mxu0 0.0
    %687 = vmatpush2.msra.mxu0 0.0
    %688 = vmatprep.subr.mxu0 0.0
    %689 = vmatpush2.msra.mxu0 0.0
    %690 = vmatprep.subr.mxu0 0.0
    %691 = vmatpush2.msra.mxu0 0.0
    %692 = vmatprep.subr.mxu0 0.0
    %693 = vmatpush2.msra.mxu0 0.0
    %694 = vmatprep.subr.mxu0 0.0
    %695 = vmatpush2.msra.mxu0 0.0
    %696 = vmatprep.subr.mxu0 0.0
    %697 = vmatpush2.msra.mxu0 0.0
    %698 = vmatprep.subr.mxu0 0.0
    %699 = vmatpush2.msra.mxu0 0.0
    %700 = vmatprep.subr.mxu0 0.0
    %701 = vmatpush2.msra.mxu0 0.0
    %702 = vmatprep.subr.mxu0 0.0
    %703 = vmatpush2.msra.mxu0 0.0
    %704 = vmatprep.subr.mxu0 0.0
    %705 = vmatpush2.msra.mxu0 0.0
    %706 = vmatprep.subr.mxu0 0.0
    %707 = vmatpush2.msra.mxu0 0.0
    %708 = vmatprep.subr.mxu0 0.0
    %709 = vmatpush2.msra.mxu0 0.0
    %710 = vmatprep.subr.mxu0 0.0
    %711 = vmatpush2.msra.mxu0 0.0
    %712 = vmatprep.subr.mxu0 0.0
    %713 = vmatpush2.msra.mxu0 0.0
    %714 = vmatprep.subr.mxu0 0.0
    %715 = vmatpush2.msra.mxu0 0.0
    %716 = vmatprep.mubr.f32.mxu0 0.0
    %717 = vmatmul.mubr.f32.gmra.mxu0 %v629
    %v718 = vpop.f32.mrf.mxu0
    %v719 = vadd.f32 %v590, %v718
    %v720 = vpop.f32.mrf.mxu0
    %721 = vmatprep.mubr.f32.mxu0 0.0
    %722 = vmatmul.mubr.f32.gmra.mxu0 %v632
    %v723 = vpop.f32.mrf.mxu0
    %v724 = vadd.f32 %v595, %v723
    %v725 = vpop.f32.mrf.mxu0
    %726 = vmatprep.mubr.f32.mxu0 0.0
    %727 = vmatmul.mubr.f32.gmra.mxu0 %v635
    %v728 = vpop.f32.mrf.mxu0
    %v729 = vadd.f32 %v600, %v728
    %v730 = vpop.f32.mrf.mxu0
    %731 = vmatprep.mubr.f32.mxu0 0.0
    %732 = vmatmul.mubr.f32.gmra.mxu0 %v638
    %v733 = vpop.f32.mrf.mxu0
    %v734 = vadd.f32 %v605, %v733
    %v735 = vpop.f32.mrf.mxu0
    %736 = vmatprep.mubr.f32.mxu0 0.0
    %737 = vmatmul.mubr.f32.gmra.mxu0 %v641
    %v738 = vpop.f32.mrf.mxu0
    %v739 = vadd.f32 %v610, %v738
    %v740 = vpop.f32.mrf.mxu0
    %741 = vmatprep.mubr.f32.mxu0 0.0
    %742 = vmatmul.mubr.f32.gmra.mxu0 %v644
    %v743 = vpop.f32.mrf.mxu0
    %v744 = vadd.f32 %v615, %v743
    %v745 = vpop.f32.mrf.mxu0
    %746 = vmatprep.mubr.f32.mxu0 0.0
    %747 = vmatmul.mubr.f32.gmra.mxu0 %v647
    %v748 = vpop.f32.mrf.mxu0
    %v749 = vadd.f32 %v620, %v748
    %v750 = vpop.f32.mrf.mxu0
    %751 = vmatprep.mubr.f32.mxu0 0.0
    %752 = vmatmul.mubr.f32.gmra.mxu0 %v650
    %v753 = vpop.f32.mrf.mxu0
    %v754 = vadd.f32 %v625, %v753
    %v755 = vpop.f32.mrf.mxu0
    %756 = vdwg.mxu0
    %v757 = vlaneseq
    %v758 = vshrl.u32 %v757, 7
    %v759 = vsub.s32 3, %v758
    %v760 = vrot.slane %v76, %v759
    %v761 = vadd.f32 %v719, %v760
    %v762 = vadd.f32 %v724, %v760
    %v763 = vadd.f32 %v729, %v760
    %v764 = vadd.f32 %v734, %v760
    %v765 = vadd.f32 %v739, %v760
    %v766 = vadd.f32 %v744, %v760
    %v767 = vadd.f32 %v749, %v760
    %v768 = vadd.f32 %v754, %v760
    %v769 = vlaneseq
    %v770 = vand.u32 %v769, 127
    %vm771 = vcmp.lt.s32.totalorder %v770, 0
    %v772 = vsub.s32 0, %v770
    %v773 = vsel %vm771, %v772, %v770
    %v774 = vshrl.u32 %v773, 5
    %v775 = vand.u32 %v773, 31
    %v776 = vsub.s32 0, %v775
    %v777 = vsel %vm771, %v776, %v775
    %vm778 = vcmp.ne.s32.totalorder %v777, 0
    %vm779 = vcmp.lt.s32.totalorder %v777, 0
    %vm780 = vmand %vm779, %vm778
    %v781 = vadd.s32 %v777, 32
    %v782 = vsel %vm780, %v781, %v777
    %vm783 = vcmp.lt.s32.totalorder %v782, 16
    %vm784 = vcmp.ge.s32.totalorder %v770, 64
    %vm785 = vcmp.lt.s32.totalorder %v770, 96
    %vm786 = vmand %vm784, %vm785
    %v787 = vsel %vm783, 1, 0
    %vm788 = vcmp.eq.s32.totalorder %v787, 1
    %v789 = vsel %vm788, %v761, %v768
    %v790 = vsel %vm788, %v762, %v767
    %v791 = vsel %vm788, %v763, %v766
    %v792 = vsel %vm788, %v764, %v765
    %v793 = vsel %vm788, %v765, %v764
    %v794 = vsel %vm788, %v766, %v763
    %v795 = vsel %vm788, %v767, %v762
    %v796 = vsel %vm788, %v768, %v761
    %v798 = vsel %vm165, 0.0, 0
    %800 = vmatprep.subr.mxu0 0.0
    %801 = vmatpush1.msra.mxu0 0.0
    %802 = vmatprep.subr.mxu0 0.0
    %803 = vmatpush1.msra.mxu0 0.0
    %804 = vmatprep.subr.mxu0 0.0
    %805 = vmatpush1.msra.mxu0 0.0
    %806 = vmatprep.subr.mxu0 0.0
    %807 = vmatpush1.msra.mxu0 0.0
    %808 = vmatprep.subr.mxu0 0.0
    %809 = vmatpush1.msra.mxu0 0.0
    %810 = vmatprep.subr.mxu0 0.0
    %811 = vmatpush1.msra.mxu0 0.0
    %812 = vmatprep.subr.mxu0 0.0
    %813 = vmatpush1.msra.mxu0 0.0
    %814 = vmatprep.subr.mxu0 0.0
    %815 = vmatpush1.msra.mxu0 0.0
    %816 = vmatprep.subr.mxu0 0.0
    %817 = vmatpush1.msra.mxu0 0.0
    %818 = vmatprep.subr.mxu0 0.0
    %819 = vmatpush1.msra.mxu0 0.0
    %820 = vmatprep.subr.mxu0 0.0
    %821 = vmatpush1.msra.mxu0 0.0
    %822 = vmatprep.subr.mxu0 0.0
    %823 = vmatpush1.msra.mxu0 0.0
    %824 = vmatprep.subr.mxu0 0.0
    %825 = vmatpush1.msra.mxu0 %v59
    %826 = vmatprep.subr.mxu0 0.0
    %827 = vmatpush1.msra.mxu0 %v58
    %828 = vmatprep.subr.mxu0 0.0
    %829 = vmatpush1.msra.mxu0 %v57
    %830 = vmatprep.subr.mxu0 0.0
    %831 = vmatpush1.msra.mxu0 %v56
    %832 = vmatprep.subr.mxu0 0.0
    %833 = vmatpush2.msra.mxu0 0.0
    %834 = vmatprep.subr.mxu0 0.0
    %835 = vmatpush2.msra.mxu0 0.0
    %836 = vmatprep.subr.mxu0 0.0
    %837 = vmatpush2.msra.mxu0 0.0
    %838 = vmatprep.subr.mxu0 0.0
    %839 = vmatpush2.msra.mxu0 0.0
    %840 = vmatprep.subr.mxu0 0.0
    %841 = vmatpush2.msra.mxu0 0.0
    %842 = vmatprep.subr.mxu0 0.0
    %843 = vmatpush2.msra.mxu0 0.0
    %844 = vmatprep.subr.mxu0 0.0
    %845 = vmatpush2.msra.mxu0 0.0
    %846 = vmatprep.subr.mxu0 0.0
    %847 = vmatpush2.msra.mxu0 0.0
    %848 = vmatprep.subr.mxu0 0.0
    %849 = vmatpush2.msra.mxu0 0.0
    %850 = vmatprep.subr.mxu0 0.0
    %851 = vmatpush2.msra.mxu0 0.0
    %852 = vmatprep.subr.mxu0 0.0
    %853 = vmatpush2.msra.mxu0 0.0
    %854 = vmatprep.subr.mxu0 0.0
    %855 = vmatpush2.msra.mxu0 0.0
    %856 = vmatprep.subr.mxu0 0.0
    %857 = vmatpush2.msra.mxu0 0.0
    %858 = vmatprep.subr.mxu0 0.0
    %859 = vmatpush2.msra.mxu0 0.0
    %860 = vmatprep.subr.mxu0 0.0
    %861 = vmatpush2.msra.mxu0 0.0
    %862 = vmatprep.subr.mxu0 0.0
    %863 = vmatpush2.msra.mxu0 0.0
    %864 = vmatprep.mubr.f32.mxu0 0.0
    %865 = vmatmul.mubr.f32.gmra.mxu0 %v798
    %v866 = vpop.f32.mrf.mxu0
    %v867 = vadd.f32 0.0, %v866
    %v868 = vpop.f32.mrf.mxu0
    %869 = vdwg.mxu0
    %v870 = vadd.f32 %v789, %v867
    %v871 = vtanh.pop %v870
    %v872 = vxor.u32 %v870, 2147483648
    %v873 = vmul.f32 %v872, 1.442695
    %v874 = vpow.pop %v873
    %v875 = vadd.f32 %v874, 1.0
    %v876 = vrcp.pop %v875
    %v877 = vmul.f32 1.0, %v876
    %v878 = vsel %vm786, 1, 0
    %vm879 = vcmp.eq.s32.totalorder %v878, 1
    %v880 = vsel %vm879, %v871, %v877
    %v881 = vmul.f32 %v880, 0.0
    %883 = vrot.lane.b32.xlu0 %v880, 64
    %v884 = vpop.permute.xlu0 %883
    %v886 = vmul.f32 %v880, %v884
    %888 = vrot.lane.b32.xlu0 %v886, 32
    %v889 = vpop.permute.xlu0 %888
    %v891 = vadd.f32 %v881, %v889
    %v892 = vtanh.pop %v891
    %894 = vrot.lane.b32.xlu0 %v892, 64
    %v895 = vpop.permute.xlu0 %894
    %v897 = vmul.f32 %v880, %v895
    %899 = vrot.lane.b32.xlu0 %v897, 32
    %v900 = vpop.permute.xlu0 %899
    %902 = vst.msk [vmem:[#allocation2] sm:$0xff] %vm165, %v900
    %v903 = vsel %vm165, %v900, 0
    %905 = vmatprep.subr.mxu0 0.0
    %906 = vmatpush1.msra.mxu0 0.0
    %907 = vmatprep.subr.mxu0 0.0
    %908 = vmatpush1.msra.mxu0 0.0
    %909 = vmatprep.subr.mxu0 0.0
    %910 = vmatpush1.msra.mxu0 0.0
    %911 = vmatprep.subr.mxu0 0.0
    %912 = vmatpush1.msra.mxu0 0.0
    %913 = vmatprep.subr.mxu0 0.0
    %914 = vmatpush1.msra.mxu0 0.0
    %915 = vmatprep.subr.mxu0 0.0
    %916 = vmatpush1.msra.mxu0 0.0
    %917 = vmatprep.subr.mxu0 0.0
    %918 = vmatpush1.msra.mxu0 0.0
    %919 = vmatprep.subr.mxu0 0.0
    %920 = vmatpush1.msra.mxu0 0.0
    %921 = vmatprep.subr.mxu0 0.0
    %922 = vmatpush1.msra.mxu0 0.0
    %923 = vmatprep.subr.mxu0 0.0
    %924 = vmatpush1.msra.mxu0 0.0
    %925 = vmatprep.subr.mxu0 0.0
    %926 = vmatpush1.msra.mxu0 0.0
    %927 = vmatprep.subr.mxu0 0.0
    %928 = vmatpush1.msra.mxu0 0.0
    %929 = vmatprep.subr.mxu0 0.0
    %930 = vmatpush1.msra.mxu0 %v59
    %931 = vmatprep.subr.mxu0 0.0
    %932 = vmatpush1.msra.mxu0 %v58
    %933 = vmatprep.subr.mxu0 0.0
    %934 = vmatpush1.msra.mxu0 %v57
    %935 = vmatprep.subr.mxu0 0.0
    %936 = vmatpush1.msra.mxu0 %v56
    %937 = vmatprep.subr.mxu0 0.0
    %938 = vmatpush2.msra.mxu0 0.0
    %939 = vmatprep.subr.mxu0 0.0
    %940 = vmatpush2.msra.mxu0 0.0
    %941 = vmatprep.subr.mxu0 0.0
    %942 = vmatpush2.msra.mxu0 0.0
    %943 = vmatprep.subr.mxu0 0.0
    %944 = vmatpush2.msra.mxu0 0.0
    %945 = vmatprep.subr.mxu0 0.0
    %946 = vmatpush2.msra.mxu0 0.0
    %947 = vmatprep.subr.mxu0 0.0
    %948 = vmatpush2.msra.mxu0 0.0
    %949 = vmatprep.subr.mxu0 0.0
    %950 = vmatpush2.msra.mxu0 0.0
    %951 = vmatprep.subr.mxu0 0.0
    %952 = vmatpush2.msra.mxu0 0.0
    %953 = vmatprep.subr.mxu0 0.0
    %954 = vmatpush2.msra.mxu0 0.0
    %955 = vmatprep.subr.mxu0 0.0
    %956 = vmatpush2.msra.mxu0 0.0
    %957 = vmatprep.subr.mxu0 0.0
    %958 = vmatpush2.msra.mxu0 0.0
    %959 = vmatprep.subr.mxu0 0.0
    %960 = vmatpush2.msra.mxu0 0.0
    %961 = vmatprep.subr.mxu0 0.0
    %962 = vmatpush2.msra.mxu0 0.0
    %963 = vmatprep.subr.mxu0 0.0
    %964 = vmatpush2.msra.mxu0 0.0
    %965 = vmatprep.subr.mxu0 0.0
    %966 = vmatpush2.msra.mxu0 0.0
    %967 = vmatprep.subr.mxu0 0.0
    %968 = vmatpush2.msra.mxu0 0.0
    %969 = vmatprep.mubr.f32.mxu0 0.0
    %970 = vmatmul.mubr.f32.gmra.mxu0 %v903
    %v971 = vpop.f32.mrf.mxu0
    %v972 = vadd.f32 0.0, %v971
    %v973 = vpop.f32.mrf.mxu0
    %974 = vdwg.mxu0
    %v975 = vadd.f32 %v790, %v972
    %v976 = vtanh.pop %v975
    %v977 = vxor.u32 %v975, 2147483648
    %v978 = vmul.f32 %v977, 1.442695
    %v979 = vpow.pop %v978
    %v980 = vadd.f32 %v979, 1.0
    %v981 = vrcp.pop %v980
    %v982 = vmul.f32 1.0, %v981
    %v983 = vsel %vm879, %v976, %v982
    %v984 = vmul.f32 %v983, %v891
    %986 = vrot.lane.b32.xlu0 %v983, 64
    %v987 = vpop.permute.xlu0 %986
    %v989 = vmul.f32 %v983, %v987
    %991 = vrot.lane.b32.xlu0 %v989, 32
    %v992 = vpop.permute.xlu0 %991
    %v994 = vadd.f32 %v984, %v992
    %v995 = vtanh.pop %v994
    %997 = vrot.lane.b32.xlu0 %v995, 64
    %v998 = vpop.permute.xlu0 %997
    %v1000 = vmul.f32 %v983, %v998
    %1002 = vrot.lane.b32.xlu0 %v1000, 32
    %v1003 = vpop.permute.xlu0 %1002
    %1005 = vst.msk [vmem:[#allocation2 + $0x8] sm:$0xff] %vm165, %v1003
    %v1006 = vsel %vm165, %v1003, 0
    %1008 = vmatprep.subr.mxu0 0.0
    %1009 = vmatpush1.msra.mxu0 0.0
    %1010 = vmatprep.subr.mxu0 0.0
    %1011 = vmatpush1.msra.mxu0 0.0
    %1012 = vmatprep.subr.mxu0 0.0
    %1013 = vmatpush1.msra.mxu0 0.0
    %1014 = vmatprep.subr.mxu0 0.0
    %1015 = vmatpush1.msra.mxu0 0.0
    %1016 = vmatprep.subr.mxu0 0.0
    %1017 = vmatpush1.msra.mxu0 0.0
    %1018 = vmatprep.subr.mxu0 0.0
    %1019 = vmatpush1.msra.mxu0 0.0
    %1020 = vmatprep.subr.mxu0 0.0
    %1021 = vmatpush1.msra.mxu0 0.0
    %1022 = vmatprep.subr.mxu0 0.0
    %1023 = vmatpush1.msra.mxu0 0.0
    %1024 = vmatprep.subr.mxu0 0.0
    %1025 = vmatpush1.msra.mxu0 0.0
    %1026 = vmatprep.subr.mxu0 0.0
    %1027 = vmatpush1.msra.mxu0 0.0
    %1028 = vmatprep.subr.mxu0 0.0
    %1029 = vmatpush1.msra.mxu0 0.0
    %1030 = vmatprep.subr.mxu0 0.0
    %1031 = vmatpush1.msra.mxu0 0.0
    %1032 = vmatprep.subr.mxu0 0.0
    %1033 = vmatpush1.msra.mxu0 %v59
    %1034 = vmatprep.subr.mxu0 0.0
    %1035 = vmatpush1.msra.mxu0 %v58
    %1036 = vmatprep.subr.mxu0 0.0
    %1037 = vmatpush1.msra.mxu0 %v57
    %1038 = vmatprep.subr.mxu0 0.0
    %1039 = vmatpush1.msra.mxu0 %v56
    %1040 = vmatprep.subr.mxu0 0.0
    %1041 = vmatpush2.msra.mxu0 0.0
    %1042 = vmatprep.subr.mxu0 0.0
    %1043 = vmatpush2.msra.mxu0 0.0
    %1044 = vmatprep.subr.mxu0 0.0
    %1045 = vmatpush2.msra.mxu0 0.0
    %1046 = vmatprep.subr.mxu0 0.0
    %1047 = vmatpush2.msra.mxu0 0.0
    %1048 = vmatprep.subr.mxu0 0.0
    %1049 = vmatpush2.msra.mxu0 0.0
    %1050 = vmatprep.subr.mxu0 0.0
    %1051 = vmatpush2.msra.mxu0 0.0
    %1052 = vmatprep.subr.mxu0 0.0
    %1053 = vmatpush2.msra.mxu0 0.0
    %1054 = vmatprep.subr.mxu0 0.0
    %1055 = vmatpush2.msra.mxu0 0.0
    %1056 = vmatprep.subr.mxu0 0.0
    %1057 = vmatpush2.msra.mxu0 0.0
    %1058 = vmatprep.subr.mxu0 0.0
    %1059 = vmatpush2.msra.mxu0 0.0
    %1060 = vmatprep.subr.mxu0 0.0
    %1061 = vmatpush2.msra.mxu0 0.0
    %1062 = vmatprep.subr.mxu0 0.0
    %1063 = vmatpush2.msra.mxu0 0.0
    %1064 = vmatprep.subr.mxu0 0.0
    %1065 = vmatpush2.msra.mxu0 0.0
    %1066 = vmatprep.subr.mxu0 0.0
    %1067 = vmatpush2.msra.mxu0 0.0
    %1068 = vmatprep.subr.mxu0 0.0
    %1069 = vmatpush2.msra.mxu0 0.0
    %1070 = vmatprep.subr.mxu0 0.0
    %1071 = vmatpush2.msra.mxu0 0.0
    %1072 = vmatprep.mubr.f32.mxu0 0.0
    %1073 = vmatmul.mubr.f32.gmra.mxu0 %v1006
    %v1074 = vpop.f32.mrf.mxu0
    %v1075 = vadd.f32 0.0, %v1074
    %v1076 = vpop.f32.mrf.mxu0
    %1077 = vdwg.mxu0
    %v1078 = vadd.f32 %v791, %v1075
    %v1079 = vtanh.pop %v1078
    %v1080 = vxor.u32 %v1078, 2147483648
    %v1081 = vmul.f32 %v1080, 1.442695
    %v1082 = vpow.pop %v1081
    %v1083 = vadd.f32 %v1082, 1.0
    %v1084 = vrcp.pop %v1083
    %v1085 = vmul.f32 1.0, %v1084
    %v1086 = vsel %vm879, %v1079, %v1085
    %v1087 = vmul.f32 %v1086, %v994
    %1089 = vrot.lane.b32.xlu0 %v1086, 64
    %v1090 = vpop.permute.xlu0 %1089
    %v1092 = vmul.f32 %v1086, %v1090
    %1094 = vrot.lane.b32.xlu0 %v1092, 32
    %v1095 = vpop.permute.xlu0 %1094
    %v1097 = vadd.f32 %v1087, %v1095
    %v1098 = vtanh.pop %v1097
    %1100 = vrot.lane.b32.xlu0 %v1098, 64
    %v1101 = vpop.permute.xlu0 %1100
    %v1103 = vmul.f32 %v1086, %v1101
    %1105 = vrot.lane.b32.xlu0 %v1103, 32
    %v1106 = vpop.permute.xlu0 %1105
    %1108 = vst.msk [vmem:[#allocation2 + $0x10] sm:$0xff] %vm165, %v1106
    %v1109 = vsel %vm165, %v1106, 0
    %1111 = vmatprep.subr.mxu0 0.0
    %1112 = vmatpush1.msra.mxu0 0.0
    %1113 = vmatprep.subr.mxu0 0.0
    %1114 = vmatpush1.msra.mxu0 0.0
    %1115 = vmatprep.subr.mxu0 0.0
    %1116 = vmatpush1.msra.mxu0 0.0
    %1117 = vmatprep.subr.mxu0 0.0
    %1118 = vmatpush1.msra.mxu0 0.0
    %1119 = vmatprep.subr.mxu0 0.0
    %1120 = vmatpush1.msra.mxu0 0.0
    %1121 = vmatprep.subr.mxu0 0.0
    %1122 = vmatpush1.msra.mxu0 0.0
    %1123 = vmatprep.subr.mxu0 0.0
    %1124 = vmatpush1.msra.mxu0 0.0
    %1125 = vmatprep.subr.mxu0 0.0
    %1126 = vmatpush1.msra.mxu0 0.0
    %1127 = vmatprep.subr.mxu0 0.0
    %1128 = vmatpush1.msra.mxu0 0.0
    %1129 = vmatprep.subr.mxu0 0.0
    %1130 = vmatpush1.msra.mxu0 0.0
    %1131 = vmatprep.subr.mxu0 0.0
    %1132 = vmatpush1.msra.mxu0 0.0
    %1133 = vmatprep.subr.mxu0 0.0
    %1134 = vmatpush1.msra.mxu0 0.0
    %1135 = vmatprep.subr.mxu0 0.0
    %1136 = vmatpush1.msra.mxu0 %v59
    %1137 = vmatprep.subr.mxu0 0.0
    %1138 = vmatpush1.msra.mxu0 %v58
    %1139 = vmatprep.subr.mxu0 0.0
    %1140 = vmatpush1.msra.mxu0 %v57
    %1141 = vmatprep.subr.mxu0 0.0
    %1142 = vmatpush1.msra.mxu0 %v56
    %1143 = vmatprep.subr.mxu0 0.0
    %1144 = vmatpush2.msra.mxu0 0.0
    %1145 = vmatprep.subr.mxu0 0.0
    %1146 = vmatpush2.msra.mxu0 0.0
    %1147 = vmatprep.subr.mxu0 0.0
    %1148 = vmatpush2.msra.mxu0 0.0
    %1149 = vmatprep.subr.mxu0 0.0
    %1150 = vmatpush2.msra.mxu0 0.0
    %1151 = vmatprep.subr.mxu0 0.0
    %1152 = vmatpush2.msra.mxu0 0.0
    %1153 = vmatprep.subr.mxu0 0.0
    %1154 = vmatpush2.msra.mxu0 0.0
    %1155 = vmatprep.subr.mxu0 0.0
    %1156 = vmatpush2.msra.mxu0 0.0
    %1157 = vmatprep.subr.mxu0 0.0
    %1158 = vmatpush2.msra.mxu0 0.0
    %1159 = vmatprep.subr.mxu0 0.0
    %1160 = vmatpush2.msra.mxu0 0.0
    %1161 = vmatprep.subr.mxu0 0.0
    %1162 = vmatpush2.msra.mxu0 0.0
    %1163 = vmatprep.subr.mxu0 0.0
    %1164 = vmatpush2.msra.mxu0 0.0
    %1165 = vmatprep.subr.mxu0 0.0
    %1166 = vmatpush2.msra.mxu0 0.0
    %1167 = vmatprep.subr.mxu0 0.0
    %1168 = vmatpush2.msra.mxu0 0.0
    %1169 = vmatprep.subr.mxu0 0.0
    %1170 = vmatpush2.msra.mxu0 0.0
    %1171 = vmatprep.subr.mxu0 0.0
    %1172 = vmatpush2.msra.mxu0 0.0
    %1173 = vmatprep.subr.mxu0 0.0
    %1174 = vmatpush2.msra.mxu0 0.0
    %1175 = vmatprep.mubr.f32.mxu0 0.0
    %1176 = vmatmul.mubr.f32.gmra.mxu0 %v1109
    %v1177 = vpop.f32.mrf.mxu0
    %v1178 = vadd.f32 0.0, %v1177
    %v1179 = vpop.f32.mrf.mxu0
    %1180 = vdwg.mxu0
    %v1181 = vadd.f32 %v792, %v1178
    %v1182 = vtanh.pop %v1181
    %v1183 = vxor.u32 %v1181, 2147483648
    %v1184 = vmul.f32 %v1183, 1.442695
    %v1185 = vpow.pop %v1184
    %v1186 = vadd.f32 %v1185, 1.0
    %v1187 = vrcp.pop %v1186
    %v1188 = vmul.f32 1.0, %v1187
    %v1189 = vsel %vm879, %v1182, %v1188
    %v1190 = vmul.f32 %v1189, %v1097
    %1192 = vrot.lane.b32.xlu0 %v1189, 64
    %v1193 = vpop.permute.xlu0 %1192
    %v1195 = vmul.f32 %v1189, %v1193
    %1197 = vrot.lane.b32.xlu0 %v1195, 32
    %v1198 = vpop.permute.xlu0 %1197
    %v1200 = vadd.f32 %v1190, %v1198
    %v1201 = vtanh.pop %v1200
    %1203 = vrot.lane.b32.xlu0 %v1201, 64
    %v1204 = vpop.permute.xlu0 %1203
    %v1206 = vmul.f32 %v1189, %v1204
    %1208 = vrot.lane.b32.xlu0 %v1206, 32
    %v1209 = vpop.permute.xlu0 %1208
    %1211 = vst.msk [vmem:[#allocation2 + $0x18] sm:$0xff] %vm165, %v1209
    %v1212 = vsel %vm165, %v1209, 0
    %1214 = vmatprep.subr.mxu0 0.0
    %1215 = vmatpush1.msra.mxu0 0.0
    %1216 = vmatprep.subr.mxu0 0.0
    %1217 = vmatpush1.msra.mxu0 0.0
    %1218 = vmatprep.subr.mxu0 0.0
    %1219 = vmatpush1.msra.mxu0 0.0
    %1220 = vmatprep.subr.mxu0 0.0
    %1221 = vmatpush1.msra.mxu0 0.0
    %1222 = vmatprep.subr.mxu0 0.0
    %1223 = vmatpush1.msra.mxu0 0.0
    %1224 = vmatprep.subr.mxu0 0.0
    %1225 = vmatpush1.msra.mxu0 0.0
    %1226 = vmatprep.subr.mxu0 0.0
    %1227 = vmatpush1.msra.mxu0 0.0
    %1228 = vmatprep.subr.mxu0 0.0
    %1229 = vmatpush1.msra.mxu0 0.0
    %1230 = vmatprep.subr.mxu0 0.0
    %1231 = vmatpush1.msra.mxu0 0.0
    %1232 = vmatprep.subr.mxu0 0.0
    %1233 = vmatpush1.msra.mxu0 0.0
    %1234 = vmatprep.subr.mxu0 0.0
    %1235 = vmatpush1.msra.mxu0 0.0
    %1236 = vmatprep.subr.mxu0 0.0
    %1237 = vmatpush1.msra.mxu0 0.0
    %1238 = vmatprep.subr.mxu0 0.0
    %1239 = vmatpush1.msra.mxu0 %v59
    %1240 = vmatprep.subr.mxu0 0.0
    %1241 = vmatpush1.msra.mxu0 %v58
    %1242 = vmatprep.subr.mxu0 0.0
    %1243 = vmatpush1.msra.mxu0 %v57
    %1244 = vmatprep.subr.mxu0 0.0
    %1245 = vmatpush1.msra.mxu0 %v56
    %1246 = vmatprep.subr.mxu0 0.0
    %1247 = vmatpush2.msra.mxu0 0.0
    %1248 = vmatprep.subr.mxu0 0.0
    %1249 = vmatpush2.msra.mxu0 0.0
    %1250 = vmatprep.subr.mxu0 0.0
    %1251 = vmatpush2.msra.mxu0 0.0
    %1252 = vmatprep.subr.mxu0 0.0
    %1253 = vmatpush2.msra.mxu0 0.0
    %1254 = vmatprep.subr.mxu0 0.0
    %1255 = vmatpush2.msra.mxu0 0.0
    %1256 = vmatprep.subr.mxu0 0.0
    %1257 = vmatpush2.msra.mxu0 0.0
    %1258 = vmatprep.subr.mxu0 0.0
    %1259 = vmatpush2.msra.mxu0 0.0
    %1260 = vmatprep.subr.mxu0 0.0
    %1261 = vmatpush2.msra.mxu0 0.0
    %1262 = vmatprep.subr.mxu0 0.0
    %1263 = vmatpush2.msra.mxu0 0.0
    %1264 = vmatprep.subr.mxu0 0.0
    %1265 = vmatpush2.msra.mxu0 0.0
    %1266 = vmatprep.subr.mxu0 0.0
    %1267 = vmatpush2.msra.mxu0 0.0
    %1268 = vmatprep.subr.mxu0 0.0
    %1269 = vmatpush2.msra.mxu0 0.0
    %1270 = vmatprep.subr.mxu0 0.0
    %1271 = vmatpush2.msra.mxu0 0.0
    %1272 = vmatprep.subr.mxu0 0.0
    %1273 = vmatpush2.msra.mxu0 0.0
    %1274 = vmatprep.subr.mxu0 0.0
    %1275 = vmatpush2.msra.mxu0 0.0
    %1276 = vmatprep.subr.mxu0 0.0
    %1277 = vmatpush2.msra.mxu0 0.0
    %1278 = vmatprep.mubr.f32.mxu0 0.0
    %1279 = vmatmul.mubr.f32.gmra.mxu0 %v1212
    %v1280 = vpop.f32.mrf.mxu0
    %v1281 = vadd.f32 0.0, %v1280
    %v1282 = vpop.f32.mrf.mxu0
    %1283 = vdwg.mxu0
    %v1284 = vadd.f32 %v793, %v1281
    %v1285 = vtanh.pop %v1284
    %v1286 = vxor.u32 %v1284, 2147483648
    %v1287 = vmul.f32 %v1286, 1.442695
    %v1288 = vpow.pop %v1287
    %v1289 = vadd.f32 %v1288, 1.0
    %v1290 = vrcp.pop %v1289
    %v1291 = vmul.f32 1.0, %v1290
    %v1292 = vsel %vm879, %v1285, %v1291
    %v1293 = vmul.f32 %v1292, %v1200
    %1295 = vrot.lane.b32.xlu0 %v1292, 64
    %v1296 = vpop.permute.xlu0 %1295
    %v1298 = vmul.f32 %v1292, %v1296
    %1300 = vrot.lane.b32.xlu0 %v1298, 32
    %v1301 = vpop.permute.xlu0 %1300
    %v1303 = vadd.f32 %v1293, %v1301
    %v1304 = vtanh.pop %v1303
    %1306 = vrot.lane.b32.xlu0 %v1304, 64
    %v1307 = vpop.permute.xlu0 %1306
    %v1309 = vmul.f32 %v1292, %v1307
    %1311 = vrot.lane.b32.xlu0 %v1309, 32
    %v1312 = vpop.permute.xlu0 %1311
    %1314 = vst.msk [vmem:[#allocation2 + $0x20] sm:$0xff] %vm165, %v1312
    %v1315 = vsel %vm165, %v1312, 0
    %1317 = vmatprep.subr.mxu0 0.0
    %1318 = vmatpush1.msra.mxu0 0.0
    %1319 = vmatprep.subr.mxu0 0.0
    %1320 = vmatpush1.msra.mxu0 0.0
    %1321 = vmatprep.subr.mxu0 0.0
    %1322 = vmatpush1.msra.mxu0 0.0
    %1323 = vmatprep.subr.mxu0 0.0
    %1324 = vmatpush1.msra.mxu0 0.0
    %1325 = vmatprep.subr.mxu0 0.0
    %1326 = vmatpush1.msra.mxu0 0.0
    %1327 = vmatprep.subr.mxu0 0.0
    %1328 = vmatpush1.msra.mxu0 0.0
    %1329 = vmatprep.subr.mxu0 0.0
    %1330 = vmatpush1.msra.mxu0 0.0
    %1331 = vmatprep.subr.mxu0 0.0
    %1332 = vmatpush1.msra.mxu0 0.0
    %1333 = vmatprep.subr.mxu0 0.0
    %1334 = vmatpush1.msra.mxu0 0.0
    %1335 = vmatprep.subr.mxu0 0.0
    %1336 = vmatpush1.msra.mxu0 0.0
    %1337 = vmatprep.subr.mxu0 0.0
    %1338 = vmatpush1.msra.mxu0 0.0
    %1339 = vmatprep.subr.mxu0 0.0
    %1340 = vmatpush1.msra.mxu0 0.0
    %1341 = vmatprep.subr.mxu0 0.0
    %1342 = vmatpush1.msra.mxu0 %v59
    %1343 = vmatprep.subr.mxu0 0.0
    %1344 = vmatpush1.msra.mxu0 %v58
    %1345 = vmatprep.subr.mxu0 0.0
    %1346 = vmatpush1.msra.mxu0 %v57
    %1347 = vmatprep.subr.mxu0 0.0
    %1348 = vmatpush1.msra.mxu0 %v56
    %1349 = vmatprep.subr.mxu0 0.0
    %1350 = vmatpush2.msra.mxu0 0.0
    %1351 = vmatprep.subr.mxu0 0.0
    %1352 = vmatpush2.msra.mxu0 0.0
    %1353 = vmatprep.subr.mxu0 0.0
    %1354 = vmatpush2.msra.mxu0 0.0
    %1355 = vmatprep.subr.mxu0 0.0
    %1356 = vmatpush2.msra.mxu0 0.0
    %1357 = vmatprep.subr.mxu0 0.0
    %1358 = vmatpush2.msra.mxu0 0.0
    %1359 = vmatprep.subr.mxu0 0.0
    %1360 = vmatpush2.msra.mxu0 0.0
    %1361 = vmatprep.subr.mxu0 0.0
    %1362 = vmatpush2.msra.mxu0 0.0
    %1363 = vmatprep.subr.mxu0 0.0
    %1364 = vmatpush2.msra.mxu0 0.0
    %1365 = vmatprep.subr.mxu0 0.0
    %1366 = vmatpush2.msra.mxu0 0.0
    %1367 = vmatprep.subr.mxu0 0.0
    %1368 = vmatpush2.msra.mxu0 0.0
    %1369 = vmatprep.subr.mxu0 0.0
    %1370 = vmatpush2.msra.mxu0 0.0
    %1371 = vmatprep.subr.mxu0 0.0
    %1372 = vmatpush2.msra.mxu0 0.0
    %1373 = vmatprep.subr.mxu0 0.0
    %1374 = vmatpush2.msra.mxu0 0.0
    %1375 = vmatprep.subr.mxu0 0.0
    %1376 = vmatpush2.msra.mxu0 0.0
    %1377 = vmatprep.subr.mxu0 0.0
    %1378 = vmatpush2.msra.mxu0 0.0
    %1379 = vmatprep.subr.mxu0 0.0
    %1380 = vmatpush2.msra.mxu0 0.0
    %1381 = vmatprep.mubr.f32.mxu0 0.0
    %1382 = vmatmul.mubr.f32.gmra.mxu0 %v1315
    %v1383 = vpop.f32.mrf.mxu0
    %v1384 = vadd.f32 0.0, %v1383
    %v1385 = vpop.f32.mrf.mxu0
    %1386 = vdwg.mxu0
    %v1387 = vadd.f32 %v794, %v1384
    %v1388 = vtanh.pop %v1387
    %v1389 = vxor.u32 %v1387, 2147483648
    %v1390 = vmul.f32 %v1389, 1.442695
    %v1391 = vpow.pop %v1390
    %v1392 = vadd.f32 %v1391, 1.0
    %v1393 = vrcp.pop %v1392
    %v1394 = vmul.f32 1.0, %v1393
    %v1395 = vsel %vm879, %v1388, %v1394
    %v1396 = vmul.f32 %v1395, %v1303
    %1398 = vrot.lane.b32.xlu0 %v1395, 64
    %v1399 = vpop.permute.xlu0 %1398
    %v1401 = vmul.f32 %v1395, %v1399
    %1403 = vrot.lane.b32.xlu0 %v1401, 32
    %v1404 = vpop.permute.xlu0 %1403
    %v1406 = vadd.f32 %v1396, %v1404
    %v1407 = vtanh.pop %v1406
    %1409 = vrot.lane.b32.xlu0 %v1407, 64
    %v1410 = vpop.permute.xlu0 %1409
    %v1412 = vmul.f32 %v1395, %v1410
    %1414 = vrot.lane.b32.xlu0 %v1412, 32
    %v1415 = vpop.permute.xlu0 %1414
    %1417 = vst.msk [vmem:[#allocation2 + $0x28] sm:$0xff] %vm165, %v1415
    %v1418 = vsel %vm165, %v1415, 0
    %1420 = vmatprep.subr.mxu0 0.0
    %1421 = vmatpush1.msra.mxu0 0.0
    %1422 = vmatprep.subr.mxu0 0.0
    %1423 = vmatpush1.msra.mxu0 0.0
    %1424 = vmatprep.subr.mxu0 0.0
    %1425 = vmatpush1.msra.mxu0 0.0
    %1426 = vmatprep.subr.mxu0 0.0
    %1427 = vmatpush1.msra.mxu0 0.0
    %1428 = vmatprep.subr.mxu0 0.0
    %1429 = vmatpush1.msra.mxu0 0.0
    %1430 = vmatprep.subr.mxu0 0.0
    %1431 = vmatpush1.msra.mxu0 0.0
    %1432 = vmatprep.subr.mxu0 0.0
    %1433 = vmatpush1.msra.mxu0 0.0
    %1434 = vmatprep.subr.mxu0 0.0
    %1435 = vmatpush1.msra.mxu0 0.0
    %1436 = vmatprep.subr.mxu0 0.0
    %1437 = vmatpush1.msra.mxu0 0.0
    %1438 = vmatprep.subr.mxu0 0.0
    %1439 = vmatpush1.msra.mxu0 0.0
    %1440 = vmatprep.subr.mxu0 0.0
    %1441 = vmatpush1.msra.mxu0 0.0
    %1442 = vmatprep.subr.mxu0 0.0
    %1443 = vmatpush1.msra.mxu0 0.0
    %1444 = vmatprep.subr.mxu0 0.0
    %1445 = vmatpush1.msra.mxu0 %v59
    %1446 = vmatprep.subr.mxu0 0.0
    %1447 = vmatpush1.msra.mxu0 %v58
    %1448 = vmatprep.subr.mxu0 0.0
    %1449 = vmatpush1.msra.mxu0 %v57
    %1450 = vmatprep.subr.mxu0 0.0
    %1451 = vmatpush1.msra.mxu0 %v56
    %1452 = vmatprep.subr.mxu0 0.0
    %1453 = vmatpush2.msra.mxu0 0.0
    %1454 = vmatprep.subr.mxu0 0.0
    %1455 = vmatpush2.msra.mxu0 0.0
    %1456 = vmatprep.subr.mxu0 0.0
    %1457 = vmatpush2.msra.mxu0 0.0
    %1458 = vmatprep.subr.mxu0 0.0
    %1459 = vmatpush2.msra.mxu0 0.0
    %1460 = vmatprep.subr.mxu0 0.0
    %1461 = vmatpush2.msra.mxu0 0.0
    %1462 = vmatprep.subr.mxu0 0.0
    %1463 = vmatpush2.msra.mxu0 0.0
    %1464 = vmatprep.subr.mxu0 0.0
    %1465 = vmatpush2.msra.mxu0 0.0
    %1466 = vmatprep.subr.mxu0 0.0
    %1467 = vmatpush2.msra.mxu0 0.0
    %1468 = vmatprep.subr.mxu0 0.0
    %1469 = vmatpush2.msra.mxu0 0.0
    %1470 = vmatprep.subr.mxu0 0.0
    %1471 = vmatpush2.msra.mxu0 0.0
    %1472 = vmatprep.subr.mxu0 0.0
    %1473 = vmatpush2.msra.mxu0 0.0
    %1474 = vmatprep.subr.mxu0 0.0
    %1475 = vmatpush2.msra.mxu0 0.0
    %1476 = vmatprep.subr.mxu0 0.0
    %1477 = vmatpush2.msra.mxu0 0.0
    %1478 = vmatprep.subr.mxu0 0.0
    %1479 = vmatpush2.msra.mxu0 0.0
    %1480 = vmatprep.subr.mxu0 0.0
    %1481 = vmatpush2.msra.mxu0 0.0
    %1482 = vmatprep.subr.mxu0 0.0
    %1483 = vmatpush2.msra.mxu0 0.0
    %1484 = vmatprep.mubr.f32.mxu0 0.0
    %1485 = vmatmul.mubr.f32.gmra.mxu0 %v1418
    %v1486 = vpop.f32.mrf.mxu0
    %v1487 = vadd.f32 0.0, %v1486
    %v1488 = vpop.f32.mrf.mxu0
    %1489 = vdwg.mxu0
    %v1490 = vadd.f32 %v795, %v1487
    %v1491 = vtanh.pop %v1490
    %v1492 = vxor.u32 %v1490, 2147483648
    %v1493 = vmul.f32 %v1492, 1.442695
    %v1494 = vpow.pop %v1493
    %v1495 = vadd.f32 %v1494, 1.0
    %v1496 = vrcp.pop %v1495
    %v1497 = vmul.f32 1.0, %v1496
    %v1498 = vsel %vm879, %v1491, %v1497
    %v1499 = vmul.f32 %v1498, %v1406
    %1501 = vrot.lane.b32.xlu0 %v1498, 64
    %v1502 = vpop.permute.xlu0 %1501
    %v1504 = vmul.f32 %v1498, %v1502
    %1506 = vrot.lane.b32.xlu0 %v1504, 32
    %v1507 = vpop.permute.xlu0 %1506
    %v1509 = vadd.f32 %v1499, %v1507
    %v1510 = vtanh.pop %v1509
    %1512 = vrot.lane.b32.xlu0 %v1510, 64
    %v1513 = vpop.permute.xlu0 %1512
    %v1515 = vmul.f32 %v1498, %v1513
    %1517 = vrot.lane.b32.xlu0 %v1515, 32
    %v1518 = vpop.permute.xlu0 %1517
    %1520 = vst.msk [vmem:[#allocation2 + $0x30] sm:$0xff] %vm165, %v1518
    %v1521 = vsel %vm165, %v1518, 0
    %1523 = vmatprep.subr.mxu0 0.0
    %1524 = vmatpush1.msra.mxu0 0.0
    %1525 = vmatprep.subr.mxu0 0.0
    %1526 = vmatpush1.msra.mxu0 0.0
    %1527 = vmatprep.subr.mxu0 0.0
    %1528 = vmatpush1.msra.mxu0 0.0
    %1529 = vmatprep.subr.mxu0 0.0
    %1530 = vmatpush1.msra.mxu0 0.0
    %1531 = vmatprep.subr.mxu0 0.0
    %1532 = vmatpush1.msra.mxu0 0.0
    %1533 = vmatprep.subr.mxu0 0.0
    %1534 = vmatpush1.msra.mxu0 0.0
    %1535 = vmatprep.subr.mxu0 0.0
    %1536 = vmatpush1.msra.mxu0 0.0
    %1537 = vmatprep.subr.mxu0 0.0
    %1538 = vmatpush1.msra.mxu0 0.0
    %1539 = vmatprep.subr.mxu0 0.0
    %1540 = vmatpush1.msra.mxu0 0.0
    %1541 = vmatprep.subr.mxu0 0.0
    %1542 = vmatpush1.msra.mxu0 0.0
    %1543 = vmatprep.subr.mxu0 0.0
    %1544 = vmatpush1.msra.mxu0 0.0
    %1545 = vmatprep.subr.mxu0 0.0
    %1546 = vmatpush1.msra.mxu0 0.0
    %1547 = vmatprep.subr.mxu0 0.0
    %1548 = vmatpush1.msra.mxu0 %v59
    %1549 = vmatprep.subr.mxu0 0.0
    %1550 = vmatpush1.msra.mxu0 %v58
    %1551 = vmatprep.subr.mxu0 0.0
    %1552 = vmatpush1.msra.mxu0 %v57
    %1553 = vmatprep.subr.mxu0 0.0
    %1554 = vmatpush1.msra.mxu0 %v56
    %1555 = vmatprep.subr.mxu0 0.0
    %1556 = vmatpush2.msra.mxu0 0.0
    %1557 = vmatprep.subr.mxu0 0.0
    %1558 = vmatpush2.msra.mxu0 0.0
    %1559 = vmatprep.subr.mxu0 0.0
    %1560 = vmatpush2.msra.mxu0 0.0
    %1561 = vmatprep.subr.mxu0 0.0
    %1562 = vmatpush2.msra.mxu0 0.0
    %1563 = vmatprep.subr.mxu0 0.0
    %1564 = vmatpush2.msra.mxu0 0.0
    %1565 = vmatprep.subr.mxu0 0.0
    %1566 = vmatpush2.msra.mxu0 0.0
    %1567 = vmatprep.subr.mxu0 0.0
    %1568 = vmatpush2.msra.mxu0 0.0
    %1569 = vmatprep.subr.mxu0 0.0
    %1570 = vmatpush2.msra.mxu0 0.0
    %1571 = vmatprep.subr.mxu0 0.0
    %1572 = vmatpush2.msra.mxu0 0.0
    %1573 = vmatprep.subr.mxu0 0.0
    %1574 = vmatpush2.msra.mxu0 0.0
    %1575 = vmatprep.subr.mxu0 0.0
    %1576 = vmatpush2.msra.mxu0 0.0
    %1577 = vmatprep.subr.mxu0 0.0
    %1578 = vmatpush2.msra.mxu0 0.0
    %1579 = vmatprep.subr.mxu0 0.0
    %1580 = vmatpush2.msra.mxu0 0.0
    %1581 = vmatprep.subr.mxu0 0.0
    %1582 = vmatpush2.msra.mxu0 0.0
    %1583 = vmatprep.subr.mxu0 0.0
    %1584 = vmatpush2.msra.mxu0 0.0
    %1585 = vmatprep.subr.mxu0 0.0
    %1586 = vmatpush2.msra.mxu0 0.0
    %1587 = vmatprep.mubr.f32.mxu0 0.0
    %1588 = vmatmul.mubr.f32.gmra.mxu0 %v1521
    %v1589 = vpop.f32.mrf.mxu0
    %v1590 = vadd.f32 0.0, %v1589
    %v1591 = vpop.f32.mrf.mxu0
    %1592 = vdwg.mxu0
    %v1593 = vadd.f32 %v796, %v1590
    %v1594 = vtanh.pop %v1593
    %v1595 = vxor.u32 %v1593, 2147483648
    %v1596 = vmul.f32 %v1595, 1.442695
    %v1597 = vpow.pop %v1596
    %v1598 = vadd.f32 %v1597, 1.0
    %v1599 = vrcp.pop %v1598
    %v1600 = vmul.f32 1.0, %v1599
    %v1601 = vsel %vm879, %v1594, %v1600
    %v1602 = vmul.f32 %v1601, %v1509
    %1604 = vrot.lane.b32.xlu0 %v1601, 64
    %v1605 = vpop.permute.xlu0 %1604
    %v1607 = vmul.f32 %v1601, %v1605
    %1609 = vrot.lane.b32.xlu0 %v1607, 32
    %v1610 = vpop.permute.xlu0 %1609
    %v1612 = vadd.f32 %v1602, %v1610
    %v1613 = vtanh.pop %v1612
    %1615 = vrot.lane.b32.xlu0 %v1613, 64
    %v1616 = vpop.permute.xlu0 %1615
    %v1618 = vmul.f32 %v1601, %v1616
    %1620 = vrot.lane.b32.xlu0 %v1618, 32
    %v1621 = vpop.permute.xlu0 %1620
    %1623 = vst.msk [vmem:[#allocation2 + $0x38] sm:$0xff] %vm165, %v1621
    %v1624 = vld [vmem:[#allocation2] sm:$0xff]
    %v1625 = vld [vmem:[#allocation2 + $0x8] sm:$0xff]
    %v1626 = vld [vmem:[#allocation2 + $0x10] sm:$0xff]
    %v1627 = vld [vmem:[#allocation2 + $0x18] sm:$0xff]
    %v1628 = vld [vmem:[#allocation2 + $0x20] sm:$0xff]
    %v1629 = vld [vmem:[#allocation2 + $0x28] sm:$0xff]
    %v1630 = vld [vmem:[#allocation2 + $0x30] sm:$0xff]
    %v1631 = vld [vmem:[#allocation2 + $0x38] sm:$0xff]
    %vm1632 = vcmp.lt.s32.totalorder %v770, 16
    %v1633 = vsel %vm1632, 1, 0
    %vm1634 = vcmp.eq.s32.totalorder %v1633, 1
    %v1635 = vsel %vm1634, %v1624, %v1631
    %v1636 = vsel %vm1634, %v1625, %v1630
    %v1637 = vsel %vm1634, %v1626, %v1629
    %v1638 = vsel %vm1634, %v1627, %v1628
    %v1639 = vsel %vm1634, %v1628, %v1627
    %v1640 = vsel %vm1634, %v1629, %v1626
    %v1641 = vsel %vm1634, %v1630, %v1625
    %v1642 = vsel %vm1634, %v1631, %v1624
    %v1643 = vtanh.pop %v1635
    %v1644 = vtanh.pop %v1636
    %v1645 = vtanh.pop %v1637
    %v1646 = vtanh.pop %v1638
    %v1647 = vtanh.pop %v1639
    %v1648 = vtanh.pop %v1640
    %v1649 = vtanh.pop %v1641
    %v1650 = vtanh.pop %v1642
    %v1651 = vlaneseq
    %v1652 = vshrl.u32 %v1651, 7
    %v1653 = vsub.s32 2, %v1652
    %v1654 = vrot.slane %v76, %v1653
    %v1655 = vmul.f32 %v1643, %v1654
    %v1656 = vmul.f32 %v1644, %v1654
    %v1657 = vmul.f32 %v1645, %v1654
    %v1658 = vmul.f32 %v1646, %v1654
    %v1659 = vmul.f32 %v1647, %v1654
    %v1660 = vmul.f32 %v1648, %v1654
    %v1661 = vmul.f32 %v1649, %v1654
    %v1662 = vmul.f32 %v1650, %v1654
    %v1663 = vsel %vm165, %v1655, 0.0
    %1664 = vadd.xlane.f32.xlu0 %v1663
    %v1665 = vpop.xlane.xlu0 %1664
    %v1666 = vsel %vm165, %v1656, 0.0
    %1667 = vadd.xlane.f32.xlu0 %v1666
    %v1668 = vpop.xlane.xlu0 %1667
    %v1669 = vsel %vm165, %v1657, 0.0
    %1670 = vadd.xlane.f32.xlu0 %v1669
    %v1671 = vpop.xlane.xlu0 %1670
    %v1672 = vsel %vm165, %v1658, 0.0
    %1673 = vadd.xlane.f32.xlu0 %v1672
    %v1674 = vpop.xlane.xlu0 %1673
    %v1675 = vsel %vm165, %v1659, 0.0
    %1676 = vadd.xlane.f32.xlu0 %v1675
    %v1677 = vpop.xlane.xlu0 %1676
    %v1678 = vsel %vm165, %v1660, 0.0
    %1679 = vadd.xlane.f32.xlu0 %v1678
    %v1680 = vpop.xlane.xlu0 %1679
    %v1681 = vsel %vm165, %v1661, 0.0
    %1682 = vadd.xlane.f32.xlu0 %v1681
    %v1683 = vpop.xlane.xlu0 %1682
    %v1684 = vsel %vm165, %v1662, 0.0
    %1685 = vadd.xlane.f32.xlu0 %v1684
    %v1686 = vpop.xlane.xlu0 %1685
    %v1687 = vmax.f32 %v1665, %v1677
    %v1688 = vmax.f32 %v1668, %v1680
    %v1689 = vmax.f32 %v1671, %v1683
    %v1690 = vmax.f32 %v1674, %v1686
    %v1691 = vmax.f32 %v1687, %v1688
    %v1692 = vmax.f32 %v1689, %v1690
    %v1693 = vmax.f32 %v1691, %v1692
    %v1694 = vsub.f32 %v1665, %v1693
    %v1695 = vsub.f32 %v1668, %v1693
    %v1696 = vsub.f32 %v1671, %v1693
    %v1697 = vsub.f32 %v1674, %v1693
    %v1698 = vsub.f32 %v1677, %v1693
    %v1699 = vsub.f32 %v1680, %v1693
    %v1700 = vsub.f32 %v1683, %v1693
    %v1701 = vsub.f32 %v1686, %v1693
    %v1702 = vmul.f32 %v1694, 1.442695
    %v1703 = vpow.pop %v1702
    %v1704 = vmul.f32 %v1695, 1.442695
    %v1705 = vpow.pop %v1704
    %v1706 = vmul.f32 %v1696, 1.442695
    %v1707 = vpow.pop %v1706
    %v1708 = vmul.f32 %v1697, 1.442695
    %v1709 = vpow.pop %v1708
    %v1710 = vmul.f32 %v1698, 1.442695
    %v1711 = vpow.pop %v1710
    %v1712 = vmul.f32 %v1699, 1.442695
    %v1713 = vpow.pop %v1712
    %v1714 = vmul.f32 %v1700, 1.442695
    %v1715 = vpow.pop %v1714
    %v1716 = vmul.f32 %v1701, 1.442695
    %v1717 = vpow.pop %v1716
    %v1718 = vadd.f32 %v1703, %v1705
    %v1719 = vadd.f32 %v1718, %v1707
    %v1720 = vadd.f32 %v1719, %v1709
    %v1721 = vadd.f32 %v1720, %v1711
    %v1722 = vadd.f32 %v1721, %v1713
    %v1723 = vadd.f32 %v1722, %v1715
    %v1724 = vadd.f32 %v1723, %v1717
    %v1725 = vrcp.pop %v1724
    %v1726 = vmul.f32 %v1703, %v1725
    %v1727 = vmul.f32 %v1705, %v1725
    %v1728 = vmul.f32 %v1707, %v1725
    %v1729 = vmul.f32 %v1709, %v1725
    %v1730 = vmul.f32 %v1711, %v1725
    %v1731 = vmul.f32 %v1713, %v1725
    %v1732 = vmul.f32 %v1715, %v1725
    %v1733 = vmul.f32 %v1717, %v1725
    %v1734 = vmul.f32 %v1726, %v1635
    %v1735 = vmul.f32 %v1727, %v1636
    %v1736 = vmul.f32 %v1728, %v1637
    %v1737 = vmul.f32 %v1729, %v1638
    %v1738 = vmul.f32 %v1730, %v1639
    %v1739 = vmul.f32 %v1731, %v1640
    %v1740 = vmul.f32 %v1732, %v1641
    %v1741 = vmul.f32 %v1733, %v1642
    %v1742 = vsel %vm165, %v1734, 0.0
    %v1743 = vsel %vm165, %v1735, 0.0
    %v1744 = vadd.f32 %v1742, %v1743
    %v1745 = vsel %vm165, %v1736, 0.0
    %v1746 = vadd.f32 %v1744, %v1745
    %v1747 = vsel %vm165, %v1737, 0.0
    %v1748 = vadd.f32 %v1746, %v1747
    %v1749 = vsel %vm165, %v1738, 0.0
    %v1750 = vadd.f32 %v1748, %v1749
    %v1751 = vsel %vm165, %v1739, 0.0
    %v1752 = vadd.f32 %v1750, %v1751
    %v1753 = vsel %vm165, %v1740, 0.0
    %v1754 = vadd.f32 %v1752, %v1753
    %v1755 = vsel %vm165, %v1741, 0.0
    %v1756 = vadd.f32 %v1754, %v1755
    %v1757 = vtanh.pop %v1756
    %1762 = vrot.lane.b32.xlu0 %v64, 64
    %v1763 = vpop.permute.xlu0 %1762
    %1764 = vrot.lane.b32.xlu0 %v65, 64
    %v1765 = vpop.permute.xlu0 %1764
    %1766 = vrot.lane.b32.xlu0 %v66, 64
    %v1767 = vpop.permute.xlu0 %1766
    %1768 = vrot.lane.b32.xlu0 %v67, 64
    %v1769 = vpop.permute.xlu0 %1768
    %1775 = vrot.lane.b32.xlu0 %v496, 64
    %v1776 = vpop.permute.xlu0 %1775
    %v1779 = vsel %vm165, %v1757, 0
    %1781 = vmatprep.subr.mxu0 0.0
    %1782 = vmatpush1.msra.mxu0 0.0
    %1783 = vmatprep.subr.mxu0 0.0
    %1784 = vmatpush1.msra.mxu0 0.0
    %1785 = vmatprep.subr.mxu0 0.0
    %1786 = vmatpush1.msra.mxu0 0.0
    %1787 = vmatprep.subr.mxu0 0.0
    %1788 = vmatpush1.msra.mxu0 0.0
    %1789 = vmatprep.subr.mxu0 0.0
    %1790 = vmatpush1.msra.mxu0 0.0
    %1791 = vmatprep.subr.mxu0 0.0
    %1792 = vmatpush1.msra.mxu0 0.0
    %1793 = vmatprep.subr.mxu0 0.0
    %1794 = vmatpush1.msra.mxu0 0.0
    %1795 = vmatprep.subr.mxu0 0.0
    %1796 = vmatpush1.msra.mxu0 0.0
    %1797 = vmatprep.subr.mxu0 0.0
    %1798 = vmatpush1.msra.mxu0 0.0
    %1799 = vmatprep.subr.mxu0 0.0
    %1800 = vmatpush1.msra.mxu0 0.0
    %1801 = vmatprep.subr.mxu0 0.0
    %1802 = vmatpush1.msra.mxu0 0.0
    %1803 = vmatprep.subr.mxu0 0.0
    %1804 = vmatpush1.msra.mxu0 0.0
    %1805 = vmatprep.subr.mxu0 0.0
    %1806 = vmatpush1.msra.mxu0 %v1769
    %1807 = vmatprep.subr.mxu0 0.0
    %1808 = vmatpush1.msra.mxu0 %v1767
    %1809 = vmatprep.subr.mxu0 0.0
    %1810 = vmatpush1.msra.mxu0 %v1765
    %1811 = vmatprep.subr.mxu0 0.0
    %1812 = vmatpush1.msra.mxu0 %v1763
    %1813 = vmatprep.subr.mxu0 0.0
    %1814 = vmatpush2.msra.mxu0 0.0
    %1815 = vmatprep.subr.mxu0 0.0
    %1816 = vmatpush2.msra.mxu0 0.0
    %1817 = vmatprep.subr.mxu0 0.0
    %1818 = vmatpush2.msra.mxu0 0.0
    %1819 = vmatprep.subr.mxu0 0.0
    %1820 = vmatpush2.msra.mxu0 0.0
    %1821 = vmatprep.subr.mxu0 0.0
    %1822 = vmatpush2.msra.mxu0 0.0
    %1823 = vmatprep.subr.mxu0 0.0
    %1824 = vmatpush2.msra.mxu0 0.0
    %1825 = vmatprep.subr.mxu0 0.0
    %1826 = vmatpush2.msra.mxu0 0.0
    %1827 = vmatprep.subr.mxu0 0.0
    %1828 = vmatpush2.msra.mxu0 0.0
    %1829 = vmatprep.subr.mxu0 0.0
    %1830 = vmatpush2.msra.mxu0 0.0
    %1831 = vmatprep.subr.mxu0 0.0
    %1832 = vmatpush2.msra.mxu0 0.0
    %1833 = vmatprep.subr.mxu0 0.0
    %1834 = vmatpush2.msra.mxu0 0.0
    %1835 = vmatprep.subr.mxu0 0.0
    %1836 = vmatpush2.msra.mxu0 0.0
    %1837 = vmatprep.subr.mxu0 0.0
    %1838 = vmatpush2.msra.mxu0 0.0
    %1839 = vmatprep.subr.mxu0 0.0
    %1840 = vmatpush2.msra.mxu0 0.0
    %1841 = vmatprep.subr.mxu0 0.0
    %1842 = vmatpush2.msra.mxu0 0.0
    %1843 = vmatprep.subr.mxu0 0.0
    %1844 = vmatpush2.msra.mxu0 0.0
    %1845 = vmatprep.mubr.f32.mxu0 0.0
    %1846 = vmatmul.mubr.f32.gmra.mxu0 %v1779
    %v1847 = vpop.f32.mrf.mxu0
    %v1848 = vadd.f32 %v1776, %v1847
    %v1849 = vpop.f32.mrf.mxu0
    %1850 = vdwg.mxu0
    %v1851 = vtanh.pop %v1848
    %v1852 = vsel %vm165, %v40, 0
    %v1854 = vsel %vm165, %v41, 0
    %v1856 = vsel %vm165, %v42, 0
    %v1858 = vsel %vm165, %v43, 0
    %v1860 = vsel %vm165, %v44, 0
    %v1862 = vsel %vm165, %v45, 0
    %v1864 = vsel %vm165, %v46, 0
    %v1866 = vsel %vm165, %v47, 0
    %1868 = vmatprep.subr.mxu0 0.0
    %1869 = vmatpush1.msra.mxu0 0.0
    %1870 = vmatprep.subr.mxu0 0.0
    %1871 = vmatpush1.msra.mxu0 0.0
    %1872 = vmatprep.subr.mxu0 0.0
    %1873 = vmatpush1.msra.mxu0 0.0
    %1874 = vmatprep.subr.mxu0 0.0
    %1875 = vmatpush1.msra.mxu0 0.0
    %1876 = vmatprep.subr.mxu0 0.0
    %1877 = vmatpush1.msra.mxu0 0.0
    %1878 = vmatprep.subr.mxu0 0.0
    %1879 = vmatpush1.msra.mxu0 0.0
    %1880 = vmatprep.subr.mxu0 0.0
    %1881 = vmatpush1.msra.mxu0 0.0
    %1882 = vmatprep.subr.mxu0 0.0
    %1883 = vmatpush1.msra.mxu0 0.0
    %1884 = vmatprep.subr.mxu0 0.0
    %1885 = vmatpush1.msra.mxu0 0.0
    %1886 = vmatprep.subr.mxu0 0.0
    %1887 = vmatpush1.msra.mxu0 0.0
    %1888 = vmatprep.subr.mxu0 0.0
    %1889 = vmatpush1.msra.mxu0 0.0
    %1890 = vmatprep.subr.mxu0 0.0
    %1891 = vmatpush1.msra.mxu0 0.0
    %1892 = vmatprep.subr.mxu0 0.0
    %1893 = vmatpush1.msra.mxu0 %v63
    %1894 = vmatprep.subr.mxu0 0.0
    %1895 = vmatpush1.msra.mxu0 %v62
    %1896 = vmatprep.subr.mxu0 0.0
    %1897 = vmatpush1.msra.mxu0 %v61
    %1898 = vmatprep.subr.mxu0 0.0
    %1899 = vmatpush1.msra.mxu0 %v60
    %1900 = vmatprep.subr.mxu0 0.0
    %1901 = vmatpush2.msra.mxu0 0.0
    %1902 = vmatprep.subr.mxu0 0.0
    %1903 = vmatpush2.msra.mxu0 0.0
    %1904 = vmatprep.subr.mxu0 0.0
    %1905 = vmatpush2.msra.mxu0 0.0
    %1906 = vmatprep.subr.mxu0 0.0
    %1907 = vmatpush2.msra.mxu0 0.0
    %1908 = vmatprep.subr.mxu0 0.0
    %1909 = vmatpush2.msra.mxu0 0.0
    %1910 = vmatprep.subr.mxu0 0.0
    %1911 = vmatpush2.msra.mxu0 0.0
    %1912 = vmatprep.subr.mxu0 0.0
    %1913 = vmatpush2.msra.mxu0 0.0
    %1914 = vmatprep.subr.mxu0 0.0
    %1915 = vmatpush2.msra.mxu0 0.0
    %1916 = vmatprep.subr.mxu0 0.0
    %1917 = vmatpush2.msra.mxu0 0.0
    %1918 = vmatprep.subr.mxu0 0.0
    %1919 = vmatpush2.msra.mxu0 0.0
    %1920 = vmatprep.subr.mxu0 0.0
    %1921 = vmatpush2.msra.mxu0 0.0
    %1922 = vmatprep.subr.mxu0 0.0
    %1923 = vmatpush2.msra.mxu0 0.0
    %1924 = vmatprep.subr.mxu0 0.0
    %1925 = vmatpush2.msra.mxu0 0.0
    %1926 = vmatprep.subr.mxu0 0.0
    %1927 = vmatpush2.msra.mxu0 0.0
    %1928 = vmatprep.subr.mxu0 0.0
    %1929 = vmatpush2.msra.mxu0 0.0
    %1930 = vmatprep.subr.mxu0 0.0
    %1931 = vmatpush2.msra.mxu0 0.0
    %1932 = vmatprep.mubr.f32.mxu0 0.0
    %1933 = vmatmul.mubr.f32.gmra.mxu0 %v1852
    %v1934 = vpop.f32.mrf.mxu0
    %v1935 = vadd.f32 0.0, %v1934
    %v1936 = vpop.f32.mrf.mxu0
    %1937 = vmatprep.mubr.f32.mxu0 0.0
    %1938 = vmatmul.mubr.f32.gmra.mxu0 %v1854
    %v1939 = vpop.f32.mrf.mxu0
    %v1940 = vadd.f32 0.0, %v1939
    %v1941 = vpop.f32.mrf.mxu0
    %1942 = vmatprep.mubr.f32.mxu0 0.0
    %1943 = vmatmul.mubr.f32.gmra.mxu0 %v1856
    %v1944 = vpop.f32.mrf.mxu0
    %v1945 = vadd.f32 0.0, %v1944
    %v1946 = vpop.f32.mrf.mxu0
    %1947 = vmatprep.mubr.f32.mxu0 0.0
    %1948 = vmatmul.mubr.f32.gmra.mxu0 %v1858
    %v1949 = vpop.f32.mrf.mxu0
    %v1950 = vadd.f32 0.0, %v1949
    %v1951 = vpop.f32.mrf.mxu0
    %1952 = vmatprep.mubr.f32.mxu0 0.0
    %1953 = vmatmul.mubr.f32.gmra.mxu0 %v1860
    %v1954 = vpop.f32.mrf.mxu0
    %v1955 = vadd.f32 0.0, %v1954
    %v1956 = vpop.f32.mrf.mxu0
    %1957 = vmatprep.mubr.f32.mxu0 0.0
    %1958 = vmatmul.mubr.f32.gmra.mxu0 %v1862
    %v1959 = vpop.f32.mrf.mxu0
    %v1960 = vadd.f32 0.0, %v1959
    %v1961 = vpop.f32.mrf.mxu0
    %1962 = vmatprep.mubr.f32.mxu0 0.0
    %1963 = vmatmul.mubr.f32.gmra.mxu0 %v1864
    %v1964 = vpop.f32.mrf.mxu0
    %v1965 = vadd.f32 0.0, %v1964
    %v1966 = vpop.f32.mrf.mxu0
    %1967 = vmatprep.mubr.f32.mxu0 0.0
    %1968 = vmatmul.mubr.f32.gmra.mxu0 %v1866
    %v1969 = vpop.f32.mrf.mxu0
    %v1970 = vpop.f32.mrf.mxu0
    %1971 = vdwg.mxu0
    %1972 = vrot.lane.b32.xlu0 %v64, 96
    %v1973 = vpop.permute.xlu0 %1972
    %1974 = vrot.lane.b32.xlu0 %v65, 96
    %v1975 = vpop.permute.xlu0 %1974
    %1976 = vrot.lane.b32.xlu0 %v66, 96
    %v1977 = vpop.permute.xlu0 %1976
    %1978 = vrot.lane.b32.xlu0 %v67, 96
    %v1979 = vpop.permute.xlu0 %1978
    %1984 = vmatprep.subr.mxu0 0.0
    %1985 = vmatpush1.msra.mxu0 0.0
    %1986 = vmatprep.subr.mxu0 0.0
    %1987 = vmatpush1.msra.mxu0 0.0
    %1988 = vmatprep.subr.mxu0 0.0
    %1989 = vmatpush1.msra.mxu0 0.0
    %1990 = vmatprep.subr.mxu0 0.0
    %1991 = vmatpush1.msra.mxu0 0.0
    %1992 = vmatprep.subr.mxu0 0.0
    %1993 = vmatpush1.msra.mxu0 0.0
    %1994 = vmatprep.subr.mxu0 0.0
    %1995 = vmatpush1.msra.mxu0 0.0
    %1996 = vmatprep.subr.mxu0 0.0
    %1997 = vmatpush1.msra.mxu0 0.0
    %1998 = vmatprep.subr.mxu0 0.0
    %1999 = vmatpush1.msra.mxu0 0.0
    %2000 = vmatprep.subr.mxu0 0.0
    %2001 = vmatpush1.msra.mxu0 0.0
    %2002 = vmatprep.subr.mxu0 0.0
    %2003 = vmatpush1.msra.mxu0 0.0
    %2004 = vmatprep.subr.mxu0 0.0
    %2005 = vmatpush1.msra.mxu0 0.0
    %2006 = vmatprep.subr.mxu0 0.0
    %2007 = vmatpush1.msra.mxu0 0.0
    %2008 = vmatprep.subr.mxu0 0.0
    %2009 = vmatpush1.msra.mxu0 %v1979
    %2010 = vmatprep.subr.mxu0 0.0
    %2011 = vmatpush1.msra.mxu0 %v1977
    %2012 = vmatprep.subr.mxu0 0.0
    %2013 = vmatpush1.msra.mxu0 %v1975
    %2014 = vmatprep.subr.mxu0 0.0
    %2015 = vmatpush1.msra.mxu0 %v1973
    %2016 = vmatprep.subr.mxu0 0.0
    %2017 = vmatpush2.msra.mxu0 0.0
    %2018 = vmatprep.subr.mxu0 0.0
    %2019 = vmatpush2.msra.mxu0 0.0
    %2020 = vmatprep.subr.mxu0 0.0
    %2021 = vmatpush2.msra.mxu0 0.0
    %2022 = vmatprep.subr.mxu0 0.0
    %2023 = vmatpush2.msra.mxu0 0.0
    %2024 = vmatprep.subr.mxu0 0.0
    %2025 = vmatpush2.msra.mxu0 0.0
    %2026 = vmatprep.subr.mxu0 0.0
    %2027 = vmatpush2.msra.mxu0 0.0
    %2028 = vmatprep.subr.mxu0 0.0
    %2029 = vmatpush2.msra.mxu0 0.0
    %2030 = vmatprep.subr.mxu0 0.0
    %2031 = vmatpush2.msra.mxu0 0.0
    %2032 = vmatprep.subr.mxu0 0.0
    %2033 = vmatpush2.msra.mxu0 0.0
    %2034 = vmatprep.subr.mxu0 0.0
    %2035 = vmatpush2.msra.mxu0 0.0
    %2036 = vmatprep.subr.mxu0 0.0
    %2037 = vmatpush2.msra.mxu0 0.0
    %2038 = vmatprep.subr.mxu0 0.0
    %2039 = vmatpush2.msra.mxu0 0.0
    %2040 = vmatprep.subr.mxu0 0.0
    %2041 = vmatpush2.msra.mxu0 0.0
    %2042 = vmatprep.subr.mxu0 0.0
    %2043 = vmatpush2.msra.mxu0 0.0
    %2044 = vmatprep.subr.mxu0 0.0
    %2045 = vmatpush2.msra.mxu0 0.0
    %2046 = vmatprep.subr.mxu0 0.0
    %2047 = vmatpush2.msra.mxu0 0.0
    %2048 = vmatprep.mubr.f32.mxu0 0.0
    %2049 = vmatmul.mubr.f32.gmra.mxu0 %v1852
    %v2050 = vpop.f32.mrf.mxu0
    %v2051 = vpop.f32.mrf.mxu0
    %2052 = vmatprep.mubr.f32.mxu0 0.0
    %2053 = vmatmul.mubr.f32.gmra.mxu0 %v1854
    %v2054 = vpop.f32.mrf.mxu0
    %v2055 = vpop.f32.mrf.mxu0
    %2056 = vmatprep.mubr.f32.mxu0 0.0
    %2057 = vmatmul.mubr.f32.gmra.mxu0 %v1856
    %v2058 = vpop.f32.mrf.mxu0
    %v2059 = vpop.f32.mrf.mxu0
    %2060 = vmatprep.mubr.f32.mxu0 0.0
    %2061 = vmatmul.mubr.f32.gmra.mxu0 %v1858
    %v2062 = vpop.f32.mrf.mxu0
    %v2063 = vpop.f32.mrf.mxu0
    %2064 = vmatprep.mubr.f32.mxu0 0.0
    %2065 = vmatmul.mubr.f32.gmra.mxu0 %v1860
    %v2066 = vpop.f32.mrf.mxu0
    %v2067 = vadd.f32 0.0, %v2066
    %v2068 = vpop.f32.mrf.mxu0
    %2069 = vmatprep.mubr.f32.mxu0 0.0
    %2070 = vmatmul.mubr.f32.gmra.mxu0 %v1862
    %v2071 = vpop.f32.mrf.mxu0
    %v2072 = vadd.f32 0.0, %v2071
    %v2073 = vpop.f32.mrf.mxu0
    %2074 = vmatprep.mubr.f32.mxu0 0.0
    %2075 = vmatmul.mubr.f32.gmra.mxu0 %v1864
    %v2076 = vpop.f32.mrf.mxu0
    %v2077 = vadd.f32 0.0, %v2076
    %v2078 = vpop.f32.mrf.mxu0
    %2079 = vmatprep.mubr.f32.mxu0 0.0
    %2080 = vmatmul.mubr.f32.gmra.mxu0 %v1866
    %v2081 = vpop.f32.mrf.mxu0
    %v2082 = vadd.f32 0.0, %v2081
    %v2083 = vpop.f32.mrf.mxu0
    %2084 = vdwg.mxu0
    %2089 = vrot.lane.b32.xlu0 %v1940, 96
    %v2090 = vpop.permute.xlu0 %2089
    %2091 = vrot.lane.b32.xlu0 %v1945, 96
    %v2092 = vpop.permute.xlu0 %2091
    %2093 = vrot.lane.b32.xlu0 %v1950, 96
    %v2094 = vpop.permute.xlu0 %2093
    %2095 = vrot.lane.b32.xlu0 %v1955, 96
    %v2096 = vpop.permute.xlu0 %2095
    %v2101 = vadd.f32 %v1935, %v2090
    %v2102 = vadd.f32 %v1940, %v2092
    %v2103 = vadd.f32 %v1945, %v2094
    %v2104 = vadd.f32 %v1950, %v2096
    %2106 = vrot.lane.b32.xlu0 %v1945, 64
    %v2107 = vpop.permute.xlu0 %2106
    %2108 = vrot.lane.b32.xlu0 %v1950, 64
    %v2109 = vpop.permute.xlu0 %2108
    %2110 = vrot.lane.b32.xlu0 %v1955, 64
    %v2111 = vpop.permute.xlu0 %2110
    %2112 = vrot.lane.b32.xlu0 %v1960, 64
    %v2113 = vpop.permute.xlu0 %2112
    %v2118 = vadd.f32 %v2101, %v2107
    %v2119 = vadd.f32 %v2102, %v2109
    %v2120 = vadd.f32 %v2103, %v2111
    %v2121 = vadd.f32 %v2104, %v2113
    %2123 = vrot.lane.b32.xlu0 %v1950, 32
    %v2124 = vpop.permute.xlu0 %2123
    %2125 = vrot.lane.b32.xlu0 %v1955, 32
    %v2126 = vpop.permute.xlu0 %2125
    %2127 = vrot.lane.b32.xlu0 %v1960, 32
    %v2128 = vpop.permute.xlu0 %2127
    %2129 = vrot.lane.b32.xlu0 %v1965, 32
    %v2130 = vpop.permute.xlu0 %2129
    %v2135 = vadd.f32 %v2118, %v2124
    %v2136 = vadd.f32 %v2119, %v2126
    %v2137 = vadd.f32 %v2120, %v2128
    %v2138 = vadd.f32 %v2121, %v2130
    %v2139 = vadd.f32 %v2135, %v2067
    %v2140 = vadd.f32 %v2136, %v2072
    %v2141 = vadd.f32 %v2137, %v2077
    %v2142 = vadd.f32 %v2138, %v2082
    %2144 = vrot.lane.b32.xlu0 %v263, 96
    %v2145 = vpop.permute.xlu0 %2144
    %v2147 = vadd.f32 %v2139, %v2145
    %v2148 = vadd.f32 %v2140, %v2145
    %v2149 = vadd.f32 %v2141, %v2145
    %v2150 = vadd.f32 %v2142, %v2145
    %v2151 = vtanh.pop %v2147
    %v2152 = vtanh.pop %v2148
    %v2153 = vtanh.pop %v2149
    %v2154 = vtanh.pop %v2150
    %v2155 = vsel %vm165, %v2151, 0.0
    %v2156 = vsel %vm165, %v2152, 0.0
    %v2157 = vadd.f32 %v2155, %v2156
    %v2158 = vsel %vm165, %v2153, 0.0
    %v2159 = vadd.f32 %v2157, %v2158
    %v2160 = vsel %vm165, %v2154, 0.0
    %v2161 = vadd.f32 %v2159, %v2160
    %v2162 = vrcp.pop 4.0
    %v2163 = vmul.f32 %v2161, %v2162
    %v2164 = vsel %vm165, %v40, 0.0
    %v2165 = vsel %vm165, %v41, 0.0
    %v2166 = vadd.f32 %v2164, %v2165
    %v2167 = vsel %vm165, %v42, 0.0
    %v2168 = vadd.f32 %v2166, %v2167
    %v2169 = vsel %vm165, %v43, 0.0
    %v2170 = vadd.f32 %v2168, %v2169
    %v2171 = vsel %vm165, %v44, 0.0
    %v2172 = vadd.f32 %v2170, %v2171
    %v2173 = vsel %vm165, %v45, 0.0
    %v2174 = vadd.f32 %v2172, %v2173
    %v2175 = vsel %vm165, %v46, 0.0
    %v2176 = vadd.f32 %v2174, %v2175
    %v2177 = vsel %vm165, %v47, 0.0
    %v2178 = vadd.f32 %v2176, %v2177
    %v2179 = vrcp.pop 8.0
    %v2180 = vmul.f32 %v2178, %v2179
    %v2181 = vsel %vm165, %v2180, 0.0
    %2182 = vadd.xlane.f32.xlu0 %v2181
    %v2183 = vpop.xlane.xlu0 %2182
    %vm2184 = vcmask 523264
    %v2185 = vsel %vm2184, %v1851, 0.0
    %2186 = vadd.xlane.f32.xlu0 %v2185
    %v2187 = vpop.xlane.xlu0 %2186
    %v2188 = vadd.f32 %v2183, %v2187
    %v2189 = vmul.f32 %v2188, 0.010416667
    %v2190 = vmul.f32 %v2180, %v2180
    %v2191 = vsel %vm165, %v2190, 0.0
    %2192 = vadd.xlane.f32.xlu0 %v2191
    %v2193 = vpop.xlane.xlu0 %2192
    %v2194 = vmul.f32 %v1851, %v1851
    %v2195 = vsel %vm2184, %v2194, 0.0
    %2196 = vadd.xlane.f32.xlu0 %v2195
    %v2197 = vpop.xlane.xlu0 %2196
    %v2198 = vadd.f32 %v2193, %v2197
    %v2199 = vmul.f32 %v2198, 0.010416667
    %v2200 = vmul.f32 %v2189, %v2189
    %v2201 = vsub.f32 %v2199, %v2200
    %v2202 = vadd.f32 %v2201, 1e-05
    %v2203 = vrsqrt.pop %v2202
    %v2204 = vsub.f32 %v2180, %v2189
    %v2205 = vmul.f32 %v2204, %v2203
    %v2206 = vlaneseq
    %v2207 = vshrl.u32 %v2206, 7
    %v2208 = vsub.s32 4, %v2207
    %v2209 = vrot.slane %v76, %v2208
    %v2210 = vmul.f32 %v2205, %v2209
    %v2211 = vlaneseq
    %v2212 = vshrl.u32 %v2211, 7
    %v2213 = vsub.s32 5, %v2212
    %v2214 = vrot.slane %v76, %v2213
    %v2215 = vadd.f32 %v2210, %v2214
    %v2216 = vsub.f32 %v1851, %v2189
    %v2217 = vmul.f32 %v2216, %v2203
    %2219 = vrot.lane.b32.xlu0 %v2209, 96
    %v2220 = vpop.permute.xlu0 %2219
    %v2222 = vmul.f32 %v2217, %v2220
    %2224 = vrot.lane.b32.xlu0 %v2214, 96
    %v2225 = vpop.permute.xlu0 %2224
    %v2227 = vadd.f32 %v2222, %v2225
    %2236 = vrot.lane.b32.xlu0 %v68, 64
    %v2237 = vpop.permute.xlu0 %2236
    %2238 = vrot.lane.b32.xlu0 %v69, 64
    %v2239 = vpop.permute.xlu0 %2238
    %2240 = vrot.lane.b32.xlu0 %v70, 64
    %v2241 = vpop.permute.xlu0 %2240
    %2242 = vrot.lane.b32.xlu0 %v71, 64
    %v2243 = vpop.permute.xlu0 %2242
    %2244 = vrot.lane.b32.xlu0 %v72, 64
    %v2245 = vpop.permute.xlu0 %2244
    %2246 = vrot.lane.b32.xlu0 %v73, 64
    %v2247 = vpop.permute.xlu0 %2246
    %2248 = vrot.lane.b32.xlu0 %v74, 64
    %v2249 = vpop.permute.xlu0 %2248
    %2250 = vrot.lane.b32.xlu0 %v75, 64
    %v2251 = vpop.permute.xlu0 %2250
    %v2261 = vsel %vm2184, %v2227, 0
    %2263 = vmatprep.subr.mxu0 0.0
    %2264 = vmatpush1.msra.mxu0 0.0
    %2265 = vmatprep.subr.mxu0 0.0
    %2266 = vmatpush1.msra.mxu0 0.0
    %2267 = vmatprep.subr.mxu0 0.0
    %2268 = vmatpush1.msra.mxu0 0.0
    %2269 = vmatprep.subr.mxu0 0.0
    %2270 = vmatpush1.msra.mxu0 0.0
    %2271 = vmatprep.subr.mxu0 0.0
    %2272 = vmatpush1.msra.mxu0 0.0
    %2273 = vmatprep.subr.mxu0 0.0
    %2274 = vmatpush1.msra.mxu0 0.0
    %2275 = vmatprep.subr.mxu0 0.0
    %2276 = vmatpush1.msra.mxu0 0.0
    %2277 = vmatprep.subr.mxu0 0.0
    %2278 = vmatpush1.msra.mxu0 0.0
    %2279 = vmatprep.subr.mxu0 0.0
    %2280 = vmatpush1.msra.mxu0 %v2251
    %2281 = vmatprep.subr.mxu0 0.0
    %2282 = vmatpush1.msra.mxu0 %v2249
    %2283 = vmatprep.subr.mxu0 0.0
    %2284 = vmatpush1.msra.mxu0 %v2247
    %2285 = vmatprep.subr.mxu0 0.0
    %2286 = vmatpush1.msra.mxu0 %v2245
    %2287 = vmatprep.subr.mxu0 0.0
    %2288 = vmatpush1.msra.mxu0 %v2243
    %2289 = vmatprep.subr.mxu0 0.0
    %2290 = vmatpush1.msra.mxu0 %v2241
    %2291 = vmatprep.subr.mxu0 0.0
    %2292 = vmatpush1.msra.mxu0 %v2239
    %2293 = vmatprep.subr.mxu0 0.0
    %2294 = vmatpush1.msra.mxu0 %v2237
    %2295 = vmatprep.subr.mxu0 0.0
    %2296 = vmatpush2.msra.mxu0 0.0
    %2297 = vmatprep.subr.mxu0 0.0
    %2298 = vmatpush2.msra.mxu0 0.0
    %2299 = vmatprep.subr.mxu0 0.0
    %2300 = vmatpush2.msra.mxu0 0.0
    %2301 = vmatprep.subr.mxu0 0.0
    %2302 = vmatpush2.msra.mxu0 0.0
    %2303 = vmatprep.subr.mxu0 0.0
    %2304 = vmatpush2.msra.mxu0 0.0
    %2305 = vmatprep.subr.mxu0 0.0
    %2306 = vmatpush2.msra.mxu0 0.0
    %2307 = vmatprep.subr.mxu0 0.0
    %2308 = vmatpush2.msra.mxu0 0.0
    %2309 = vmatprep.subr.mxu0 0.0
    %2310 = vmatpush2.msra.mxu0 0.0
    %2311 = vmatprep.subr.mxu0 0.0
    %2312 = vmatpush2.msra.mxu0 0.0
    %2313 = vmatprep.subr.mxu0 0.0
    %2314 = vmatpush2.msra.mxu0 0.0
    %2315 = vmatprep.subr.mxu0 0.0
    %2316 = vmatpush2.msra.mxu0 0.0
    %2317 = vmatprep.subr.mxu0 0.0
    %2318 = vmatpush2.msra.mxu0 0.0
    %2319 = vmatprep.subr.mxu0 0.0
    %2320 = vmatpush2.msra.mxu0 0.0
    %2321 = vmatprep.subr.mxu0 0.0
    %2322 = vmatpush2.msra.mxu0 0.0
    %2323 = vmatprep.subr.mxu0 0.0
    %2324 = vmatpush2.msra.mxu0 0.0
    %2325 = vmatprep.subr.mxu0 0.0
    %2326 = vmatpush2.msra.mxu0 0.0
    %2327 = vmatprep.mubr.f32.mxu0 0.0
    %2328 = vmatmul.mubr.f32.gmra.mxu0 %v2261
    %v2329 = vpop.f32.mrf.mxu0
    %v2330 = vadd.f32 0.0, %v2329
    %v2331 = vpop.f32.mrf.mxu0
    %2332 = vdwg.mxu0
    %2333 = vrot.lane.b32.xlu0 %v68, 56
    %v2334 = vpop.permute.xlu0 %2333
    %2335 = vrot.lane.b32.xlu0 %v69, 56
    %v2336 = vpop.permute.xlu0 %2335
    %2337 = vrot.lane.b32.xlu0 %v70, 56
    %v2338 = vpop.permute.xlu0 %2337
    %2339 = vrot.lane.b32.xlu0 %v71, 56
    %v2340 = vpop.permute.xlu0 %2339
    %v2346 = vsel %vm165, %v2215, 0
    %2348 = vmatprep.subr.mxu0 0.0
    %2349 = vmatpush1.msra.mxu0 0.0
    %2350 = vmatprep.subr.mxu0 0.0
    %2351 = vmatpush1.msra.mxu0 0.0
    %2352 = vmatprep.subr.mxu0 0.0
    %2353 = vmatpush1.msra.mxu0 0.0
    %2354 = vmatprep.subr.mxu0 0.0
    %2355 = vmatpush1.msra.mxu0 0.0
    %2356 = vmatprep.subr.mxu0 0.0
    %2357 = vmatpush1.msra.mxu0 0.0
    %2358 = vmatprep.subr.mxu0 0.0
    %2359 = vmatpush1.msra.mxu0 0.0
    %2360 = vmatprep.subr.mxu0 0.0
    %2361 = vmatpush1.msra.mxu0 0.0
    %2362 = vmatprep.subr.mxu0 0.0
    %2363 = vmatpush1.msra.mxu0 0.0
    %2364 = vmatprep.subr.mxu0 0.0
    %2365 = vmatpush1.msra.mxu0 0.0
    %2366 = vmatprep.subr.mxu0 0.0
    %2367 = vmatpush1.msra.mxu0 0.0
    %2368 = vmatprep.subr.mxu0 0.0
    %2369 = vmatpush1.msra.mxu0 0.0
    %2370 = vmatprep.subr.mxu0 0.0
    %2371 = vmatpush1.msra.mxu0 0.0
    %2372 = vmatprep.subr.mxu0 0.0
    %2373 = vmatpush1.msra.mxu0 %v2340
    %2374 = vmatprep.subr.mxu0 0.0
    %2375 = vmatpush1.msra.mxu0 %v2338
    %2376 = vmatprep.subr.mxu0 0.0
    %2377 = vmatpush1.msra.mxu0 %v2336
    %2378 = vmatprep.subr.mxu0 0.0
    %2379 = vmatpush1.msra.mxu0 %v2334
    %2380 = vmatprep.subr.mxu0 0.0
    %2381 = vmatpush2.msra.mxu0 0.0
    %2382 = vmatprep.subr.mxu0 0.0
    %2383 = vmatpush2.msra.mxu0 0.0
    %2384 = vmatprep.subr.mxu0 0.0
    %2385 = vmatpush2.msra.mxu0 0.0
    %2386 = vmatprep.subr.mxu0 0.0
    %2387 = vmatpush2.msra.mxu0 0.0
    %2388 = vmatprep.subr.mxu0 0.0
    %2389 = vmatpush2.msra.mxu0 0.0
    %2390 = vmatprep.subr.mxu0 0.0
    %2391 = vmatpush2.msra.mxu0 0.0
    %2392 = vmatprep.subr.mxu0 0.0
    %2393 = vmatpush2.msra.mxu0 0.0
    %2394 = vmatprep.subr.mxu0 0.0
    %2395 = vmatpush2.msra.mxu0 0.0
    %2396 = vmatprep.subr.mxu0 0.0
    %2397 = vmatpush2.msra.mxu0 0.0
    %2398 = vmatprep.subr.mxu0 0.0
    %2399 = vmatpush2.msra.mxu0 0.0
    %2400 = vmatprep.subr.mxu0 0.0
    %2401 = vmatpush2.msra.mxu0 0.0
    %2402 = vmatprep.subr.mxu0 0.0
    %2403 = vmatpush2.msra.mxu0 0.0
    %2404 = vmatprep.subr.mxu0 0.0
    %2405 = vmatpush2.msra.mxu0 0.0
    %2406 = vmatprep.subr.mxu0 0.0
    %2407 = vmatpush2.msra.mxu0 0.0
    %2408 = vmatprep.subr.mxu0 0.0
    %2409 = vmatpush2.msra.mxu0 0.0
    %2410 = vmatprep.subr.mxu0 0.0
    %2411 = vmatpush2.msra.mxu0 0.0
    %2412 = vmatprep.mubr.f32.mxu0 0.0
    %2413 = vmatmul.mubr.f32.gmra.mxu0 %v2346
    %v2414 = vpop.f32.mrf.mxu0
    %v2415 = vadd.f32 %v2330, %v2414
    %v2416 = vpop.f32.mrf.mxu0
    %2417 = vdwg.mxu0
    %2418 = vrot.lane.b32.xlu0 %v263, 64
    %v2419 = vpop.permute.xlu0 %2418
    %v2421 = vadd.f32 %v2415, %v2419
    %2423 = vrot.lane.b32.xlu0 %v2163, 64
    %v2424 = vpop.permute.xlu0 %2423
    %2427 = vrot.lane.b32.xlu0 %v2421, 96
    %v2428 = vpop.permute.xlu0 %2427
    %v2430 = vsel %vm2184, %v498, %v2424
    %vm2431 = vcmask 785408
    %v2432 = vsel %vm2431, %v2430, %v2428
    %vm2433 = vcmask 826368
    %v2434 = vsel %vm2433, %v2432, 0.0
    %2435 = vst [vmem:[#allocation8] sm:$0xff] %v2434
    // Predicated region
    $region18: #{tpu_custom_call.1} parent=1 // pred_check
      _
    $region19: #{tpu_custom_call.1} parent=1 // pred_check_branch
      %2437 = sbr.rel (0) target = $region21
    $region20: #{tpu_custom_call.1} parent=1 // pred_region
      %s2439 = ssub.s32 128, 128
      %2440 = vsyncadd [#allocation5], %s2439
      %s2442 = sshll.u32 [#allocation8], 4
      %s2443 = int_to_ptr.vmem [resolvable:$true] %s2442
      %2445 = dma.vmem_to_hbm [thread:$0]  %s2443, 128, %s2, [#allocation5]
    $region21: #{tpu_custom_call.1} parent=1 // pred_fallthru
      _
    // Predicated region
    $region22: #{tpu_custom_call.1} parent=1 // pred_check
      _
    $region23: #{tpu_custom_call.1} parent=1 // pred_check_branch
      %2447 = sbr.rel (0) target = $region25
    $region24: #{tpu_custom_call.1} parent=1 // pred_region
      %2448 = dma.done [#allocation5], 128
    $region25: #{tpu_custom_call.1} parent=1 // pred_fallthru
      _
    %2449 = vsyncpa [#allocation4], 1
    %2450 = vsyncpa [#allocation7], 1
    %2451 = vsyncpa [#allocation5], 1

</llo_original>
